<compile_context>
chip_gen: v7x
topology: tpu7x:2x2x1
jax: 0.10.0
libtpu: 0.0.40
codegen_flags: <defaults>
</compile_context>

<pallas_src>
import functools
import math

import jax
import jax.numpy as jnp
from jax.experimental import pallas as pl
from jax.experimental.pallas import tpu as pltpu  # noqa: F401  (used for real-config variant)


CFG = dict(
    vocab_size=100,
    max_pos=32,
    hidden=64,          # stand-in for 768
    heads=4,
    head_dim=16,
    intermediate=128,
    layers=2,
    num_labels=3,
    ln_eps=1e-5,
)


# ----------------------------------------------------------------------------
# Fused encoder kernel: single invocation, static loop over layers.
# ----------------------------------------------------------------------------

def _encoder_kernel(
    x_ref,             # (M, h)        f32   post-embedding-LayerNorm activations
    bias_ref,          # (B, S)        f32   additive key mask: (1-mask)*-1e9
    wqkv_ref,          # (L, h, 3h)    bf16  fused q/k/v weight (q pre-scaled)
    bqkv_ref,          # (L, 1, 3h)    f32
    wo_ref,            # (L, h, h)     bf16
    bo_ref,            # (L, 1, h)     f32
    ln1g_ref,          # (L, 1, h)     f32
    ln1b_ref,          # (L, 1, h)     f32
    w1_ref,            # (L, h, inter) bf16
    b1_ref,            # (L, 1, inter) f32
    w2_ref,            # (L, inter, h) bf16
    b2_ref,            # (L, 1, h)     f32
    ln2g_ref,          # (L, 1, h)     f32
    ln2b_ref,          # (L, 1, h)     f32
    out_ref,           # (M, h)        f32   final hidden states
    *, B, S, H, Dh, L, eps,
):
    def ln(y, g, b):
        mu = jnp.mean(y, axis=-1, keepdims=True)
        yc = y - mu
        var = jnp.mean(yc * yc, axis=-1, keepdims=True)
        return yc * jax.lax.rsqrt(var + eps) * g + b

    hdim = H * Dh
    x = x_ref[...]                                       # (M, h) f32, resident value

    for l in range(L):                                   # static unroll (L=2)
        # --- fused QKV projection: bf16 operands, f32 accumulation (MXU) ---
        qkv = jnp.dot(x.astype(jnp.bfloat16), wqkv_ref[l],
                      preferred_element_type=jnp.float32) + bqkv_ref[l]   # (M, 3h)

        # --- attention: static unrolled loop over (batch, head) -----------
        ctx_rows = []
        for b in range(B):
            # hoisted: one (1,S)->(S,S) broadcast per batch, reused by all heads
            bias_full = jnp.broadcast_to(bias_ref[b:b + 1, :], (S, S))
            qkv_b = qkv[b * S:(b + 1) * S, :]            # (S, 3h) sublane-aligned rows
            head_ctx = []
            for hh in range(H):
                qh = qkv_b[:, hh * Dh:(hh + 1) * Dh]                       # (S, Dh)
                kh = qkv_b[:, hdim + hh * Dh:hdim + (hh + 1) * Dh]
                vh = qkv_b[:, 2 * hdim + hh * Dh:2 * hdim + (hh + 1) * Dh]
                s = jnp.dot(qh, kh.T, preferred_element_type=jnp.float32) + bias_full
                s = s - jnp.max(s, axis=-1, keepdims=True)
                e = jnp.exp(s)
                p = e * pl.reciprocal(jnp.sum(e, axis=-1, keepdims=True), approx=True)
                head_ctx.append(jnp.dot(p, vh, preferred_element_type=jnp.float32))
            ctx_rows.append(jnp.concatenate(head_ctx, axis=-1))             # (S, h)
        ctx = jnp.concatenate(ctx_rows, axis=0)                             # (M, h), value

        # --- attention output projection + residual + LayerNorm -----------
        attn = jnp.dot(ctx.astype(jnp.bfloat16), wo_ref[l],
                       preferred_element_type=jnp.float32) + bo_ref[l]
        x = ln(x + attn, ln1g_ref[l], ln1b_ref[l])

        # --- FFN: w1 + GELU(tanh approx) + w2 + residual + LayerNorm ------
        f = jnp.dot(x.astype(jnp.bfloat16), w1_ref[l],
                    preferred_element_type=jnp.float32) + b1_ref[l]
        f = 0.5 * f * (1.0 + jnp.tanh(0.7978845608028654 * (f + 0.044715 * f * f * f)))
        f = jnp.dot(f.astype(jnp.bfloat16), w2_ref[l],
                    preferred_element_type=jnp.float32) + b2_ref[l]
        x = ln(x + f, ln2g_ref[l], ln2b_ref[l])

    out_ref[...] = x


def run_encoder(x_ln, mask_bias, enc, *, B, S):
    h = CFG["hidden"]
    H = CFG["heads"]
    Dh = CFG["head_dim"]
    L = CFG["layers"]
    M = B * S

    kern = functools.partial(_encoder_kernel, B=B, S=S, H=H, Dh=Dh, L=L,
                             eps=CFG["ln_eps"])
    # Single invocation: no grid, every operand (activations + all stacked
    # layer weights, <200 KB total at toy size) resides in VMEM for the call.
    return pl.pallas_call(
        kern,
        out_shape=jax.ShapeDtypeStruct((M, h), jnp.float32),
    )(x_ln, mask_bias,
      enc["wqkv"], enc["bqkv"], enc["wo"], enc["bo"],
      enc["ln1g"], enc["ln1b"], enc["w1"], enc["b1"],
      enc["w2"], enc["b2"], enc["ln2g"], enc["ln2b"])


# ----------------------------------------------------------------------------
# Parameter init / prep
# ----------------------------------------------------------------------------

def init_params(key):
    h, inter, L, nl = CFG["hidden"], CFG["intermediate"], CFG["layers"], CFG["num_labels"]
    keys = jax.random.split(key, 8 + L * 12)
    ki = iter(keys)
    std = 0.02

    def nrm(k, shape):
        return std * jax.random.normal(k, shape, dtype=jnp.float32)

    params = {
        "word_emb": nrm(next(ki), (CFG["vocab_size"], h)),
        "pos_emb": nrm(next(ki), (CFG["max_pos"], h)),
        "type_emb": nrm(next(ki), (1, h)),
        "emb_ln_g": jnp.ones((h,), jnp.float32),
        "emb_ln_b": jnp.zeros((h,), jnp.float32),
        "cls_w": nrm(next(ki), (h, nl)),
        "cls_b": jnp.zeros((nl,), jnp.float32),
        "layers": [],
    }
    for _ in range(L):
        lyr = {
            "wq": nrm(next(ki), (h, h)), "bq": jnp.zeros((h,), jnp.float32),
            "wk": nrm(next(ki), (h, h)), "bk": jnp.zeros((h,), jnp.float32),
            "wv": nrm(next(ki), (h, h)), "bv": jnp.zeros((h,), jnp.float32),
            "wo": nrm(next(ki), (h, h)), "bo": jnp.zeros((h,), jnp.float32),
            "ln1_g": jnp.ones((h,), jnp.float32), "ln1_b": jnp.zeros((h,), jnp.float32),
            "w1": nrm(next(ki), (h, inter)), "b1": jnp.zeros((inter,), jnp.float32),
            "w2": nrm(next(ki), (inter, h)), "b2": jnp.zeros((h,), jnp.float32),
            "ln2_g": jnp.ones((h,), jnp.float32), "ln2_b": jnp.zeros((h,), jnp.float32),
        }
        params["layers"].append(lyr)
    return params


def prep_encoder_params(params):
    """Stack per-layer weights along a leading layer axis; fuse qkv; fold the
    1/sqrt(Dh) softmax scale into q; cast matmul weights to bf16."""
    Dh = CFG["head_dim"]
    scale = 1.0 / math.sqrt(Dh)
    cols = {k: [] for k in ("wqkv", "bqkv", "wo", "bo", "ln1g", "ln1b",
                            "w1", "b1", "w2", "b2", "ln2g", "ln2b")}
    for lyr in params["layers"]:
        cols["wqkv"].append(jnp.concatenate(
            [lyr["wq"] * scale, lyr["wk"], lyr["wv"]], axis=1))
        cols["bqkv"].append(jnp.concatenate(
            [lyr["bq"] * scale, lyr["bk"], lyr["bv"]])[None, :])
        cols["wo"].append(lyr["wo"])
        cols["bo"].append(lyr["bo"][None, :])
        cols["ln1g"].append(lyr["ln1_g"][None, :])
        cols["ln1b"].append(lyr["ln1_b"][None, :])
        cols["w1"].append(lyr["w1"])
        cols["b1"].append(lyr["b1"][None, :])
        cols["w2"].append(lyr["w2"])
        cols["b2"].append(lyr["b2"][None, :])
        cols["ln2g"].append(lyr["ln2_g"][None, :])
        cols["ln2b"].append(lyr["ln2_b"][None, :])
    enc = {k: jnp.stack(v, axis=0) for k, v in cols.items()}
    for k in ("wqkv", "wo", "w1", "w2"):
        enc[k] = enc[k].astype(jnp.bfloat16)
    return enc


# ----------------------------------------------------------------------------
# Forward pass
# ----------------------------------------------------------------------------

def forward(params, input_ids, attention_mask, labels=None):
    B, S = input_ids.shape
    h = CFG["hidden"]

    # ---- embeddings (gather + sum) + embedding LayerNorm in plain JAX ----
    x = (params["word_emb"][input_ids]
         + params["pos_emb"][:S][None, :, :]
         + params["type_emb"][0][None, None, :])                  # (B, S, h)
    mu = jnp.mean(x, axis=-1, keepdims=True)
    xc = x - mu
    var = jnp.mean(xc * xc, axis=-1, keepdims=True)
    x = (xc * jax.lax.rsqrt(var + CFG["ln_eps"])
         * params["emb_ln_g"] + params["emb_ln_b"])
    x2 = x.reshape(B * S, h)

    # additive key-position mask, computed once
    mask_bias = (1.0 - attention_mask.astype(jnp.float32)) * (-1e9)   # (B, S)

    enc = prep_encoder_params(params)
    hidden = run_encoder(x2, mask_bias, enc, B=B, S=S)            # (B*S, h)
    hidden = hidden.reshape(B, S, h)

    # ---- pooled = last_hidden_state[:, 0, :]; dropout = identity (eval) ----
    pooled = hidden[:, 0, :]                                      # (B, h)

    # ---- classifier + cross-entropy in plain JAX (N=3 is lane-sparse) ----
    logits = pooled @ params["cls_w"] + params["cls_b"]           # (B, num_labels)

    loss = None
    if labels is not None:
        logp = jax.nn.log_softmax(logits, axis=-1)
        loss = -jnp.mean(
            jnp.take_along_axis(logp, labels[:, None].astype(jnp.int32), axis=1))
    return {"logits": logits, "loss": loss}


# ----------------------------------------------------------------------------
# Main
# ----------------------------------------------------------------------------

if __name__ == "__main__":
    key = jax.random.PRNGKey(0)
    k_par, k_ids, k_lab = jax.random.split(key, 3)

    B, S = 2, 8
    params = init_params(k_par)
    input_ids = jax.random.randint(k_ids, (B, S), 0, CFG["vocab_size"], dtype=jnp.int32)
    attention_mask = jnp.ones((B, S), dtype=jnp.int32).at[1, 6:].set(0)  # some padding
    labels = jax.random.randint(k_lab, (B,), 0, CFG["num_labels"], dtype=jnp.int32)

    fwd = jax.jit(forward)
    out = fwd(params, input_ids, attention_mask, labels)
    jax.block_until_ready(out["logits"])
    jax.block_until_ready(out["loss"])

    assert out["logits"].shape == (B, CFG["num_labels"])
    assert out["loss"].shape == ()
    assert bool(jnp.all(jnp.isfinite(out["logits"])))
    assert bool(jnp.isfinite(out["loss"]))
    print("KERNEL_OK")
</pallas_src>

<mosaic_0001>
module attributes {stable_mosaic.version = 11 : i64} {
  func.func @_encoder_kernel(%arg0: memref<16x64xf32, #tpu.memory_space<vmem>>, %arg1: memref<2x8xf32, #tpu.memory_space<vmem>>, %arg2: memref<2x64x192xbf16, #tpu.memory_space<vmem>>, %arg3: memref<2x1x192xf32, #tpu.memory_space<vmem>>, %arg4: memref<2x64x64xbf16, #tpu.memory_space<vmem>>, %arg5: memref<2x1x64xf32, #tpu.memory_space<vmem>>, %arg6: memref<2x1x64xf32, #tpu.memory_space<vmem>>, %arg7: memref<2x1x64xf32, #tpu.memory_space<vmem>>, %arg8: memref<2x64x128xbf16, #tpu.memory_space<vmem>>, %arg9: memref<2x1x128xf32, #tpu.memory_space<vmem>>, %arg10: memref<2x128x64xbf16, #tpu.memory_space<vmem>>, %arg11: memref<2x1x64xf32, #tpu.memory_space<vmem>>, %arg12: memref<2x1x64xf32, #tpu.memory_space<vmem>>, %arg13: memref<2x1x64xf32, #tpu.memory_space<vmem>>, %arg14: memref<16x64xf32, #tpu.memory_space<vmem>>) attributes {dimension_semantics = [], scalar_prefetch = 0 : i64, scratch_operands = 0 : i64, tpu.core_type = #tpu.core_type<tc>} {
    %c0 = arith.constant 0 : index
    %c0_0 = arith.constant 0 : index
    %0 = vector.load %arg0[%c0, %c0_0] : memref<16x64xf32, #tpu.memory_space<vmem>>, vector<16x64xf32>
    %1 = arith.truncf %0 : vector<16x64xf32> to vector<16x64xbf16>
    %c0_1 = arith.constant 0 : index
    %c0_2 = arith.constant 0 : index
    %c0_3 = arith.constant 0 : index
    %2 = vector.load %arg2[%c0_1, %c0_2, %c0_3] : memref<2x64x192xbf16, #tpu.memory_space<vmem>>, vector<1x64x192xbf16>
    %3 = vector.shape_cast %2 : vector<1x64x192xbf16> to vector<64x192xbf16>
    %cst = arith.constant dense<0.000000e+00> : vector<16x192xf32>
    %4 = tpu.matmul %1, %3, %cst {dimension_numbers = #tpu.dot_dimension_numbers<[1], [0], [0], [1], [0, 0, 1, 1], [], []>} : vector<16x64xbf16>, vector<64x192xbf16>, vector<16x192xf32> -> vector<16x192xf32>
    %c0_4 = arith.constant 0 : index
    %c0_5 = arith.constant 0 : index
    %c0_6 = arith.constant 0 : index
    %5 = vector.load %arg3[%c0_4, %c0_5, %c0_6] : memref<2x1x192xf32, #tpu.memory_space<vmem>>, vector<1x1x192xf32>
    %6 = vector.shape_cast %5 : vector<1x1x192xf32> to vector<1x192xf32>
    %7 = vector.broadcast %6 : vector<1x192xf32> to vector<16x192xf32>
    %8 = arith.addf %4, %7 : vector<16x192xf32>
    %c0_7 = arith.constant 0 : index
    %c0_8 = arith.constant 0 : index
    %9 = vector.load %arg1[%c0_7, %c0_8] : memref<2x8xf32, #tpu.memory_space<vmem>>, vector<1x8xf32>
    %10 = vector.shape_cast %9 : vector<1x8xf32> to vector<1x8xf32>
    %11 = vector.broadcast %10 : vector<1x8xf32> to vector<8x8xf32>
    %12 = vector.extract_strided_slice %8 {offsets = [0, 0], sizes = [8, 192], strides = [1, 1]} : vector<16x192xf32> to vector<8x192xf32>
    %13 = vector.extract_strided_slice %12 {offsets = [0, 0], sizes = [8, 16], strides = [1, 1]} : vector<8x192xf32> to vector<8x16xf32>
    %14 = vector.extract_strided_slice %12 {offsets = [0, 64], sizes = [8, 16], strides = [1, 1]} : vector<8x192xf32> to vector<8x16xf32>
    %15 = vector.extract_strided_slice %12 {offsets = [0, 128], sizes = [8, 16], strides = [1, 1]} : vector<8x192xf32> to vector<8x16xf32>
    %16 = tpu.transpose %14, [1, 0] : vector<8x16xf32> -> vector<16x8xf32>
    %cst_9 = arith.constant dense<0.000000e+00> : vector<8x8xf32>
    %17 = tpu.matmul %13, %16, %cst_9 {dimension_numbers = #tpu.dot_dimension_numbers<[1], [0], [0], [1], [0, 0, 1, 1], [], []>} : vector<8x16xf32>, vector<16x8xf32>, vector<8x8xf32> -> vector<8x8xf32>
    %18 = arith.addf %17, %11 : vector<8x8xf32>
    %cst_10 = arith.constant dense<0xFF800000> : vector<8xf32>
    %19 = vector.multi_reduction <maximumf>, %18, %cst_10 [1] : vector<8x8xf32> to vector<8xf32>
    %20 = vector.shape_cast %19 : vector<8xf32> to vector<8x1xf32>
    %21 = vector.broadcast %20 : vector<8x1xf32> to vector<8x8xf32>
    %22 = arith.subf %18, %21 : vector<8x8xf32>
    %23 = math.exp %22 : vector<8x8xf32>
    %cst_11 = arith.constant dense<0.000000e+00> : vector<8xf32>
    %24 = vector.multi_reduction <add>, %23, %cst_11 [1] : vector<8x8xf32> to vector<8xf32>
    %25 = vector.shape_cast %24 : vector<8xf32> to vector<8x1xf32>
    %26 = tpu.reciprocal %25 {approx = true} : vector<8x1xf32> -> vector<8x1xf32>
    %27 = vector.broadcast %26 : vector<8x1xf32> to vector<8x8xf32>
    %28 = arith.mulf %23, %27 : vector<8x8xf32>
    %cst_12 = arith.constant dense<0.000000e+00> : vector<8x16xf32>
    %29 = tpu.matmul %28, %15, %cst_12 {dimension_numbers = #tpu.dot_dimension_numbers<[1], [0], [0], [1], [0, 0, 1, 1], [], []>} : vector<8x8xf32>, vector<8x16xf32>, vector<8x16xf32> -> vector<8x16xf32>
    %30 = vector.extract_strided_slice %12 {offsets = [0, 16], sizes = [8, 16], strides = [1, 1]} : vector<8x192xf32> to vector<8x16xf32>
    %31 = vector.extract_strided_slice %12 {offsets = [0, 80], sizes = [8, 16], strides = [1, 1]} : vector<8x192xf32> to vector<8x16xf32>
    %32 = vector.extract_strided_slice %12 {offsets = [0, 144], sizes = [8, 16], strides = [1, 1]} : vector<8x192xf32> to vector<8x16xf32>
    %33 = tpu.transpose %31, [1, 0] : vector<8x16xf32> -> vector<16x8xf32>
    %cst_13 = arith.constant dense<0.000000e+00> : vector<8x8xf32>
    %34 = tpu.matmul %30, %33, %cst_13 {dimension_numbers = #tpu.dot_dimension_numbers<[1], [0], [0], [1], [0, 0, 1, 1], [], []>} : vector<8x16xf32>, vector<16x8xf32>, vector<8x8xf32> -> vector<8x8xf32>
    %35 = arith.addf %34, %11 : vector<8x8xf32>
    %cst_14 = arith.constant dense<0xFF800000> : vector<8xf32>
    %36 = vector.multi_reduction <maximumf>, %35, %cst_14 [1] : vector<8x8xf32> to vector<8xf32>
    %37 = vector.shape_cast %36 : vector<8xf32> to vector<8x1xf32>
    %38 = vector.broadcast %37 : vector<8x1xf32> to vector<8x8xf32>
    %39 = arith.subf %35, %38 : vector<8x8xf32>
    %40 = math.exp %39 : vector<8x8xf32>
    %cst_15 = arith.constant dense<0.000000e+00> : vector<8xf32>
    %41 = vector.multi_reduction <add>, %40, %cst_15 [1] : vector<8x8xf32> to vector<8xf32>
    %42 = vector.shape_cast %41 : vector<8xf32> to vector<8x1xf32>
    %43 = tpu.reciprocal %42 {approx = true} : vector<8x1xf32> -> vector<8x1xf32>
    %44 = vector.broadcast %43 : vector<8x1xf32> to vector<8x8xf32>
    %45 = arith.mulf %40, %44 : vector<8x8xf32>
    %cst_16 = arith.constant dense<0.000000e+00> : vector<8x16xf32>
    %46 = tpu.matmul %45, %32, %cst_16 {dimension_numbers = #tpu.dot_dimension_numbers<[1], [0], [0], [1], [0, 0, 1, 1], [], []>} : vector<8x8xf32>, vector<8x16xf32>, vector<8x16xf32> -> vector<8x16xf32>
    %47 = vector.extract_strided_slice %12 {offsets = [0, 32], sizes = [8, 16], strides = [1, 1]} : vector<8x192xf32> to vector<8x16xf32>
    %48 = vector.extract_strided_slice %12 {offsets = [0, 96], sizes = [8, 16], strides = [1, 1]} : vector<8x192xf32> to vector<8x16xf32>
    %49 = vector.extract_strided_slice %12 {offsets = [0, 160], sizes = [8, 16], strides = [1, 1]} : vector<8x192xf32> to vector<8x16xf32>
    %50 = tpu.transpose %48, [1, 0] : vector<8x16xf32> -> vector<16x8xf32>
    %cst_17 = arith.constant dense<0.000000e+00> : vector<8x8xf32>
    %51 = tpu.matmul %47, %50, %cst_17 {dimension_numbers = #tpu.dot_dimension_numbers<[1], [0], [0], [1], [0, 0, 1, 1], [], []>} : vector<8x16xf32>, vector<16x8xf32>, vector<8x8xf32> -> vector<8x8xf32>
    %52 = arith.addf %51, %11 : vector<8x8xf32>
    %cst_18 = arith.constant dense<0xFF800000> : vector<8xf32>
    %53 = vector.multi_reduction <maximumf>, %52, %cst_18 [1] : vector<8x8xf32> to vector<8xf32>
    %54 = vector.shape_cast %53 : vector<8xf32> to vector<8x1xf32>
    %55 = vector.broadcast %54 : vector<8x1xf32> to vector<8x8xf32>
    %56 = arith.subf %52, %55 : vector<8x8xf32>
    %57 = math.exp %56 : vector<8x8xf32>
    %cst_19 = arith.constant dense<0.000000e+00> : vector<8xf32>
    %58 = vector.multi_reduction <add>, %57, %cst_19 [1] : vector<8x8xf32> to vector<8xf32>
    %59 = vector.shape_cast %58 : vector<8xf32> to vector<8x1xf32>
    %60 = tpu.reciprocal %59 {approx = true} : vector<8x1xf32> -> vector<8x1xf32>
    %61 = vector.broadcast %60 : vector<8x1xf32> to vector<8x8xf32>
    %62 = arith.mulf %57, %61 : vector<8x8xf32>
    %cst_20 = arith.constant dense<0.000000e+00> : vector<8x16xf32>
    %63 = tpu.matmul %62, %49, %cst_20 {dimension_numbers = #tpu.dot_dimension_numbers<[1], [0], [0], [1], [0, 0, 1, 1], [], []>} : vector<8x8xf32>, vector<8x16xf32>, vector<8x16xf32> -> vector<8x16xf32>
    %64 = vector.extract_strided_slice %12 {offsets = [0, 48], sizes = [8, 16], strides = [1, 1]} : vector<8x192xf32> to vector<8x16xf32>
    %65 = vector.extract_strided_slice %12 {offsets = [0, 112], sizes = [8, 16], strides = [1, 1]} : vector<8x192xf32> to vector<8x16xf32>
    %66 = vector.extract_strided_slice %12 {offsets = [0, 176], sizes = [8, 16], strides = [1, 1]} : vector<8x192xf32> to vector<8x16xf32>
    %67 = tpu.transpose %65, [1, 0] : vector<8x16xf32> -> vector<16x8xf32>
    %cst_21 = arith.constant dense<0.000000e+00> : vector<8x8xf32>
    %68 = tpu.matmul %64, %67, %cst_21 {dimension_numbers = #tpu.dot_dimension_numbers<[1], [0], [0], [1], [0, 0, 1, 1], [], []>} : vector<8x16xf32>, vector<16x8xf32>, vector<8x8xf32> -> vector<8x8xf32>
    %69 = arith.addf %68, %11 : vector<8x8xf32>
    %cst_22 = arith.constant dense<0xFF800000> : vector<8xf32>
    %70 = vector.multi_reduction <maximumf>, %69, %cst_22 [1] : vector<8x8xf32> to vector<8xf32>
    %71 = vector.shape_cast %70 : vector<8xf32> to vector<8x1xf32>
    %72 = vector.broadcast %71 : vector<8x1xf32> to vector<8x8xf32>
    %73 = arith.subf %69, %72 : vector<8x8xf32>
    %74 = math.exp %73 : vector<8x8xf32>
    %cst_23 = arith.constant dense<0.000000e+00> : vector<8xf32>
    %75 = vector.multi_reduction <add>, %74, %cst_23 [1] : vector<8x8xf32> to vector<8xf32>
    %76 = vector.shape_cast %75 : vector<8xf32> to vector<8x1xf32>
    %77 = tpu.reciprocal %76 {approx = true} : vector<8x1xf32> -> vector<8x1xf32>
    %78 = vector.broadcast %77 : vector<8x1xf32> to vector<8x8xf32>
    %79 = arith.mulf %74, %78 : vector<8x8xf32>
    %cst_24 = arith.constant dense<0.000000e+00> : vector<8x16xf32>
    %80 = tpu.matmul %79, %66, %cst_24 {dimension_numbers = #tpu.dot_dimension_numbers<[1], [0], [0], [1], [0, 0, 1, 1], [], []>} : vector<8x8xf32>, vector<8x16xf32>, vector<8x16xf32> -> vector<8x16xf32>
    %81 = tpu.concatenate %29, %46, %63, %80 in 1 : vector<8x16xf32>, vector<8x16xf32>, vector<8x16xf32>, vector<8x16xf32> -> vector<8x64xf32>
    %c1 = arith.constant 1 : index
    %c0_25 = arith.constant 0 : index
    %82 = vector.load %arg1[%c1, %c0_25] : memref<2x8xf32, #tpu.memory_space<vmem>>, vector<1x8xf32>
    %83 = vector.shape_cast %82 : vector<1x8xf32> to vector<1x8xf32>
    %84 = vector.broadcast %83 : vector<1x8xf32> to vector<8x8xf32>
    %85 = vector.extract_strided_slice %8 {offsets = [8, 0], sizes = [8, 192], strides = [1, 1]} : vector<16x192xf32> to vector<8x192xf32>
    %86 = vector.extract_strided_slice %85 {offsets = [0, 0], sizes = [8, 16], strides = [1, 1]} : vector<8x192xf32> to vector<8x16xf32>
    %87 = vector.extract_strided_slice %85 {offsets = [0, 64], sizes = [8, 16], strides = [1, 1]} : vector<8x192xf32> to vector<8x16xf32>
    %88 = vector.extract_strided_slice %85 {offsets = [0, 128], sizes = [8, 16], strides = [1, 1]} : vector<8x192xf32> to vector<8x16xf32>
    %89 = tpu.transpose %87, [1, 0] : vector<8x16xf32> -> vector<16x8xf32>
    %cst_26 = arith.constant dense<0.000000e+00> : vector<8x8xf32>
    %90 = tpu.matmul %86, %89, %cst_26 {dimension_numbers = #tpu.dot_dimension_numbers<[1], [0], [0], [1], [0, 0, 1, 1], [], []>} : vector<8x16xf32>, vector<16x8xf32>, vector<8x8xf32> -> vector<8x8xf32>
    %91 = arith.addf %90, %84 : vector<8x8xf32>
    %cst_27 = arith.constant dense<0xFF800000> : vector<8xf32>
    %92 = vector.multi_reduction <maximumf>, %91, %cst_27 [1] : vector<8x8xf32> to vector<8xf32>
    %93 = vector.shape_cast %92 : vector<8xf32> to vector<8x1xf32>
    %94 = vector.broadcast %93 : vector<8x1xf32> to vector<8x8xf32>
    %95 = arith.subf %91, %94 : vector<8x8xf32>
    %96 = math.exp %95 : vector<8x8xf32>
    %cst_28 = arith.constant dense<0.000000e+00> : vector<8xf32>
    %97 = vector.multi_reduction <add>, %96, %cst_28 [1] : vector<8x8xf32> to vector<8xf32>
    %98 = vector.shape_cast %97 : vector<8xf32> to vector<8x1xf32>
    %99 = tpu.reciprocal %98 {approx = true} : vector<8x1xf32> -> vector<8x1xf32>
    %100 = vector.broadcast %99 : vector<8x1xf32> to vector<8x8xf32>
    %101 = arith.mulf %96, %100 : vector<8x8xf32>
    %cst_29 = arith.constant dense<0.000000e+00> : vector<8x16xf32>
    %102 = tpu.matmul %101, %88, %cst_29 {dimension_numbers = #tpu.dot_dimension_numbers<[1], [0], [0], [1], [0, 0, 1, 1], [], []>} : vector<8x8xf32>, vector<8x16xf32>, vector<8x16xf32> -> vector<8x16xf32>
    %103 = vector.extract_strided_slice %85 {offsets = [0, 16], sizes = [8, 16], strides = [1, 1]} : vector<8x192xf32> to vector<8x16xf32>
    %104 = vector.extract_strided_slice %85 {offsets = [0, 80], sizes = [8, 16], strides = [1, 1]} : vector<8x192xf32> to vector<8x16xf32>
    %105 = vector.extract_strided_slice %85 {offsets = [0, 144], sizes = [8, 16], strides = [1, 1]} : vector<8x192xf32> to vector<8x16xf32>
    %106 = tpu.transpose %104, [1, 0] : vector<8x16xf32> -> vector<16x8xf32>
    %cst_30 = arith.constant dense<0.000000e+00> : vector<8x8xf32>
    %107 = tpu.matmul %103, %106, %cst_30 {dimension_numbers = #tpu.dot_dimension_numbers<[1], [0], [0], [1], [0, 0, 1, 1], [], []>} : vector<8x16xf32>, vector<16x8xf32>, vector<8x8xf32> -> vector<8x8xf32>
    %108 = arith.addf %107, %84 : vector<8x8xf32>
    %cst_31 = arith.constant dense<0xFF800000> : vector<8xf32>
    %109 = vector.multi_reduction <maximumf>, %108, %cst_31 [1] : vector<8x8xf32> to vector<8xf32>
    %110 = vector.shape_cast %109 : vector<8xf32> to vector<8x1xf32>
    %111 = vector.broadcast %110 : vector<8x1xf32> to vector<8x8xf32>
    %112 = arith.subf %108, %111 : vector<8x8xf32>
    %113 = math.exp %112 : vector<8x8xf32>
    %cst_32 = arith.constant dense<0.000000e+00> : vector<8xf32>
    %114 = vector.multi_reduction <add>, %113, %cst_32 [1] : vector<8x8xf32> to vector<8xf32>
    %115 = vector.shape_cast %114 : vector<8xf32> to vector<8x1xf32>
    %116 = tpu.reciprocal %115 {approx = true} : vector<8x1xf32> -> vector<8x1xf32>
    %117 = vector.broadcast %116 : vector<8x1xf32> to vector<8x8xf32>
    %118 = arith.mulf %113, %117 : vector<8x8xf32>
    %cst_33 = arith.constant dense<0.000000e+00> : vector<8x16xf32>
    %119 = tpu.matmul %118, %105, %cst_33 {dimension_numbers = #tpu.dot_dimension_numbers<[1], [0], [0], [1], [0, 0, 1, 1], [], []>} : vector<8x8xf32>, vector<8x16xf32>, vector<8x16xf32> -> vector<8x16xf32>
    %120 = vector.extract_strided_slice %85 {offsets = [0, 32], sizes = [8, 16], strides = [1, 1]} : vector<8x192xf32> to vector<8x16xf32>
    %121 = vector.extract_strided_slice %85 {offsets = [0, 96], sizes = [8, 16], strides = [1, 1]} : vector<8x192xf32> to vector<8x16xf32>
    %122 = vector.extract_strided_slice %85 {offsets = [0, 160], sizes = [8, 16], strides = [1, 1]} : vector<8x192xf32> to vector<8x16xf32>
    %123 = tpu.transpose %121, [1, 0] : vector<8x16xf32> -> vector<16x8xf32>
    %cst_34 = arith.constant dense<0.000000e+00> : vector<8x8xf32>
    %124 = tpu.matmul %120, %123, %cst_34 {dimension_numbers = #tpu.dot_dimension_numbers<[1], [0], [0], [1], [0, 0, 1, 1], [], []>} : vector<8x16xf32>, vector<16x8xf32>, vector<8x8xf32> -> vector<8x8xf32>
    %125 = arith.addf %124, %84 : vector<8x8xf32>
    %cst_35 = arith.constant dense<0xFF800000> : vector<8xf32>
    %126 = vector.multi_reduction <maximumf>, %125, %cst_35 [1] : vector<8x8xf32> to vector<8xf32>
    %127 = vector.shape_cast %126 : vector<8xf32> to vector<8x1xf32>
    %128 = vector.broadcast %127 : vector<8x1xf32> to vector<8x8xf32>
    %129 = arith.subf %125, %128 : vector<8x8xf32>
    %130 = math.exp %129 : vector<8x8xf32>
    %cst_36 = arith.constant dense<0.000000e+00> : vector<8xf32>
    %131 = vector.multi_reduction <add>, %130, %cst_36 [1] : vector<8x8xf32> to vector<8xf32>
    %132 = vector.shape_cast %131 : vector<8xf32> to vector<8x1xf32>
    %133 = tpu.reciprocal %132 {approx = true} : vector<8x1xf32> -> vector<8x1xf32>
    %134 = vector.broadcast %133 : vector<8x1xf32> to vector<8x8xf32>
    %135 = arith.mulf %130, %134 : vector<8x8xf32>
    %cst_37 = arith.constant dense<0.000000e+00> : vector<8x16xf32>
    %136 = tpu.matmul %135, %122, %cst_37 {dimension_numbers = #tpu.dot_dimension_numbers<[1], [0], [0], [1], [0, 0, 1, 1], [], []>} : vector<8x8xf32>, vector<8x16xf32>, vector<8x16xf32> -> vector<8x16xf32>
    %137 = vector.extract_strided_slice %85 {offsets = [0, 48], sizes = [8, 16], strides = [1, 1]} : vector<8x192xf32> to vector<8x16xf32>
    %138 = vector.extract_strided_slice %85 {offsets = [0, 112], sizes = [8, 16], strides = [1, 1]} : vector<8x192xf32> to vector<8x16xf32>
    %139 = vector.extract_strided_slice %85 {offsets = [0, 176], sizes = [8, 16], strides = [1, 1]} : vector<8x192xf32> to vector<8x16xf32>
    %140 = tpu.transpose %138, [1, 0] : vector<8x16xf32> -> vector<16x8xf32>
    %cst_38 = arith.constant dense<0.000000e+00> : vector<8x8xf32>
    %141 = tpu.matmul %137, %140, %cst_38 {dimension_numbers = #tpu.dot_dimension_numbers<[1], [0], [0], [1], [0, 0, 1, 1], [], []>} : vector<8x16xf32>, vector<16x8xf32>, vector<8x8xf32> -> vector<8x8xf32>
    %142 = arith.addf %141, %84 : vector<8x8xf32>
    %cst_39 = arith.constant dense<0xFF800000> : vector<8xf32>
    %143 = vector.multi_reduction <maximumf>, %142, %cst_39 [1] : vector<8x8xf32> to vector<8xf32>
    %144 = vector.shape_cast %143 : vector<8xf32> to vector<8x1xf32>
    %145 = vector.broadcast %144 : vector<8x1xf32> to vector<8x8xf32>
    %146 = arith.subf %142, %145 : vector<8x8xf32>
    %147 = math.exp %146 : vector<8x8xf32>
    %cst_40 = arith.constant dense<0.000000e+00> : vector<8xf32>
    %148 = vector.multi_reduction <add>, %147, %cst_40 [1] : vector<8x8xf32> to vector<8xf32>
    %149 = vector.shape_cast %148 : vector<8xf32> to vector<8x1xf32>
    %150 = tpu.reciprocal %149 {approx = true} : vector<8x1xf32> -> vector<8x1xf32>
    %151 = vector.broadcast %150 : vector<8x1xf32> to vector<8x8xf32>
    %152 = arith.mulf %147, %151 : vector<8x8xf32>
    %cst_41 = arith.constant dense<0.000000e+00> : vector<8x16xf32>
    %153 = tpu.matmul %152, %139, %cst_41 {dimension_numbers = #tpu.dot_dimension_numbers<[1], [0], [0], [1], [0, 0, 1, 1], [], []>} : vector<8x8xf32>, vector<8x16xf32>, vector<8x16xf32> -> vector<8x16xf32>
    %154 = tpu.concatenate %102, %119, %136, %153 in 1 : vector<8x16xf32>, vector<8x16xf32>, vector<8x16xf32>, vector<8x16xf32> -> vector<8x64xf32>
    %155 = tpu.concatenate %81, %154 in 0 : vector<8x64xf32>, vector<8x64xf32> -> vector<16x64xf32>
    %156 = arith.truncf %155 : vector<16x64xf32> to vector<16x64xbf16>
    %c0_42 = arith.constant 0 : index
    %c0_43 = arith.constant 0 : index
    %c0_44 = arith.constant 0 : index
    %157 = vector.load %arg4[%c0_42, %c0_43, %c0_44] : memref<2x64x64xbf16, #tpu.memory_space<vmem>>, vector<1x64x64xbf16>
    %158 = vector.shape_cast %157 : vector<1x64x64xbf16> to vector<64x64xbf16>
    %cst_45 = arith.constant dense<0.000000e+00> : vector<16x64xf32>
    %159 = tpu.matmul %156, %158, %cst_45 {dimension_numbers = #tpu.dot_dimension_numbers<[1], [0], [0], [1], [0, 0, 1, 1], [], []>} : vector<16x64xbf16>, vector<64x64xbf16>, vector<16x64xf32> -> vector<16x64xf32>
    %c0_46 = arith.constant 0 : index
    %c0_47 = arith.constant 0 : index
    %c0_48 = arith.constant 0 : index
    %160 = vector.load %arg5[%c0_46, %c0_47, %c0_48] : memref<2x1x64xf32, #tpu.memory_space<vmem>>, vector<1x1x64xf32>
    %161 = vector.shape_cast %160 : vector<1x1x64xf32> to vector<1x64xf32>
    %162 = vector.broadcast %161 : vector<1x64xf32> to vector<16x64xf32>
    %163 = arith.addf %159, %162 : vector<16x64xf32>
    %164 = arith.addf %0, %163 : vector<16x64xf32>
    %c0_49 = arith.constant 0 : index
    %c0_50 = arith.constant 0 : index
    %c0_51 = arith.constant 0 : index
    %165 = vector.load %arg6[%c0_49, %c0_50, %c0_51] : memref<2x1x64xf32, #tpu.memory_space<vmem>>, vector<1x1x64xf32>
    %166 = vector.shape_cast %165 : vector<1x1x64xf32> to vector<1x64xf32>
    %c0_52 = arith.constant 0 : index
    %c0_53 = arith.constant 0 : index
    %c0_54 = arith.constant 0 : index
    %167 = vector.load %arg7[%c0_52, %c0_53, %c0_54] : memref<2x1x64xf32, #tpu.memory_space<vmem>>, vector<1x1x64xf32>
    %168 = vector.shape_cast %167 : vector<1x1x64xf32> to vector<1x64xf32>
    %cst_55 = arith.constant dense<0.000000e+00> : vector<16xf32>
    %169 = vector.multi_reduction <add>, %164, %cst_55 [1] : vector<16x64xf32> to vector<16xf32>
    %170 = vector.shape_cast %169 : vector<16xf32> to vector<16x1xf32>
    %cst_56 = arith.constant 6.400000e+01 : f32
    %171 = vector.broadcast %cst_56 : f32 to vector<16x1xf32>
    %172 = arith.divf %170, %171 : vector<16x1xf32>
    %173 = vector.broadcast %172 : vector<16x1xf32> to vector<16x64xf32>
    %174 = arith.subf %164, %173 : vector<16x64xf32>
    %175 = arith.mulf %174, %174 : vector<16x64xf32>
    %cst_57 = arith.constant dense<0.000000e+00> : vector<16xf32>
    %176 = vector.multi_reduction <add>, %175, %cst_57 [1] : vector<16x64xf32> to vector<16xf32>
    %177 = vector.shape_cast %176 : vector<16xf32> to vector<16x1xf32>
    %cst_58 = arith.constant 6.400000e+01 : f32
    %178 = vector.broadcast %cst_58 : f32 to vector<16x1xf32>
    %179 = arith.divf %177, %178 : vector<16x1xf32>
    %cst_59 = arith.constant 9.99999974E-6 : f32
    %180 = vector.broadcast %cst_59 : f32 to vector<16x1xf32>
    %181 = arith.addf %179, %180 : vector<16x1xf32>
    %182 = math.rsqrt %181 : vector<16x1xf32>
    %183 = vector.broadcast %182 : vector<16x1xf32> to vector<16x64xf32>
    %184 = arith.mulf %174, %183 : vector<16x64xf32>
    %185 = vector.broadcast %166 : vector<1x64xf32> to vector<16x64xf32>
    %186 = arith.mulf %184, %185 : vector<16x64xf32>
    %187 = vector.broadcast %168 : vector<1x64xf32> to vector<16x64xf32>
    %188 = arith.addf %186, %187 : vector<16x64xf32>
    %189 = arith.truncf %188 : vector<16x64xf32> to vector<16x64xbf16>
    %c0_60 = arith.constant 0 : index
    %c0_61 = arith.constant 0 : index
    %c0_62 = arith.constant 0 : index
    %190 = vector.load %arg8[%c0_60, %c0_61, %c0_62] : memref<2x64x128xbf16, #tpu.memory_space<vmem>>, vector<1x64x128xbf16>
    %191 = vector.shape_cast %190 : vector<1x64x128xbf16> to vector<64x128xbf16>
    %cst_63 = arith.constant dense<0.000000e+00> : vector<16x128xf32>
    %192 = tpu.matmul %189, %191, %cst_63 {dimension_numbers = #tpu.dot_dimension_numbers<[1], [0], [0], [1], [0, 0, 1, 1], [], []>} : vector<16x64xbf16>, vector<64x128xbf16>, vector<16x128xf32> -> vector<16x128xf32>
    %c0_64 = arith.constant 0 : index
    %c0_65 = arith.constant 0 : index
    %c0_66 = arith.constant 0 : index
    %193 = vector.load %arg9[%c0_64, %c0_65, %c0_66] : memref<2x1x128xf32, #tpu.memory_space<vmem>>, vector<1x1x128xf32>
    %194 = vector.shape_cast %193 : vector<1x1x128xf32> to vector<1x128xf32>
    %195 = vector.broadcast %194 : vector<1x128xf32> to vector<16x128xf32>
    %196 = arith.addf %192, %195 : vector<16x128xf32>
    %cst_67 = arith.constant 5.000000e-01 : f32
    %197 = vector.broadcast %cst_67 : f32 to vector<16x128xf32>
    %198 = arith.mulf %197, %196 : vector<16x128xf32>
    %cst_68 = arith.constant 4.471500e-02 : f32
    %199 = vector.broadcast %cst_68 : f32 to vector<16x128xf32>
    %200 = arith.mulf %199, %196 : vector<16x128xf32>
    %201 = arith.mulf %200, %196 : vector<16x128xf32>
    %202 = arith.mulf %201, %196 : vector<16x128xf32>
    %203 = arith.addf %196, %202 : vector<16x128xf32>
    %cst_69 = arith.constant 0.797884583 : f32
    %204 = vector.broadcast %cst_69 : f32 to vector<16x128xf32>
    %205 = arith.mulf %204, %203 : vector<16x128xf32>
    %206 = math.tanh %205 : vector<16x128xf32>
    %cst_70 = arith.constant 1.000000e+00 : f32
    %207 = vector.broadcast %cst_70 : f32 to vector<16x128xf32>
    %208 = arith.addf %207, %206 : vector<16x128xf32>
    %209 = arith.mulf %198, %208 : vector<16x128xf32>
    %210 = arith.truncf %209 : vector<16x128xf32> to vector<16x128xbf16>
    %c0_71 = arith.constant 0 : index
    %c0_72 = arith.constant 0 : index
    %c0_73 = arith.constant 0 : index
    %211 = vector.load %arg10[%c0_71, %c0_72, %c0_73] : memref<2x128x64xbf16, #tpu.memory_space<vmem>>, vector<1x128x64xbf16>
    %212 = vector.shape_cast %211 : vector<1x128x64xbf16> to vector<128x64xbf16>
    %cst_74 = arith.constant dense<0.000000e+00> : vector<16x64xf32>
    %213 = tpu.matmul %210, %212, %cst_74 {dimension_numbers = #tpu.dot_dimension_numbers<[1], [0], [0], [1], [0, 0, 1, 1], [], []>} : vector<16x128xbf16>, vector<128x64xbf16>, vector<16x64xf32> -> vector<16x64xf32>
    %c0_75 = arith.constant 0 : index
    %c0_76 = arith.constant 0 : index
    %c0_77 = arith.constant 0 : index
    %214 = vector.load %arg11[%c0_75, %c0_76, %c0_77] : memref<2x1x64xf32, #tpu.memory_space<vmem>>, vector<1x1x64xf32>
    %215 = vector.shape_cast %214 : vector<1x1x64xf32> to vector<1x64xf32>
    %216 = vector.broadcast %215 : vector<1x64xf32> to vector<16x64xf32>
    %217 = arith.addf %213, %216 : vector<16x64xf32>
    %218 = arith.addf %188, %217 : vector<16x64xf32>
    %c0_78 = arith.constant 0 : index
    %c0_79 = arith.constant 0 : index
    %c0_80 = arith.constant 0 : index
    %219 = vector.load %arg12[%c0_78, %c0_79, %c0_80] : memref<2x1x64xf32, #tpu.memory_space<vmem>>, vector<1x1x64xf32>
    %220 = vector.shape_cast %219 : vector<1x1x64xf32> to vector<1x64xf32>
    %c0_81 = arith.constant 0 : index
    %c0_82 = arith.constant 0 : index
    %c0_83 = arith.constant 0 : index
    %221 = vector.load %arg13[%c0_81, %c0_82, %c0_83] : memref<2x1x64xf32, #tpu.memory_space<vmem>>, vector<1x1x64xf32>
    %222 = vector.shape_cast %221 : vector<1x1x64xf32> to vector<1x64xf32>
    %cst_84 = arith.constant dense<0.000000e+00> : vector<16xf32>
    %223 = vector.multi_reduction <add>, %218, %cst_84 [1] : vector<16x64xf32> to vector<16xf32>
    %224 = vector.shape_cast %223 : vector<16xf32> to vector<16x1xf32>
    %cst_85 = arith.constant 6.400000e+01 : f32
    %225 = vector.broadcast %cst_85 : f32 to vector<16x1xf32>
    %226 = arith.divf %224, %225 : vector<16x1xf32>
    %227 = vector.broadcast %226 : vector<16x1xf32> to vector<16x64xf32>
    %228 = arith.subf %218, %227 : vector<16x64xf32>
    %229 = arith.mulf %228, %228 : vector<16x64xf32>
    %cst_86 = arith.constant dense<0.000000e+00> : vector<16xf32>
    %230 = vector.multi_reduction <add>, %229, %cst_86 [1] : vector<16x64xf32> to vector<16xf32>
    %231 = vector.shape_cast %230 : vector<16xf32> to vector<16x1xf32>
    %cst_87 = arith.constant 6.400000e+01 : f32
    %232 = vector.broadcast %cst_87 : f32 to vector<16x1xf32>
    %233 = arith.divf %231, %232 : vector<16x1xf32>
    %cst_88 = arith.constant 9.99999974E-6 : f32
    %234 = vector.broadcast %cst_88 : f32 to vector<16x1xf32>
    %235 = arith.addf %233, %234 : vector<16x1xf32>
    %236 = math.rsqrt %235 : vector<16x1xf32>
    %237 = vector.broadcast %236 : vector<16x1xf32> to vector<16x64xf32>
    %238 = arith.mulf %228, %237 : vector<16x64xf32>
    %239 = vector.broadcast %220 : vector<1x64xf32> to vector<16x64xf32>
    %240 = arith.mulf %238, %239 : vector<16x64xf32>
    %241 = vector.broadcast %222 : vector<1x64xf32> to vector<16x64xf32>
    %242 = arith.addf %240, %241 : vector<16x64xf32>
    %243 = arith.truncf %242 : vector<16x64xf32> to vector<16x64xbf16>
    %c1_89 = arith.constant 1 : index
    %c0_90 = arith.constant 0 : index
    %c0_91 = arith.constant 0 : index
    %244 = vector.load %arg2[%c1_89, %c0_90, %c0_91] : memref<2x64x192xbf16, #tpu.memory_space<vmem>>, vector<1x64x192xbf16>
    %245 = vector.shape_cast %244 : vector<1x64x192xbf16> to vector<64x192xbf16>
    %cst_92 = arith.constant dense<0.000000e+00> : vector<16x192xf32>
    %246 = tpu.matmul %243, %245, %cst_92 {dimension_numbers = #tpu.dot_dimension_numbers<[1], [0], [0], [1], [0, 0, 1, 1], [], []>} : vector<16x64xbf16>, vector<64x192xbf16>, vector<16x192xf32> -> vector<16x192xf32>
    %c1_93 = arith.constant 1 : index
    %c0_94 = arith.constant 0 : index
    %c0_95 = arith.constant 0 : index
    %247 = vector.load %arg3[%c1_93, %c0_94, %c0_95] : memref<2x1x192xf32, #tpu.memory_space<vmem>>, vector<1x1x192xf32>
    %248 = vector.shape_cast %247 : vector<1x1x192xf32> to vector<1x192xf32>
    %249 = vector.broadcast %248 : vector<1x192xf32> to vector<16x192xf32>
    %250 = arith.addf %246, %249 : vector<16x192xf32>
    %c0_96 = arith.constant 0 : index
    %c0_97 = arith.constant 0 : index
    %251 = vector.load %arg1[%c0_96, %c0_97] : memref<2x8xf32, #tpu.memory_space<vmem>>, vector<1x8xf32>
    %252 = vector.shape_cast %251 : vector<1x8xf32> to vector<1x8xf32>
    %253 = vector.broadcast %252 : vector<1x8xf32> to vector<8x8xf32>
    %254 = vector.extract_strided_slice %250 {offsets = [0, 0], sizes = [8, 192], strides = [1, 1]} : vector<16x192xf32> to vector<8x192xf32>
    %255 = vector.extract_strided_slice %254 {offsets = [0, 0], sizes = [8, 16], strides = [1, 1]} : vector<8x192xf32> to vector<8x16xf32>
    %256 = vector.extract_strided_slice %254 {offsets = [0, 64], sizes = [8, 16], strides = [1, 1]} : vector<8x192xf32> to vector<8x16xf32>
    %257 = vector.extract_strided_slice %254 {offsets = [0, 128], sizes = [8, 16], strides = [1, 1]} : vector<8x192xf32> to vector<8x16xf32>
    %258 = tpu.transpose %256, [1, 0] : vector<8x16xf32> -> vector<16x8xf32>
    %cst_98 = arith.constant dense<0.000000e+00> : vector<8x8xf32>
    %259 = tpu.matmul %255, %258, %cst_98 {dimension_numbers = #tpu.dot_dimension_numbers<[1], [0], [0], [1], [0, 0, 1, 1], [], []>} : vector<8x16xf32>, vector<16x8xf32>, vector<8x8xf32> -> vector<8x8xf32>
    %260 = arith.addf %259, %253 : vector<8x8xf32>
    %cst_99 = arith.constant dense<0xFF800000> : vector<8xf32>
    %261 = vector.multi_reduction <maximumf>, %260, %cst_99 [1] : vector<8x8xf32> to vector<8xf32>
    %262 = vector.shape_cast %261 : vector<8xf32> to vector<8x1xf32>
    %263 = vector.broadcast %262 : vector<8x1xf32> to vector<8x8xf32>
    %264 = arith.subf %260, %263 : vector<8x8xf32>
    %265 = math.exp %264 : vector<8x8xf32>
    %cst_100 = arith.constant dense<0.000000e+00> : vector<8xf32>
    %266 = vector.multi_reduction <add>, %265, %cst_100 [1] : vector<8x8xf32> to vector<8xf32>
    %267 = vector.shape_cast %266 : vector<8xf32> to vector<8x1xf32>
    %268 = tpu.reciprocal %267 {approx = true} : vector<8x1xf32> -> vector<8x1xf32>
    %269 = vector.broadcast %268 : vector<8x1xf32> to vector<8x8xf32>
    %270 = arith.mulf %265, %269 : vector<8x8xf32>
    %cst_101 = arith.constant dense<0.000000e+00> : vector<8x16xf32>
    %271 = tpu.matmul %270, %257, %cst_101 {dimension_numbers = #tpu.dot_dimension_numbers<[1], [0], [0], [1], [0, 0, 1, 1], [], []>} : vector<8x8xf32>, vector<8x16xf32>, vector<8x16xf32> -> vector<8x16xf32>
    %272 = vector.extract_strided_slice %254 {offsets = [0, 16], sizes = [8, 16], strides = [1, 1]} : vector<8x192xf32> to vector<8x16xf32>
    %273 = vector.extract_strided_slice %254 {offsets = [0, 80], sizes = [8, 16], strides = [1, 1]} : vector<8x192xf32> to vector<8x16xf32>
    %274 = vector.extract_strided_slice %254 {offsets = [0, 144], sizes = [8, 16], strides = [1, 1]} : vector<8x192xf32> to vector<8x16xf32>
    %275 = tpu.transpose %273, [1, 0] : vector<8x16xf32> -> vector<16x8xf32>
    %cst_102 = arith.constant dense<0.000000e+00> : vector<8x8xf32>
    %276 = tpu.matmul %272, %275, %cst_102 {dimension_numbers = #tpu.dot_dimension_numbers<[1], [0], [0], [1], [0, 0, 1, 1], [], []>} : vector<8x16xf32>, vector<16x8xf32>, vector<8x8xf32> -> vector<8x8xf32>
    %277 = arith.addf %276, %253 : vector<8x8xf32>
    %cst_103 = arith.constant dense<0xFF800000> : vector<8xf32>
    %278 = vector.multi_reduction <maximumf>, %277, %cst_103 [1] : vector<8x8xf32> to vector<8xf32>
    %279 = vector.shape_cast %278 : vector<8xf32> to vector<8x1xf32>
    %280 = vector.broadcast %279 : vector<8x1xf32> to vector<8x8xf32>
    %281 = arith.subf %277, %280 : vector<8x8xf32>
    %282 = math.exp %281 : vector<8x8xf32>
    %cst_104 = arith.constant dense<0.000000e+00> : vector<8xf32>
    %283 = vector.multi_reduction <add>, %282, %cst_104 [1] : vector<8x8xf32> to vector<8xf32>
    %284 = vector.shape_cast %283 : vector<8xf32> to vector<8x1xf32>
    %285 = tpu.reciprocal %284 {approx = true} : vector<8x1xf32> -> vector<8x1xf32>
    %286 = vector.broadcast %285 : vector<8x1xf32> to vector<8x8xf32>
    %287 = arith.mulf %282, %286 : vector<8x8xf32>
    %cst_105 = arith.constant dense<0.000000e+00> : vector<8x16xf32>
    %288 = tpu.matmul %287, %274, %cst_105 {dimension_numbers = #tpu.dot_dimension_numbers<[1], [0], [0], [1], [0, 0, 1, 1], [], []>} : vector<8x8xf32>, vector<8x16xf32>, vector<8x16xf32> -> vector<8x16xf32>
    %289 = vector.extract_strided_slice %254 {offsets = [0, 32], sizes = [8, 16], strides = [1, 1]} : vector<8x192xf32> to vector<8x16xf32>
    %290 = vector.extract_strided_slice %254 {offsets = [0, 96], sizes = [8, 16], strides = [1, 1]} : vector<8x192xf32> to vector<8x16xf32>
    %291 = vector.extract_strided_slice %254 {offsets = [0, 160], sizes = [8, 16], strides = [1, 1]} : vector<8x192xf32> to vector<8x16xf32>
    %292 = tpu.transpose %290, [1, 0] : vector<8x16xf32> -> vector<16x8xf32>
    %cst_106 = arith.constant dense<0.000000e+00> : vector<8x8xf32>
    %293 = tpu.matmul %289, %292, %cst_106 {dimension_numbers = #tpu.dot_dimension_numbers<[1], [0], [0], [1], [0, 0, 1, 1], [], []>} : vector<8x16xf32>, vector<16x8xf32>, vector<8x8xf32> -> vector<8x8xf32>
    %294 = arith.addf %293, %253 : vector<8x8xf32>
    %cst_107 = arith.constant dense<0xFF800000> : vector<8xf32>
    %295 = vector.multi_reduction <maximumf>, %294, %cst_107 [1] : vector<8x8xf32> to vector<8xf32>
    %296 = vector.shape_cast %295 : vector<8xf32> to vector<8x1xf32>
    %297 = vector.broadcast %296 : vector<8x1xf32> to vector<8x8xf32>
    %298 = arith.subf %294, %297 : vector<8x8xf32>
    %299 = math.exp %298 : vector<8x8xf32>
    %cst_108 = arith.constant dense<0.000000e+00> : vector<8xf32>
    %300 = vector.multi_reduction <add>, %299, %cst_108 [1] : vector<8x8xf32> to vector<8xf32>
    %301 = vector.shape_cast %300 : vector<8xf32> to vector<8x1xf32>
    %302 = tpu.reciprocal %301 {approx = true} : vector<8x1xf32> -> vector<8x1xf32>
    %303 = vector.broadcast %302 : vector<8x1xf32> to vector<8x8xf32>
    %304 = arith.mulf %299, %303 : vector<8x8xf32>
    %cst_109 = arith.constant dense<0.000000e+00> : vector<8x16xf32>
    %305 = tpu.matmul %304, %291, %cst_109 {dimension_numbers = #tpu.dot_dimension_numbers<[1], [0], [0], [1], [0, 0, 1, 1], [], []>} : vector<8x8xf32>, vector<8x16xf32>, vector<8x16xf32> -> vector<8x16xf32>
    %306 = vector.extract_strided_slice %254 {offsets = [0, 48], sizes = [8, 16], strides = [1, 1]} : vector<8x192xf32> to vector<8x16xf32>
    %307 = vector.extract_strided_slice %254 {offsets = [0, 112], sizes = [8, 16], strides = [1, 1]} : vector<8x192xf32> to vector<8x16xf32>
    %308 = vector.extract_strided_slice %254 {offsets = [0, 176], sizes = [8, 16], strides = [1, 1]} : vector<8x192xf32> to vector<8x16xf32>
    %309 = tpu.transpose %307, [1, 0] : vector<8x16xf32> -> vector<16x8xf32>
    %cst_110 = arith.constant dense<0.000000e+00> : vector<8x8xf32>
    %310 = tpu.matmul %306, %309, %cst_110 {dimension_numbers = #tpu.dot_dimension_numbers<[1], [0], [0], [1], [0, 0, 1, 1], [], []>} : vector<8x16xf32>, vector<16x8xf32>, vector<8x8xf32> -> vector<8x8xf32>
    %311 = arith.addf %310, %253 : vector<8x8xf32>
    %cst_111 = arith.constant dense<0xFF800000> : vector<8xf32>
    %312 = vector.multi_reduction <maximumf>, %311, %cst_111 [1] : vector<8x8xf32> to vector<8xf32>
    %313 = vector.shape_cast %312 : vector<8xf32> to vector<8x1xf32>
    %314 = vector.broadcast %313 : vector<8x1xf32> to vector<8x8xf32>
    %315 = arith.subf %311, %314 : vector<8x8xf32>
    %316 = math.exp %315 : vector<8x8xf32>
    %cst_112 = arith.constant dense<0.000000e+00> : vector<8xf32>
    %317 = vector.multi_reduction <add>, %316, %cst_112 [1] : vector<8x8xf32> to vector<8xf32>
    %318 = vector.shape_cast %317 : vector<8xf32> to vector<8x1xf32>
    %319 = tpu.reciprocal %318 {approx = true} : vector<8x1xf32> -> vector<8x1xf32>
    %320 = vector.broadcast %319 : vector<8x1xf32> to vector<8x8xf32>
    %321 = arith.mulf %316, %320 : vector<8x8xf32>
    %cst_113 = arith.constant dense<0.000000e+00> : vector<8x16xf32>
    %322 = tpu.matmul %321, %308, %cst_113 {dimension_numbers = #tpu.dot_dimension_numbers<[1], [0], [0], [1], [0, 0, 1, 1], [], []>} : vector<8x8xf32>, vector<8x16xf32>, vector<8x16xf32> -> vector<8x16xf32>
    %323 = tpu.concatenate %271, %288, %305, %322 in 1 : vector<8x16xf32>, vector<8x16xf32>, vector<8x16xf32>, vector<8x16xf32> -> vector<8x64xf32>
    %c1_114 = arith.constant 1 : index
    %c0_115 = arith.constant 0 : index
    %324 = vector.load %arg1[%c1_114, %c0_115] : memref<2x8xf32, #tpu.memory_space<vmem>>, vector<1x8xf32>
    %325 = vector.shape_cast %324 : vector<1x8xf32> to vector<1x8xf32>
    %326 = vector.broadcast %325 : vector<1x8xf32> to vector<8x8xf32>
    %327 = vector.extract_strided_slice %250 {offsets = [8, 0], sizes = [8, 192], strides = [1, 1]} : vector<16x192xf32> to vector<8x192xf32>
    %328 = vector.extract_strided_slice %327 {offsets = [0, 0], sizes = [8, 16], strides = [1, 1]} : vector<8x192xf32> to vector<8x16xf32>
    %329 = vector.extract_strided_slice %327 {offsets = [0, 64], sizes = [8, 16], strides = [1, 1]} : vector<8x192xf32> to vector<8x16xf32>
    %330 = vector.extract_strided_slice %327 {offsets = [0, 128], sizes = [8, 16], strides = [1, 1]} : vector<8x192xf32> to vector<8x16xf32>
    %331 = tpu.transpose %329, [1, 0] : vector<8x16xf32> -> vector<16x8xf32>
    %cst_116 = arith.constant dense<0.000000e+00> : vector<8x8xf32>
    %332 = tpu.matmul %328, %331, %cst_116 {dimension_numbers = #tpu.dot_dimension_numbers<[1], [0], [0], [1], [0, 0, 1, 1], [], []>} : vector<8x16xf32>, vector<16x8xf32>, vector<8x8xf32> -> vector<8x8xf32>
    %333 = arith.addf %332, %326 : vector<8x8xf32>
    %cst_117 = arith.constant dense<0xFF800000> : vector<8xf32>
    %334 = vector.multi_reduction <maximumf>, %333, %cst_117 [1] : vector<8x8xf32> to vector<8xf32>
    %335 = vector.shape_cast %334 : vector<8xf32> to vector<8x1xf32>
    %336 = vector.broadcast %335 : vector<8x1xf32> to vector<8x8xf32>
    %337 = arith.subf %333, %336 : vector<8x8xf32>
    %338 = math.exp %337 : vector<8x8xf32>
    %cst_118 = arith.constant dense<0.000000e+00> : vector<8xf32>
    %339 = vector.multi_reduction <add>, %338, %cst_118 [1] : vector<8x8xf32> to vector<8xf32>
    %340 = vector.shape_cast %339 : vector<8xf32> to vector<8x1xf32>
    %341 = tpu.reciprocal %340 {approx = true} : vector<8x1xf32> -> vector<8x1xf32>
    %342 = vector.broadcast %341 : vector<8x1xf32> to vector<8x8xf32>
    %343 = arith.mulf %338, %342 : vector<8x8xf32>
    %cst_119 = arith.constant dense<0.000000e+00> : vector<8x16xf32>
    %344 = tpu.matmul %343, %330, %cst_119 {dimension_numbers = #tpu.dot_dimension_numbers<[1], [0], [0], [1], [0, 0, 1, 1], [], []>} : vector<8x8xf32>, vector<8x16xf32>, vector<8x16xf32> -> vector<8x16xf32>
    %345 = vector.extract_strided_slice %327 {offsets = [0, 16], sizes = [8, 16], strides = [1, 1]} : vector<8x192xf32> to vector<8x16xf32>
    %346 = vector.extract_strided_slice %327 {offsets = [0, 80], sizes = [8, 16], strides = [1, 1]} : vector<8x192xf32> to vector<8x16xf32>
    %347 = vector.extract_strided_slice %327 {offsets = [0, 144], sizes = [8, 16], strides = [1, 1]} : vector<8x192xf32> to vector<8x16xf32>
    %348 = tpu.transpose %346, [1, 0] : vector<8x16xf32> -> vector<16x8xf32>
    %cst_120 = arith.constant dense<0.000000e+00> : vector<8x8xf32>
    %349 = tpu.matmul %345, %348, %cst_120 {dimension_numbers = #tpu.dot_dimension_numbers<[1], [0], [0], [1], [0, 0, 1, 1], [], []>} : vector<8x16xf32>, vector<16x8xf32>, vector<8x8xf32> -> vector<8x8xf32>
    %350 = arith.addf %349, %326 : vector<8x8xf32>
    %cst_121 = arith.constant dense<0xFF800000> : vector<8xf32>
    %351 = vector.multi_reduction <maximumf>, %350, %cst_121 [1] : vector<8x8xf32> to vector<8xf32>
    %352 = vector.shape_cast %351 : vector<8xf32> to vector<8x1xf32>
    %353 = vector.broadcast %352 : vector<8x1xf32> to vector<8x8xf32>
    %354 = arith.subf %350, %353 : vector<8x8xf32>
    %355 = math.exp %354 : vector<8x8xf32>
    %cst_122 = arith.constant dense<0.000000e+00> : vector<8xf32>
    %356 = vector.multi_reduction <add>, %355, %cst_122 [1] : vector<8x8xf32> to vector<8xf32>
    %357 = vector.shape_cast %356 : vector<8xf32> to vector<8x1xf32>
    %358 = tpu.reciprocal %357 {approx = true} : vector<8x1xf32> -> vector<8x1xf32>
    %359 = vector.broadcast %358 : vector<8x1xf32> to vector<8x8xf32>
    %360 = arith.mulf %355, %359 : vector<8x8xf32>
    %cst_123 = arith.constant dense<0.000000e+00> : vector<8x16xf32>
    %361 = tpu.matmul %360, %347, %cst_123 {dimension_numbers = #tpu.dot_dimension_numbers<[1], [0], [0], [1], [0, 0, 1, 1], [], []>} : vector<8x8xf32>, vector<8x16xf32>, vector<8x16xf32> -> vector<8x16xf32>
    %362 = vector.extract_strided_slice %327 {offsets = [0, 32], sizes = [8, 16], strides = [1, 1]} : vector<8x192xf32> to vector<8x16xf32>
    %363 = vector.extract_strided_slice %327 {offsets = [0, 96], sizes = [8, 16], strides = [1, 1]} : vector<8x192xf32> to vector<8x16xf32>
    %364 = vector.extract_strided_slice %327 {offsets = [0, 160], sizes = [8, 16], strides = [1, 1]} : vector<8x192xf32> to vector<8x16xf32>
    %365 = tpu.transpose %363, [1, 0] : vector<8x16xf32> -> vector<16x8xf32>
    %cst_124 = arith.constant dense<0.000000e+00> : vector<8x8xf32>
    %366 = tpu.matmul %362, %365, %cst_124 {dimension_numbers = #tpu.dot_dimension_numbers<[1], [0], [0], [1], [0, 0, 1, 1], [], []>} : vector<8x16xf32>, vector<16x8xf32>, vector<8x8xf32> -> vector<8x8xf32>
    %367 = arith.addf %366, %326 : vector<8x8xf32>
    %cst_125 = arith.constant dense<0xFF800000> : vector<8xf32>
    %368 = vector.multi_reduction <maximumf>, %367, %cst_125 [1] : vector<8x8xf32> to vector<8xf32>
    %369 = vector.shape_cast %368 : vector<8xf32> to vector<8x1xf32>
    %370 = vector.broadcast %369 : vector<8x1xf32> to vector<8x8xf32>
    %371 = arith.subf %367, %370 : vector<8x8xf32>
    %372 = math.exp %371 : vector<8x8xf32>
    %cst_126 = arith.constant dense<0.000000e+00> : vector<8xf32>
    %373 = vector.multi_reduction <add>, %372, %cst_126 [1] : vector<8x8xf32> to vector<8xf32>
    %374 = vector.shape_cast %373 : vector<8xf32> to vector<8x1xf32>
    %375 = tpu.reciprocal %374 {approx = true} : vector<8x1xf32> -> vector<8x1xf32>
    %376 = vector.broadcast %375 : vector<8x1xf32> to vector<8x8xf32>
    %377 = arith.mulf %372, %376 : vector<8x8xf32>
    %cst_127 = arith.constant dense<0.000000e+00> : vector<8x16xf32>
    %378 = tpu.matmul %377, %364, %cst_127 {dimension_numbers = #tpu.dot_dimension_numbers<[1], [0], [0], [1], [0, 0, 1, 1], [], []>} : vector<8x8xf32>, vector<8x16xf32>, vector<8x16xf32> -> vector<8x16xf32>
    %379 = vector.extract_strided_slice %327 {offsets = [0, 48], sizes = [8, 16], strides = [1, 1]} : vector<8x192xf32> to vector<8x16xf32>
    %380 = vector.extract_strided_slice %327 {offsets = [0, 112], sizes = [8, 16], strides = [1, 1]} : vector<8x192xf32> to vector<8x16xf32>
    %381 = vector.extract_strided_slice %327 {offsets = [0, 176], sizes = [8, 16], strides = [1, 1]} : vector<8x192xf32> to vector<8x16xf32>
    %382 = tpu.transpose %380, [1, 0] : vector<8x16xf32> -> vector<16x8xf32>
    %cst_128 = arith.constant dense<0.000000e+00> : vector<8x8xf32>
    %383 = tpu.matmul %379, %382, %cst_128 {dimension_numbers = #tpu.dot_dimension_numbers<[1], [0], [0], [1], [0, 0, 1, 1], [], []>} : vector<8x16xf32>, vector<16x8xf32>, vector<8x8xf32> -> vector<8x8xf32>
    %384 = arith.addf %383, %326 : vector<8x8xf32>
    %cst_129 = arith.constant dense<0xFF800000> : vector<8xf32>
    %385 = vector.multi_reduction <maximumf>, %384, %cst_129 [1] : vector<8x8xf32> to vector<8xf32>
    %386 = vector.shape_cast %385 : vector<8xf32> to vector<8x1xf32>
    %387 = vector.broadcast %386 : vector<8x1xf32> to vector<8x8xf32>
    %388 = arith.subf %384, %387 : vector<8x8xf32>
    %389 = math.exp %388 : vector<8x8xf32>
    %cst_130 = arith.constant dense<0.000000e+00> : vector<8xf32>
    %390 = vector.multi_reduction <add>, %389, %cst_130 [1] : vector<8x8xf32> to vector<8xf32>
    %391 = vector.shape_cast %390 : vector<8xf32> to vector<8x1xf32>
    %392 = tpu.reciprocal %391 {approx = true} : vector<8x1xf32> -> vector<8x1xf32>
    %393 = vector.broadcast %392 : vector<8x1xf32> to vector<8x8xf32>
    %394 = arith.mulf %389, %393 : vector<8x8xf32>
    %cst_131 = arith.constant dense<0.000000e+00> : vector<8x16xf32>
    %395 = tpu.matmul %394, %381, %cst_131 {dimension_numbers = #tpu.dot_dimension_numbers<[1], [0], [0], [1], [0, 0, 1, 1], [], []>} : vector<8x8xf32>, vector<8x16xf32>, vector<8x16xf32> -> vector<8x16xf32>
    %396 = tpu.concatenate %344, %361, %378, %395 in 1 : vector<8x16xf32>, vector<8x16xf32>, vector<8x16xf32>, vector<8x16xf32> -> vector<8x64xf32>
    %397 = tpu.concatenate %323, %396 in 0 : vector<8x64xf32>, vector<8x64xf32> -> vector<16x64xf32>
    %398 = arith.truncf %397 : vector<16x64xf32> to vector<16x64xbf16>
    %c1_132 = arith.constant 1 : index
    %c0_133 = arith.constant 0 : index
    %c0_134 = arith.constant 0 : index
    %399 = vector.load %arg4[%c1_132, %c0_133, %c0_134] : memref<2x64x64xbf16, #tpu.memory_space<vmem>>, vector<1x64x64xbf16>
    %400 = vector.shape_cast %399 : vector<1x64x64xbf16> to vector<64x64xbf16>
    %cst_135 = arith.constant dense<0.000000e+00> : vector<16x64xf32>
    %401 = tpu.matmul %398, %400, %cst_135 {dimension_numbers = #tpu.dot_dimension_numbers<[1], [0], [0], [1], [0, 0, 1, 1], [], []>} : vector<16x64xbf16>, vector<64x64xbf16>, vector<16x64xf32> -> vector<16x64xf32>
    %c1_136 = arith.constant 1 : index
    %c0_137 = arith.constant 0 : index
    %c0_138 = arith.constant 0 : index
    %402 = vector.load %arg5[%c1_136, %c0_137, %c0_138] : memref<2x1x64xf32, #tpu.memory_space<vmem>>, vector<1x1x64xf32>
    %403 = vector.shape_cast %402 : vector<1x1x64xf32> to vector<1x64xf32>
    %404 = vector.broadcast %403 : vector<1x64xf32> to vector<16x64xf32>
    %405 = arith.addf %401, %404 : vector<16x64xf32>
    %406 = arith.addf %242, %405 : vector<16x64xf32>
    %c1_139 = arith.constant 1 : index
    %c0_140 = arith.constant 0 : index
    %c0_141 = arith.constant 0 : index
    %407 = vector.load %arg6[%c1_139, %c0_140, %c0_141] : memref<2x1x64xf32, #tpu.memory_space<vmem>>, vector<1x1x64xf32>
    %408 = vector.shape_cast %407 : vector<1x1x64xf32> to vector<1x64xf32>
    %c1_142 = arith.constant 1 : index
    %c0_143 = arith.constant 0 : index
    %c0_144 = arith.constant 0 : index
    %409 = vector.load %arg7[%c1_142, %c0_143, %c0_144] : memref<2x1x64xf32, #tpu.memory_space<vmem>>, vector<1x1x64xf32>
    %410 = vector.shape_cast %409 : vector<1x1x64xf32> to vector<1x64xf32>
    %cst_145 = arith.constant dense<0.000000e+00> : vector<16xf32>
    %411 = vector.multi_reduction <add>, %406, %cst_145 [1] : vector<16x64xf32> to vector<16xf32>
    %412 = vector.shape_cast %411 : vector<16xf32> to vector<16x1xf32>
    %cst_146 = arith.constant 6.400000e+01 : f32
    %413 = vector.broadcast %cst_146 : f32 to vector<16x1xf32>
    %414 = arith.divf %412, %413 : vector<16x1xf32>
    %415 = vector.broadcast %414 : vector<16x1xf32> to vector<16x64xf32>
    %416 = arith.subf %406, %415 : vector<16x64xf32>
    %417 = arith.mulf %416, %416 : vector<16x64xf32>
    %cst_147 = arith.constant dense<0.000000e+00> : vector<16xf32>
    %418 = vector.multi_reduction <add>, %417, %cst_147 [1] : vector<16x64xf32> to vector<16xf32>
    %419 = vector.shape_cast %418 : vector<16xf32> to vector<16x1xf32>
    %cst_148 = arith.constant 6.400000e+01 : f32
    %420 = vector.broadcast %cst_148 : f32 to vector<16x1xf32>
    %421 = arith.divf %419, %420 : vector<16x1xf32>
    %cst_149 = arith.constant 9.99999974E-6 : f32
    %422 = vector.broadcast %cst_149 : f32 to vector<16x1xf32>
    %423 = arith.addf %421, %422 : vector<16x1xf32>
    %424 = math.rsqrt %423 : vector<16x1xf32>
    %425 = vector.broadcast %424 : vector<16x1xf32> to vector<16x64xf32>
    %426 = arith.mulf %416, %425 : vector<16x64xf32>
    %427 = vector.broadcast %408 : vector<1x64xf32> to vector<16x64xf32>
    %428 = arith.mulf %426, %427 : vector<16x64xf32>
    %429 = vector.broadcast %410 : vector<1x64xf32> to vector<16x64xf32>
    %430 = arith.addf %428, %429 : vector<16x64xf32>
    %431 = arith.truncf %430 : vector<16x64xf32> to vector<16x64xbf16>
    %c1_150 = arith.constant 1 : index
    %c0_151 = arith.constant 0 : index
    %c0_152 = arith.constant 0 : index
    %432 = vector.load %arg8[%c1_150, %c0_151, %c0_152] : memref<2x64x128xbf16, #tpu.memory_space<vmem>>, vector<1x64x128xbf16>
    %433 = vector.shape_cast %432 : vector<1x64x128xbf16> to vector<64x128xbf16>
    %cst_153 = arith.constant dense<0.000000e+00> : vector<16x128xf32>
    %434 = tpu.matmul %431, %433, %cst_153 {dimension_numbers = #tpu.dot_dimension_numbers<[1], [0], [0], [1], [0, 0, 1, 1], [], []>} : vector<16x64xbf16>, vector<64x128xbf16>, vector<16x128xf32> -> vector<16x128xf32>
    %c1_154 = arith.constant 1 : index
    %c0_155 = arith.constant 0 : index
    %c0_156 = arith.constant 0 : index
    %435 = vector.load %arg9[%c1_154, %c0_155, %c0_156] : memref<2x1x128xf32, #tpu.memory_space<vmem>>, vector<1x1x128xf32>
    %436 = vector.shape_cast %435 : vector<1x1x128xf32> to vector<1x128xf32>
    %437 = vector.broadcast %436 : vector<1x128xf32> to vector<16x128xf32>
    %438 = arith.addf %434, %437 : vector<16x128xf32>
    %cst_157 = arith.constant 5.000000e-01 : f32
    %439 = vector.broadcast %cst_157 : f32 to vector<16x128xf32>
    %440 = arith.mulf %439, %438 : vector<16x128xf32>
    %cst_158 = arith.constant 4.471500e-02 : f32
    %441 = vector.broadcast %cst_158 : f32 to vector<16x128xf32>
    %442 = arith.mulf %441, %438 : vector<16x128xf32>
    %443 = arith.mulf %442, %438 : vector<16x128xf32>
    %444 = arith.mulf %443, %438 : vector<16x128xf32>
    %445 = arith.addf %438, %444 : vector<16x128xf32>
    %cst_159 = arith.constant 0.797884583 : f32
    %446 = vector.broadcast %cst_159 : f32 to vector<16x128xf32>
    %447 = arith.mulf %446, %445 : vector<16x128xf32>
    %448 = math.tanh %447 : vector<16x128xf32>
    %cst_160 = arith.constant 1.000000e+00 : f32
    %449 = vector.broadcast %cst_160 : f32 to vector<16x128xf32>
    %450 = arith.addf %449, %448 : vector<16x128xf32>
    %451 = arith.mulf %440, %450 : vector<16x128xf32>
    %452 = arith.truncf %451 : vector<16x128xf32> to vector<16x128xbf16>
    %c1_161 = arith.constant 1 : index
    %c0_162 = arith.constant 0 : index
    %c0_163 = arith.constant 0 : index
    %453 = vector.load %arg10[%c1_161, %c0_162, %c0_163] : memref<2x128x64xbf16, #tpu.memory_space<vmem>>, vector<1x128x64xbf16>
    %454 = vector.shape_cast %453 : vector<1x128x64xbf16> to vector<128x64xbf16>
    %cst_164 = arith.constant dense<0.000000e+00> : vector<16x64xf32>
    %455 = tpu.matmul %452, %454, %cst_164 {dimension_numbers = #tpu.dot_dimension_numbers<[1], [0], [0], [1], [0, 0, 1, 1], [], []>} : vector<16x128xbf16>, vector<128x64xbf16>, vector<16x64xf32> -> vector<16x64xf32>
    %c1_165 = arith.constant 1 : index
    %c0_166 = arith.constant 0 : index
    %c0_167 = arith.constant 0 : index
    %456 = vector.load %arg11[%c1_165, %c0_166, %c0_167] : memref<2x1x64xf32, #tpu.memory_space<vmem>>, vector<1x1x64xf32>
    %457 = vector.shape_cast %456 : vector<1x1x64xf32> to vector<1x64xf32>
    %458 = vector.broadcast %457 : vector<1x64xf32> to vector<16x64xf32>
    %459 = arith.addf %455, %458 : vector<16x64xf32>
    %460 = arith.addf %430, %459 : vector<16x64xf32>
    %c1_168 = arith.constant 1 : index
    %c0_169 = arith.constant 0 : index
    %c0_170 = arith.constant 0 : index
    %461 = vector.load %arg12[%c1_168, %c0_169, %c0_170] : memref<2x1x64xf32, #tpu.memory_space<vmem>>, vector<1x1x64xf32>
    %462 = vector.shape_cast %461 : vector<1x1x64xf32> to vector<1x64xf32>
    %c1_171 = arith.constant 1 : index
    %c0_172 = arith.constant 0 : index
    %c0_173 = arith.constant 0 : index
    %463 = vector.load %arg13[%c1_171, %c0_172, %c0_173] : memref<2x1x64xf32, #tpu.memory_space<vmem>>, vector<1x1x64xf32>
    %464 = vector.shape_cast %463 : vector<1x1x64xf32> to vector<1x64xf32>
    %cst_174 = arith.constant dense<0.000000e+00> : vector<16xf32>
    %465 = vector.multi_reduction <add>, %460, %cst_174 [1] : vector<16x64xf32> to vector<16xf32>
    %466 = vector.shape_cast %465 : vector<16xf32> to vector<16x1xf32>
    %cst_175 = arith.constant 6.400000e+01 : f32
    %467 = vector.broadcast %cst_175 : f32 to vector<16x1xf32>
    %468 = arith.divf %466, %467 : vector<16x1xf32>
    %469 = vector.broadcast %468 : vector<16x1xf32> to vector<16x64xf32>
    %470 = arith.subf %460, %469 : vector<16x64xf32>
    %471 = arith.mulf %470, %470 : vector<16x64xf32>
    %cst_176 = arith.constant dense<0.000000e+00> : vector<16xf32>
    %472 = vector.multi_reduction <add>, %471, %cst_176 [1] : vector<16x64xf32> to vector<16xf32>
    %473 = vector.shape_cast %472 : vector<16xf32> to vector<16x1xf32>
    %cst_177 = arith.constant 6.400000e+01 : f32
    %474 = vector.broadcast %cst_177 : f32 to vector<16x1xf32>
    %475 = arith.divf %473, %474 : vector<16x1xf32>
    %cst_178 = arith.constant 9.99999974E-6 : f32
    %476 = vector.broadcast %cst_178 : f32 to vector<16x1xf32>
    %477 = arith.addf %475, %476 : vector<16x1xf32>
    %478 = math.rsqrt %477 : vector<16x1xf32>
    %479 = vector.broadcast %478 : vector<16x1xf32> to vector<16x64xf32>
    %480 = arith.mulf %470, %479 : vector<16x64xf32>
    %481 = vector.broadcast %462 : vector<1x64xf32> to vector<16x64xf32>
    %482 = arith.mulf %480, %481 : vector<16x64xf32>
    %483 = vector.broadcast %464 : vector<1x64xf32> to vector<16x64xf32>
    %484 = arith.addf %482, %483 : vector<16x64xf32>
    %c0_179 = arith.constant 0 : index
    %c0_180 = arith.constant 0 : index
    %485 = vector.load %arg14[%c0_179, %c0_180] : memref<16x64xf32, #tpu.memory_space<vmem>>, vector<16x64xf32>
    tpu.vector_store %arg14[%c0_179, %c0_180], %484 {strides = array<i32>} : memref<16x64xf32, #tpu.memory_space<vmem>>, vector<16x64xf32>,
    return
  }
}

</mosaic_0001>

<llo_original>
// kernel: forward.1
$region0: #{forward.1}
  #allocation0 [shape = 'u32[]', space=smem, size = 0x4, offset = 0x4, fixed_abs, tag = 'smem constant byte address 0x4 - core index']
  #allocation1 [shape = 'u32[144,128]{1,0:T(1,128)}', space=vmem, size = 0x12000, scoped, tag = 'internal scratch']
  %s0 = inlined_call_operand.vmem [shape: f32[16,64], index: 0, kind: input, shape index: {}]
  %s1 = inlined_call_operand.vmem [shape: f32[2,8], index: 1, kind: input, shape index: {}]
  %s2 = inlined_call_operand.vmem [shape: bf16[2,64,192], index: 2, kind: input, shape index: {}]
  %s3 = inlined_call_operand.vmem [shape: f32[2,1,192], index: 3, kind: input, shape index: {}]
  %s4 = inlined_call_operand.vmem [shape: bf16[2,64,64], index: 4, kind: input, shape index: {}]
  %s5 = inlined_call_operand.vmem [shape: f32[2,1,64], index: 5, kind: input, shape index: {}]
  %s6 = inlined_call_operand.vmem [shape: f32[2,1,64], index: 6, kind: input, shape index: {}]
  %s7 = inlined_call_operand.vmem [shape: f32[2,1,64], index: 7, kind: input, shape index: {}]
  %s8 = inlined_call_operand.vmem [shape: bf16[2,64,128], index: 8, kind: input, shape index: {}]
  %s9 = inlined_call_operand.vmem [shape: f32[2,1,128], index: 9, kind: input, shape index: {}]
  %s10 = inlined_call_operand.vmem [shape: bf16[2,128,64], index: 10, kind: input, shape index: {}]
  %s11 = inlined_call_operand.vmem [shape: f32[2,1,64], index: 11, kind: input, shape index: {}]
  %s12 = inlined_call_operand.vmem [shape: f32[2,1,64], index: 12, kind: input, shape index: {}]
  %s13 = inlined_call_operand.vmem [shape: f32[2,1,64], index: 13, kind: input, shape index: {}]
  %s14 = inlined_call_operand.vmem [shape: f32[16,64], index: 14, kind: output, shape index: {}]
  %s15 = sld [smem:[#allocation0]]
  $region66: #{forward.1} parent=0
    _
  %s17 = ssub.s32 1, %s15
  %s18 = scalar_select 0, %s17, %s15
  // Predicated region
  $region2: #{forward.1} parent=0 // pred_check
    _
  $region3: #{forward.1} parent=0 // pred_check_branch
    %20 = sbr.rel (0) target = $region5
  $region4: #{forward.1} parent=0 // pred_region
    _
  $region5: #{forward.1} parent=0 // pred_fallthru
    _
  // Predicated region
  $region6: #{forward.1} parent=0 // pred_check
    _
  $region7: #{forward.1} parent=0 // pred_check_branch
    %22 = sbr.rel (0) target = $region9
  $region8: #{forward.1} parent=0 // pred_region
    _
  $region9: #{forward.1} parent=0 // pred_fallthru
    _
  // Predicated region
  $region10: #{forward.1} parent=0 // pred_check
    _
  $region11: #{forward.1} parent=0 // pred_check_branch
    %24 = sbr.rel (0) target = $region13
  $region12: #{forward.1} parent=0 // pred_region
    _
  $region13: #{forward.1} parent=0 // pred_fallthru
    _
  // Predicated region
  $region14: #{forward.1} parent=0 // pred_check
    _
  $region15: #{forward.1} parent=0 // pred_check_branch
    %26 = sbr.rel (0) target = $region17
  $region16: #{forward.1} parent=0 // pred_region
    _
  $region17: #{forward.1} parent=0 // pred_fallthru
    _
  // Predicated region
  $region18: #{forward.1} parent=0 // pred_check
    _
  $region19: #{forward.1} parent=0 // pred_check_branch
    %28 = sbr.rel (0) target = $region21
  $region20: #{forward.1} parent=0 // pred_region
    _
  $region21: #{forward.1} parent=0 // pred_fallthru
    _
  // Predicated region
  $region22: #{forward.1} parent=0 // pred_check
    _
  $region23: #{forward.1} parent=0 // pred_check_branch
    %30 = sbr.rel (0) target = $region25
  $region24: #{forward.1} parent=0 // pred_region
    _
  $region25: #{forward.1} parent=0 // pred_fallthru
    _
  // Predicated region
  $region26: #{forward.1} parent=0 // pred_check
    _
  $region27: #{forward.1} parent=0 // pred_check_branch
    %32 = sbr.rel (0) target = $region29
  $region28: #{forward.1} parent=0 // pred_region
    _
  $region29: #{forward.1} parent=0 // pred_fallthru
    _
  // Predicated region
  $region30: #{forward.1} parent=0 // pred_check
    _
  $region31: #{forward.1} parent=0 // pred_check_branch
    %34 = sbr.rel (0) target = $region33
  $region32: #{forward.1} parent=0 // pred_region
    _
  $region33: #{forward.1} parent=0 // pred_fallthru
    _
  // Predicated region
  $region34: #{forward.1} parent=0 // pred_check
    _
  $region35: #{forward.1} parent=0 // pred_check_branch
    %36 = sbr.rel (0) target = $region37
  $region36: #{forward.1} parent=0 // pred_region
    _
  $region37: #{forward.1} parent=0 // pred_fallthru
    _
  // Predicated region
  $region38: #{forward.1} parent=0 // pred_check
    _
  $region39: #{forward.1} parent=0 // pred_check_branch
    %38 = sbr.rel (0) target = $region41
  $region40: #{forward.1} parent=0 // pred_region
    _
  $region41: #{forward.1} parent=0 // pred_fallthru
    _
  // Predicated region
  $region42: #{forward.1} parent=0 // pred_check
    _
  $region43: #{forward.1} parent=0 // pred_check_branch
    %40 = sbr.rel (0) target = $region45
  $region44: #{forward.1} parent=0 // pred_region
    _
  $region45: #{forward.1} parent=0 // pred_fallthru
    _
  // Predicated region
  $region46: #{forward.1} parent=0 // pred_check
    _
  $region47: #{forward.1} parent=0 // pred_check_branch
    %42 = sbr.rel (0) target = $region49
  $region48: #{forward.1} parent=0 // pred_region
    _
  $region49: #{forward.1} parent=0 // pred_fallthru
    _
  // Predicated region
  $region50: #{forward.1} parent=0 // pred_check
    _
  $region51: #{forward.1} parent=0 // pred_check_branch
    %44 = sbr.rel (0) target = $region53
  $region52: #{forward.1} parent=0 // pred_region
    _
  $region53: #{forward.1} parent=0 // pred_fallthru
    _
  // Predicated region
  $region54: #{forward.1} parent=0 // pred_check
    _
  $region55: #{forward.1} parent=0 // pred_check_branch
    %46 = sbr.rel (0) target = $region57
  $region56: #{forward.1} parent=0 // pred_region
    _
  $region57: #{forward.1} parent=0 // pred_fallthru
    _
  %v48 = vld [vmem:[%s0] sm:$0xff]
  %v49 = vld [vmem:[%s0 + $0x8] sm:$0xff]
  %v50 = vpack.c.bf16 %v49, %v48
  %v51 = vld [vmem:[%s2] sm:$0xff]
  %v52 = vld [vmem:[%s2 + $0x8] sm:$0xff]
  %v53 = vld [vmem:[%s2 + $0x10] sm:$0xff]
  %v54 = vld [vmem:[%s2 + $0x18] sm:$0xff]
  %v55 = vld [vmem:[%s2 + $0x20] sm:$0xff]
  %v56 = vld [vmem:[%s2 + $0x28] sm:$0xff]
  %v57 = vld [vmem:[%s2 + $0x30] sm:$0xff]
  %v58 = vld [vmem:[%s2 + $0x38] sm:$0xff]
  %v59 = vld [vmem:[%s3] sm:$0x3]
  %v61 = vlaneseq
  %v62 = vshrl.u32 %v61, 7
  %v63 = vsub.s32 0, %v62
  %v64 = vrot.slane %v59, %v63
  %v65 = vlaneseq
  %v66 = vshrl.u32 %v65, 7
  %v67 = vsub.s32 1, %v66
  %v68 = vrot.slane %v59, %v67
  %v79 = vunpack.c.l.b16 %v51
  %v80 = vunpack.c.h.b16 %v51
  %v81 = vunpack.c.l.b16 %v52
  %v82 = vunpack.c.h.b16 %v52
  %v83 = vunpack.c.l.b16 %v53
  %v84 = vunpack.c.h.b16 %v53
  %v85 = vunpack.c.l.b16 %v54
  %v86 = vunpack.c.h.b16 %v54
  %v87 = vunpack.c.l.b16 %v55
  %v88 = vunpack.c.h.b16 %v55
  %v89 = vunpack.c.l.b16 %v56
  %v90 = vunpack.c.h.b16 %v56
  %v91 = vunpack.c.l.b16 %v57
  %v92 = vunpack.c.h.b16 %v57
  %v93 = vunpack.c.l.b16 %v58
  %v94 = vunpack.c.h.b16 %v58
  %v95 = vpack.c.b16 %v81, %v79
  %v96 = vpack.c.b16 %v82, %v80
  %v97 = vpack.c.b16 %v85, %v83
  %v98 = vpack.c.b16 %v86, %v84
  %v99 = vpack.c.b16 %v89, %v87
  %v100 = vpack.c.b16 %v90, %v88
  %v101 = vpack.c.b16 %v93, %v91
  %v102 = vpack.c.b16 %v94, %v92
  %vm111 = vcmask 523264
  %v113 = vsel %vm111, %v50, 0
  %115 = vmatprep.subr.bf16.mxu0 %v96
  %116 = vmatpush1.bf16.msra.mxu0 %v95
  %117 = vmatprep.subr.bf16.mxu0 %v98
  %118 = vmatpush1.bf16.msra.mxu0 %v97
  %119 = vmatprep.subr.bf16.mxu0 %v100
  %120 = vmatpush1.bf16.msra.mxu0 %v99
  %121 = vmatprep.subr.bf16.mxu0 %v102
  %122 = vmatpush1.bf16.msra.mxu0 %v101
  %123 = vmatprep.subr.bf16.mxu0 0
  %124 = vmatpush1.bf16.msra.mxu0 0
  %125 = vmatprep.subr.bf16.mxu0 0
  %126 = vmatpush1.bf16.msra.mxu0 0
  %127 = vmatprep.subr.bf16.mxu0 0
  %128 = vmatpush1.bf16.msra.mxu0 0
  %129 = vmatprep.subr.bf16.mxu0 0
  %130 = vmatpush1.bf16.msra.mxu0 0
  %131 = vmatprep.subr.bf16.mxu0 0
  %132 = vmatpush1.bf16.msra.mxu0 0
  %133 = vmatprep.subr.bf16.mxu0 0
  %134 = vmatpush1.bf16.msra.mxu0 0
  %135 = vmatprep.subr.bf16.mxu0 0
  %136 = vmatpush1.bf16.msra.mxu0 0
  %137 = vmatprep.subr.bf16.mxu0 0
  %138 = vmatpush1.bf16.msra.mxu0 0
  %139 = vmatprep.subr.bf16.mxu0 0
  %140 = vmatpush1.bf16.msra.mxu0 0
  %141 = vmatprep.subr.bf16.mxu0 0
  %142 = vmatpush1.bf16.msra.mxu0 0
  %143 = vmatprep.subr.bf16.mxu0 0
  %144 = vmatpush1.bf16.msra.mxu0 0
  %145 = vmatprep.subr.bf16.mxu0 0
  %146 = vmatpush1.bf16.msra.mxu0 0
  %147 = vmatprep.mubr.bf16.mxu0 0
  %148 = vmatmul.mubr.bf16.gmra.mrb[0].mxu0 %v113
  %v149 = vpop.f32.mrb[0].mxu0
  %v150 = vadd.f32 %v64, %v149
  %v151 = vpop.f32.mrb[0].mxu0
  %v152 = vadd.f32 %v68, %v151
  %v153 = vpop.f32.mrb[0].mxu0
  %v154 = vadd.f32 %v64, %v153
  %v155 = vpop.f32.mrb[0].mxu0
  %v156 = vadd.f32 %v68, %v155
  %157 = vdwg.mxu0
  %v158 = vld [vmem:[%s1] sm:$0x1]
  %v159 = vlaneseq
  %v160 = vshrl.u32 %v159, 7
  %v161 = vsub.s32 0, %v160
  %v162 = vrot.slane %v158, %v161
  %164 = vrot.lane.b32.xlu0 %v150, 64
  %v165 = vpop.permute.xlu0 %164
  %vm166 = vcmask 130048
  %v167 = vsel %vm166, %v150, 0
  %v169 = vsel %vm166, %v165, 0
  %171 = vmatprep.subr.mxu0 0.0
  %172 = vmatpush1.xpose.msra.mxu0 %v169
  %173 = vmatprep.subr.mxu0 0.0
  %174 = vmatpush1.xpose.msra.mxu0 0.0
  %175 = vmatprep.subr.mxu0 0.0
  %176 = vmatpush1.xpose.msra.mxu0 0.0
  %177 = vmatprep.subr.mxu0 0.0
  %178 = vmatpush1.xpose.msra.mxu0 0.0
  %179 = vmatprep.subr.mxu0 0.0
  %180 = vmatpush1.xpose.msra.mxu0 0.0
  %181 = vmatprep.subr.mxu0 0.0
  %182 = vmatpush1.xpose.msra.mxu0 0.0
  %183 = vmatprep.subr.mxu0 0.0
  %184 = vmatpush1.xpose.msra.mxu0 0.0
  %185 = vmatprep.subr.mxu0 0.0
  %186 = vmatpush1.xpose.msra.mxu0 0.0
  %187 = vmatprep.subr.mxu0 0.0
  %188 = vmatpush1.xpose.msra.mxu0 0.0
  %189 = vmatprep.subr.mxu0 0.0
  %190 = vmatpush1.xpose.msra.mxu0 0.0
  %191 = vmatprep.subr.mxu0 0.0
  %192 = vmatpush1.xpose.msra.mxu0 0.0
  %193 = vmatprep.subr.mxu0 0.0
  %194 = vmatpush1.xpose.msra.mxu0 0.0
  %195 = vmatprep.subr.mxu0 0.0
  %196 = vmatpush1.xpose.msra.mxu0 0.0
  %197 = vmatprep.subr.mxu0 0.0
  %198 = vmatpush1.xpose.msra.mxu0 0.0
  %199 = vmatprep.subr.mxu0 0.0
  %200 = vmatpush1.xpose.msra.mxu0 0.0
  %201 = vmatprep.subr.mxu0 0.0
  %202 = vmatpush1.xpose.msra.mxu0 0.0
  %203 = vmatprep.subr.mxu0 0.0
  %204 = vmatpush1.xpose.msra.mxu0 0.0
  %205 = vmatprep.subr.mxu0 0.0
  %206 = vmatpush1.xpose.msra.mxu0 0.0
  %207 = vmatprep.subr.mxu0 0.0
  %208 = vmatpush1.xpose.msra.mxu0 0.0
  %209 = vmatprep.subr.mxu0 0.0
  %210 = vmatpush1.xpose.msra.mxu0 0.0
  %211 = vmatprep.subr.mxu0 0.0
  %212 = vmatpush1.xpose.msra.mxu0 0.0
  %213 = vmatprep.subr.mxu0 0.0
  %214 = vmatpush1.xpose.msra.mxu0 0.0
  %215 = vmatprep.subr.mxu0 0.0
  %216 = vmatpush1.xpose.msra.mxu0 0.0
  %217 = vmatprep.subr.mxu0 0.0
  %218 = vmatpush1.xpose.msra.mxu0 0.0
  %219 = vmatprep.subr.mxu0 0.0
  %220 = vmatpush1.xpose.msra.mxu0 0.0
  %221 = vmatprep.subr.mxu0 0.0
  %222 = vmatpush1.xpose.msra.mxu0 0.0
  %223 = vmatprep.subr.mxu0 0.0
  %224 = vmatpush1.xpose.msra.mxu0 0.0
  %225 = vmatprep.subr.mxu0 0.0
  %226 = vmatpush1.xpose.msra.mxu0 0.0
  %227 = vmatprep.subr.mxu0 0.0
  %228 = vmatpush1.xpose.msra.mxu0 0.0
  %229 = vmatprep.subr.mxu0 0.0
  %230 = vmatpush1.xpose.msra.mxu0 0.0
  %231 = vmatprep.subr.mxu0 0.0
  %232 = vmatpush1.xpose.msra.mxu0 0.0
  %233 = vmatprep.subr.mxu0 0.0
  %234 = vmatpush1.xpose.msra.mxu0 0.0
  %235 = vmatprep.mubr.f32.mxu0 0.0
  %236 = vmatmul.mubr.f32.gmra.mrb[0].mxu0 %v167
  %v237 = vpop.f32.mrb[0].mxu0
  %v238 = vadd.f32 %v162, %v237
  %v239 = vpop.f32.mrb[0].mxu0
  %240 = vdwg.mxu0
  %vm241 = vcmask 64512
  %v242 = vsel %vm241, %v238, -inf
  %243 = vmax.xlane.f32.xlu0 %v242
  %v244 = vpop.xlane.xlu0 %243
  %v245 = vsub.f32 %v238, %v244
  %v246 = vmul.f32 %v245, 1.442695
  %v247 = vpow.pop %v246
  %v248 = vsel %vm241, %v247, 0.0
  %249 = vadd.xlane.f32.xlu0 %v248
  %v250 = vpop.xlane.xlu0 %249
  %v251 = vrcp.pop %v250
  %v252 = vmul.f32 %v247, %v251
  %v254 = vsel %vm241, %v252, 0
  %256 = vmatprep.subr.mxu0 0.0
  %257 = vmatpush1.msra.mxu0 %v152
  %258 = vmatprep.subr.mxu0 0.0
  %259 = vmatpush1.msra.mxu0 0.0
  %260 = vmatprep.subr.mxu0 0.0
  %261 = vmatpush1.msra.mxu0 0.0
  %262 = vmatprep.subr.mxu0 0.0
  %263 = vmatpush1.msra.mxu0 0.0
  %264 = vmatprep.subr.mxu0 0.0
  %265 = vmatpush1.msra.mxu0 0.0
  %266 = vmatprep.subr.mxu0 0.0
  %267 = vmatpush1.msra.mxu0 0.0
  %268 = vmatprep.subr.mxu0 0.0
  %269 = vmatpush1.msra.mxu0 0.0
  %270 = vmatprep.subr.mxu0 0.0
  %271 = vmatpush1.msra.mxu0 0.0
  %272 = vmatprep.subr.mxu0 0.0
  %273 = vmatpush1.msra.mxu0 0.0
  %274 = vmatprep.subr.mxu0 0.0
  %275 = vmatpush1.msra.mxu0 0.0
  %276 = vmatprep.subr.mxu0 0.0
  %277 = vmatpush1.msra.mxu0 0.0
  %278 = vmatprep.subr.mxu0 0.0
  %279 = vmatpush1.msra.mxu0 0.0
  %280 = vmatprep.subr.mxu0 0.0
  %281 = vmatpush1.msra.mxu0 0.0
  %282 = vmatprep.subr.mxu0 0.0
  %283 = vmatpush1.msra.mxu0 0.0
  %284 = vmatprep.subr.mxu0 0.0
  %285 = vmatpush1.msra.mxu0 0.0
  %286 = vmatprep.subr.mxu0 0.0
  %287 = vmatpush1.msra.mxu0 0.0
  %288 = vmatprep.subr.mxu0 0.0
  %289 = vmatpush1.msra.mxu0 0.0
  %290 = vmatprep.subr.mxu0 0.0
  %291 = vmatpush1.msra.mxu0 0.0
  %292 = vmatprep.subr.mxu0 0.0
  %293 = vmatpush1.msra.mxu0 0.0
  %294 = vmatprep.subr.mxu0 0.0
  %295 = vmatpush1.msra.mxu0 0.0
  %296 = vmatprep.subr.mxu0 0.0
  %297 = vmatpush1.msra.mxu0 0.0
  %298 = vmatprep.subr.mxu0 0.0
  %299 = vmatpush1.msra.mxu0 0.0
  %300 = vmatprep.subr.mxu0 0.0
  %301 = vmatpush1.msra.mxu0 0.0
  %302 = vmatprep.subr.mxu0 0.0
  %303 = vmatpush1.msra.mxu0 0.0
  %304 = vmatprep.subr.mxu0 0.0
  %305 = vmatpush1.msra.mxu0 0.0
  %306 = vmatprep.subr.mxu0 0.0
  %307 = vmatpush1.msra.mxu0 0.0
  %308 = vmatprep.subr.mxu0 0.0
  %309 = vmatpush1.msra.mxu0 0.0
  %310 = vmatprep.subr.mxu0 0.0
  %311 = vmatpush1.msra.mxu0 0.0
  %312 = vmatprep.subr.mxu0 0.0
  %313 = vmatpush1.msra.mxu0 0.0
  %314 = vmatprep.subr.mxu0 0.0
  %315 = vmatpush1.msra.mxu0 0.0
  %316 = vmatprep.subr.mxu0 0.0
  %317 = vmatpush1.msra.mxu0 0.0
  %318 = vmatprep.subr.mxu0 0.0
  %319 = vmatpush1.msra.mxu0 0.0
  %320 = vmatprep.mubr.f32.mxu0 0.0
  %321 = vmatmul.mubr.f32.gmra.mrb[0].mxu0 %v254
  %v322 = vpop.f32.mrb[0].mxu0
  %v323 = vadd.f32 0.0, %v322
  %v324 = vpop.f32.mrb[0].mxu0
  %325 = vdwg.mxu0
  %326 = vrot.lane.b32.xlu0 %v150, 112
  %v327 = vpop.permute.xlu0 %326
  %328 = vrot.lane.b32.xlu0 %v150, 48
  %v329 = vpop.permute.xlu0 %328
  %v330 = vsel %vm166, %v327, 0
  %v332 = vsel %vm166, %v329, 0
  %334 = vmatprep.subr.mxu0 0.0
  %335 = vmatpush1.xpose.msra.mxu0 %v332
  %336 = vmatprep.subr.mxu0 0.0
  %337 = vmatpush1.xpose.msra.mxu0 0.0
  %338 = vmatprep.subr.mxu0 0.0
  %339 = vmatpush1.xpose.msra.mxu0 0.0
  %340 = vmatprep.subr.mxu0 0.0
  %341 = vmatpush1.xpose.msra.mxu0 0.0
  %342 = vmatprep.subr.mxu0 0.0
  %343 = vmatpush1.xpose.msra.mxu0 0.0
  %344 = vmatprep.subr.mxu0 0.0
  %345 = vmatpush1.xpose.msra.mxu0 0.0
  %346 = vmatprep.subr.mxu0 0.0
  %347 = vmatpush1.xpose.msra.mxu0 0.0
  %348 = vmatprep.subr.mxu0 0.0
  %349 = vmatpush1.xpose.msra.mxu0 0.0
  %350 = vmatprep.subr.mxu0 0.0
  %351 = vmatpush1.xpose.msra.mxu0 0.0
  %352 = vmatprep.subr.mxu0 0.0
  %353 = vmatpush1.xpose.msra.mxu0 0.0
  %354 = vmatprep.subr.mxu0 0.0
  %355 = vmatpush1.xpose.msra.mxu0 0.0
  %356 = vmatprep.subr.mxu0 0.0
  %357 = vmatpush1.xpose.msra.mxu0 0.0
  %358 = vmatprep.subr.mxu0 0.0
  %359 = vmatpush1.xpose.msra.mxu0 0.0
  %360 = vmatprep.subr.mxu0 0.0
  %361 = vmatpush1.xpose.msra.mxu0 0.0
  %362 = vmatprep.subr.mxu0 0.0
  %363 = vmatpush1.xpose.msra.mxu0 0.0
  %364 = vmatprep.subr.mxu0 0.0
  %365 = vmatpush1.xpose.msra.mxu0 0.0
  %366 = vmatprep.subr.mxu0 0.0
  %367 = vmatpush1.xpose.msra.mxu0 0.0
  %368 = vmatprep.subr.mxu0 0.0
  %369 = vmatpush1.xpose.msra.mxu0 0.0
  %370 = vmatprep.subr.mxu0 0.0
  %371 = vmatpush1.xpose.msra.mxu0 0.0
  %372 = vmatprep.subr.mxu0 0.0
  %373 = vmatpush1.xpose.msra.mxu0 0.0
  %374 = vmatprep.subr.mxu0 0.0
  %375 = vmatpush1.xpose.msra.mxu0 0.0
  %376 = vmatprep.subr.mxu0 0.0
  %377 = vmatpush1.xpose.msra.mxu0 0.0
  %378 = vmatprep.subr.mxu0 0.0
  %379 = vmatpush1.xpose.msra.mxu0 0.0
  %380 = vmatprep.subr.mxu0 0.0
  %381 = vmatpush1.xpose.msra.mxu0 0.0
  %382 = vmatprep.subr.mxu0 0.0
  %383 = vmatpush1.xpose.msra.mxu0 0.0
  %384 = vmatprep.subr.mxu0 0.0
  %385 = vmatpush1.xpose.msra.mxu0 0.0
  %386 = vmatprep.subr.mxu0 0.0
  %387 = vmatpush1.xpose.msra.mxu0 0.0
  %388 = vmatprep.subr.mxu0 0.0
  %389 = vmatpush1.xpose.msra.mxu0 0.0
  %390 = vmatprep.subr.mxu0 0.0
  %391 = vmatpush1.xpose.msra.mxu0 0.0
  %392 = vmatprep.subr.mxu0 0.0
  %393 = vmatpush1.xpose.msra.mxu0 0.0
  %394 = vmatprep.subr.mxu0 0.0
  %395 = vmatpush1.xpose.msra.mxu0 0.0
  %396 = vmatprep.subr.mxu0 0.0
  %397 = vmatpush1.xpose.msra.mxu0 0.0
  %398 = vmatprep.mubr.f32.mxu0 0.0
  %399 = vmatmul.mubr.f32.gmra.mrb[0].mxu0 %v330
  %v400 = vpop.f32.mrb[0].mxu0
  %v401 = vadd.f32 %v162, %v400
  %v402 = vpop.f32.mrb[0].mxu0
  %403 = vdwg.mxu0
  %v404 = vsel %vm241, %v401, -inf
  %405 = vmax.xlane.f32.xlu0 %v404
  %v406 = vpop.xlane.xlu0 %405
  %v407 = vsub.f32 %v401, %v406
  %v408 = vmul.f32 %v407, 1.442695
  %v409 = vpow.pop %v408
  %v410 = vsel %vm241, %v409, 0.0
  %411 = vadd.xlane.f32.xlu0 %v410
  %v412 = vpop.xlane.xlu0 %411
  %v413 = vrcp.pop %v412
  %v414 = vmul.f32 %v409, %v413
  %416 = vrot.lane.b32.xlu0 %v152, 112
  %v417 = vpop.permute.xlu0 %416
  %v420 = vsel %vm241, %v414, 0
  %422 = vmatprep.subr.mxu0 0.0
  %423 = vmatpush1.msra.mxu0 %v417
  %424 = vmatprep.subr.mxu0 0.0
  %425 = vmatpush1.msra.mxu0 0.0
  %426 = vmatprep.subr.mxu0 0.0
  %427 = vmatpush1.msra.mxu0 0.0
  %428 = vmatprep.subr.mxu0 0.0
  %429 = vmatpush1.msra.mxu0 0.0
  %430 = vmatprep.subr.mxu0 0.0
  %431 = vmatpush1.msra.mxu0 0.0
  %432 = vmatprep.subr.mxu0 0.0
  %433 = vmatpush1.msra.mxu0 0.0
  %434 = vmatprep.subr.mxu0 0.0
  %435 = vmatpush1.msra.mxu0 0.0
  %436 = vmatprep.subr.mxu0 0.0
  %437 = vmatpush1.msra.mxu0 0.0
  %438 = vmatprep.subr.mxu0 0.0
  %439 = vmatpush1.msra.mxu0 0.0
  %440 = vmatprep.subr.mxu0 0.0
  %441 = vmatpush1.msra.mxu0 0.0
  %442 = vmatprep.subr.mxu0 0.0
  %443 = vmatpush1.msra.mxu0 0.0
  %444 = vmatprep.subr.mxu0 0.0
  %445 = vmatpush1.msra.mxu0 0.0
  %446 = vmatprep.subr.mxu0 0.0
  %447 = vmatpush1.msra.mxu0 0.0
  %448 = vmatprep.subr.mxu0 0.0
  %449 = vmatpush1.msra.mxu0 0.0
  %450 = vmatprep.subr.mxu0 0.0
  %451 = vmatpush1.msra.mxu0 0.0
  %452 = vmatprep.subr.mxu0 0.0
  %453 = vmatpush1.msra.mxu0 0.0
  %454 = vmatprep.subr.mxu0 0.0
  %455 = vmatpush1.msra.mxu0 0.0
  %456 = vmatprep.subr.mxu0 0.0
  %457 = vmatpush1.msra.mxu0 0.0
  %458 = vmatprep.subr.mxu0 0.0
  %459 = vmatpush1.msra.mxu0 0.0
  %460 = vmatprep.subr.mxu0 0.0
  %461 = vmatpush1.msra.mxu0 0.0
  %462 = vmatprep.subr.mxu0 0.0
  %463 = vmatpush1.msra.mxu0 0.0
  %464 = vmatprep.subr.mxu0 0.0
  %465 = vmatpush1.msra.mxu0 0.0
  %466 = vmatprep.subr.mxu0 0.0
  %467 = vmatpush1.msra.mxu0 0.0
  %468 = vmatprep.subr.mxu0 0.0
  %469 = vmatpush1.msra.mxu0 0.0
  %470 = vmatprep.subr.mxu0 0.0
  %471 = vmatpush1.msra.mxu0 0.0
  %472 = vmatprep.subr.mxu0 0.0
  %473 = vmatpush1.msra.mxu0 0.0
  %474 = vmatprep.subr.mxu0 0.0
  %475 = vmatpush1.msra.mxu0 0.0
  %476 = vmatprep.subr.mxu0 0.0
  %477 = vmatpush1.msra.mxu0 0.0
  %478 = vmatprep.subr.mxu0 0.0
  %479 = vmatpush1.msra.mxu0 0.0
  %480 = vmatprep.subr.mxu0 0.0
  %481 = vmatpush1.msra.mxu0 0.0
  %482 = vmatprep.subr.mxu0 0.0
  %483 = vmatpush1.msra.mxu0 0.0
  %484 = vmatprep.subr.mxu0 0.0
  %485 = vmatpush1.msra.mxu0 0.0
  %486 = vmatprep.mubr.f32.mxu0 0.0
  %487 = vmatmul.mubr.f32.gmra.mrb[0].mxu0 %v420
  %v488 = vpop.f32.mrb[0].mxu0
  %v489 = vadd.f32 0.0, %v488
  %v490 = vpop.f32.mrb[0].mxu0
  %491 = vdwg.mxu0
  %492 = vrot.lane.b32.xlu0 %v150, 96
  %v493 = vpop.permute.xlu0 %492
  %494 = vrot.lane.b32.xlu0 %v150, 32
  %v495 = vpop.permute.xlu0 %494
  %v496 = vsel %vm166, %v493, 0
  %v498 = vsel %vm166, %v495, 0
  %500 = vmatprep.subr.mxu0 0.0
  %501 = vmatpush1.xpose.msra.mxu0 %v498
  %502 = vmatprep.subr.mxu0 0.0
  %503 = vmatpush1.xpose.msra.mxu0 0.0
  %504 = vmatprep.subr.mxu0 0.0
  %505 = vmatpush1.xpose.msra.mxu0 0.0
  %506 = vmatprep.subr.mxu0 0.0
  %507 = vmatpush1.xpose.msra.mxu0 0.0
  %508 = vmatprep.subr.mxu0 0.0
  %509 = vmatpush1.xpose.msra.mxu0 0.0
  %510 = vmatprep.subr.mxu0 0.0
  %511 = vmatpush1.xpose.msra.mxu0 0.0
  %512 = vmatprep.subr.mxu0 0.0
  %513 = vmatpush1.xpose.msra.mxu0 0.0
  %514 = vmatprep.subr.mxu0 0.0
  %515 = vmatpush1.xpose.msra.mxu0 0.0
  %516 = vmatprep.subr.mxu0 0.0
  %517 = vmatpush1.xpose.msra.mxu0 0.0
  %518 = vmatprep.subr.mxu0 0.0
  %519 = vmatpush1.xpose.msra.mxu0 0.0
  %520 = vmatprep.subr.mxu0 0.0
  %521 = vmatpush1.xpose.msra.mxu0 0.0
  %522 = vmatprep.subr.mxu0 0.0
  %523 = vmatpush1.xpose.msra.mxu0 0.0
  %524 = vmatprep.subr.mxu0 0.0
  %525 = vmatpush1.xpose.msra.mxu0 0.0
  %526 = vmatprep.subr.mxu0 0.0
  %527 = vmatpush1.xpose.msra.mxu0 0.0
  %528 = vmatprep.subr.mxu0 0.0
  %529 = vmatpush1.xpose.msra.mxu0 0.0
  %530 = vmatprep.subr.mxu0 0.0
  %531 = vmatpush1.xpose.msra.mxu0 0.0
  %532 = vmatprep.subr.mxu0 0.0
  %533 = vmatpush1.xpose.msra.mxu0 0.0
  %534 = vmatprep.subr.mxu0 0.0
  %535 = vmatpush1.xpose.msra.mxu0 0.0
  %536 = vmatprep.subr.mxu0 0.0
  %537 = vmatpush1.xpose.msra.mxu0 0.0
  %538 = vmatprep.subr.mxu0 0.0
  %539 = vmatpush1.xpose.msra.mxu0 0.0
  %540 = vmatprep.subr.mxu0 0.0
  %541 = vmatpush1.xpose.msra.mxu0 0.0
  %542 = vmatprep.subr.mxu0 0.0
  %543 = vmatpush1.xpose.msra.mxu0 0.0
  %544 = vmatprep.subr.mxu0 0.0
  %545 = vmatpush1.xpose.msra.mxu0 0.0
  %546 = vmatprep.subr.mxu0 0.0
  %547 = vmatpush1.xpose.msra.mxu0 0.0
  %548 = vmatprep.subr.mxu0 0.0
  %549 = vmatpush1.xpose.msra.mxu0 0.0
  %550 = vmatprep.subr.mxu0 0.0
  %551 = vmatpush1.xpose.msra.mxu0 0.0
  %552 = vmatprep.subr.mxu0 0.0
  %553 = vmatpush1.xpose.msra.mxu0 0.0
  %554 = vmatprep.subr.mxu0 0.0
  %555 = vmatpush1.xpose.msra.mxu0 0.0
  %556 = vmatprep.subr.mxu0 0.0
  %557 = vmatpush1.xpose.msra.mxu0 0.0
  %558 = vmatprep.subr.mxu0 0.0
  %559 = vmatpush1.xpose.msra.mxu0 0.0
  %560 = vmatprep.subr.mxu0 0.0
  %561 = vmatpush1.xpose.msra.mxu0 0.0
  %562 = vmatprep.subr.mxu0 0.0
  %563 = vmatpush1.xpose.msra.mxu0 0.0
  %564 = vmatprep.mubr.f32.mxu0 0.0
  %565 = vmatmul.mubr.f32.gmra.mrb[0].mxu0 %v496
  %v566 = vpop.f32.mrb[0].mxu0
  %v567 = vadd.f32 %v162, %v566
  %v568 = vpop.f32.mrb[0].mxu0
  %569 = vdwg.mxu0
  %v570 = vsel %vm241, %v567, -inf
  %571 = vmax.xlane.f32.xlu0 %v570
  %v572 = vpop.xlane.xlu0 %571
  %v573 = vsub.f32 %v567, %v572
  %v574 = vmul.f32 %v573, 1.442695
  %v575 = vpow.pop %v574
  %v576 = vsel %vm241, %v575, 0.0
  %577 = vadd.xlane.f32.xlu0 %v576
  %v578 = vpop.xlane.xlu0 %577
  %v579 = vrcp.pop %v578
  %v580 = vmul.f32 %v575, %v579
  %581 = vrot.lane.b32.xlu0 %v152, 96
  %v582 = vpop.permute.xlu0 %581
  %v585 = vsel %vm241, %v580, 0
  %587 = vmatprep.subr.mxu0 0.0
  %588 = vmatpush1.msra.mxu0 %v582
  %589 = vmatprep.subr.mxu0 0.0
  %590 = vmatpush1.msra.mxu0 0.0
  %591 = vmatprep.subr.mxu0 0.0
  %592 = vmatpush1.msra.mxu0 0.0
  %593 = vmatprep.subr.mxu0 0.0
  %594 = vmatpush1.msra.mxu0 0.0
  %595 = vmatprep.subr.mxu0 0.0
  %596 = vmatpush1.msra.mxu0 0.0
  %597 = vmatprep.subr.mxu0 0.0
  %598 = vmatpush1.msra.mxu0 0.0
  %599 = vmatprep.subr.mxu0 0.0
  %600 = vmatpush1.msra.mxu0 0.0
  %601 = vmatprep.subr.mxu0 0.0
  %602 = vmatpush1.msra.mxu0 0.0
  %603 = vmatprep.subr.mxu0 0.0
  %604 = vmatpush1.msra.mxu0 0.0
  %605 = vmatprep.subr.mxu0 0.0
  %606 = vmatpush1.msra.mxu0 0.0
  %607 = vmatprep.subr.mxu0 0.0
  %608 = vmatpush1.msra.mxu0 0.0
  %609 = vmatprep.subr.mxu0 0.0
  %610 = vmatpush1.msra.mxu0 0.0
  %611 = vmatprep.subr.mxu0 0.0
  %612 = vmatpush1.msra.mxu0 0.0
  %613 = vmatprep.subr.mxu0 0.0
  %614 = vmatpush1.msra.mxu0 0.0
  %615 = vmatprep.subr.mxu0 0.0
  %616 = vmatpush1.msra.mxu0 0.0
  %617 = vmatprep.subr.mxu0 0.0
  %618 = vmatpush1.msra.mxu0 0.0
  %619 = vmatprep.subr.mxu0 0.0
  %620 = vmatpush1.msra.mxu0 0.0
  %621 = vmatprep.subr.mxu0 0.0
  %622 = vmatpush1.msra.mxu0 0.0
  %623 = vmatprep.subr.mxu0 0.0
  %624 = vmatpush1.msra.mxu0 0.0
  %625 = vmatprep.subr.mxu0 0.0
  %626 = vmatpush1.msra.mxu0 0.0
  %627 = vmatprep.subr.mxu0 0.0
  %628 = vmatpush1.msra.mxu0 0.0
  %629 = vmatprep.subr.mxu0 0.0
  %630 = vmatpush1.msra.mxu0 0.0
  %631 = vmatprep.subr.mxu0 0.0
  %632 = vmatpush1.msra.mxu0 0.0
  %633 = vmatprep.subr.mxu0 0.0
  %634 = vmatpush1.msra.mxu0 0.0
  %635 = vmatprep.subr.mxu0 0.0
  %636 = vmatpush1.msra.mxu0 0.0
  %637 = vmatprep.subr.mxu0 0.0
  %638 = vmatpush1.msra.mxu0 0.0
  %639 = vmatprep.subr.mxu0 0.0
  %640 = vmatpush1.msra.mxu0 0.0
  %641 = vmatprep.subr.mxu0 0.0
  %642 = vmatpush1.msra.mxu0 0.0
  %643 = vmatprep.subr.mxu0 0.0
  %644 = vmatpush1.msra.mxu0 0.0
  %645 = vmatprep.subr.mxu0 0.0
  %646 = vmatpush1.msra.mxu0 0.0
  %647 = vmatprep.subr.mxu0 0.0
  %648 = vmatpush1.msra.mxu0 0.0
  %649 = vmatprep.subr.mxu0 0.0
  %650 = vmatpush1.msra.mxu0 0.0
  %651 = vmatprep.mubr.f32.mxu0 0.0
  %652 = vmatmul.mubr.f32.gmra.mrb[0].mxu0 %v585
  %v653 = vpop.f32.mrb[0].mxu0
  %v654 = vadd.f32 0.0, %v653
  %v655 = vpop.f32.mrb[0].mxu0
  %656 = vdwg.mxu0
  %657 = vrot.lane.b32.xlu0 %v150, 80
  %v658 = vpop.permute.xlu0 %657
  %659 = vrot.lane.b32.xlu0 %v150, 16
  %v660 = vpop.permute.xlu0 %659
  %v661 = vsel %vm166, %v658, 0
  %v663 = vsel %vm166, %v660, 0
  %665 = vmatprep.subr.mxu0 0.0
  %666 = vmatpush1.xpose.msra.mxu0 %v663
  %667 = vmatprep.subr.mxu0 0.0
  %668 = vmatpush1.xpose.msra.mxu0 0.0
  %669 = vmatprep.subr.mxu0 0.0
  %670 = vmatpush1.xpose.msra.mxu0 0.0
  %671 = vmatprep.subr.mxu0 0.0
  %672 = vmatpush1.xpose.msra.mxu0 0.0
  %673 = vmatprep.subr.mxu0 0.0
  %674 = vmatpush1.xpose.msra.mxu0 0.0
  %675 = vmatprep.subr.mxu0 0.0
  %676 = vmatpush1.xpose.msra.mxu0 0.0
  %677 = vmatprep.subr.mxu0 0.0
  %678 = vmatpush1.xpose.msra.mxu0 0.0
  %679 = vmatprep.subr.mxu0 0.0
  %680 = vmatpush1.xpose.msra.mxu0 0.0
  %681 = vmatprep.subr.mxu0 0.0
  %682 = vmatpush1.xpose.msra.mxu0 0.0
  %683 = vmatprep.subr.mxu0 0.0
  %684 = vmatpush1.xpose.msra.mxu0 0.0
  %685 = vmatprep.subr.mxu0 0.0
  %686 = vmatpush1.xpose.msra.mxu0 0.0
  %687 = vmatprep.subr.mxu0 0.0
  %688 = vmatpush1.xpose.msra.mxu0 0.0
  %689 = vmatprep.subr.mxu0 0.0
  %690 = vmatpush1.xpose.msra.mxu0 0.0
  %691 = vmatprep.subr.mxu0 0.0
  %692 = vmatpush1.xpose.msra.mxu0 0.0
  %693 = vmatprep.subr.mxu0 0.0
  %694 = vmatpush1.xpose.msra.mxu0 0.0
  %695 = vmatprep.subr.mxu0 0.0
  %696 = vmatpush1.xpose.msra.mxu0 0.0
  %697 = vmatprep.subr.mxu0 0.0
  %698 = vmatpush1.xpose.msra.mxu0 0.0
  %699 = vmatprep.subr.mxu0 0.0
  %700 = vmatpush1.xpose.msra.mxu0 0.0
  %701 = vmatprep.subr.mxu0 0.0
  %702 = vmatpush1.xpose.msra.mxu0 0.0
  %703 = vmatprep.subr.mxu0 0.0
  %704 = vmatpush1.xpose.msra.mxu0 0.0
  %705 = vmatprep.subr.mxu0 0.0
  %706 = vmatpush1.xpose.msra.mxu0 0.0
  %707 = vmatprep.subr.mxu0 0.0
  %708 = vmatpush1.xpose.msra.mxu0 0.0
  %709 = vmatprep.subr.mxu0 0.0
  %710 = vmatpush1.xpose.msra.mxu0 0.0
  %711 = vmatprep.subr.mxu0 0.0
  %712 = vmatpush1.xpose.msra.mxu0 0.0
  %713 = vmatprep.subr.mxu0 0.0
  %714 = vmatpush1.xpose.msra.mxu0 0.0
  %715 = vmatprep.subr.mxu0 0.0
  %716 = vmatpush1.xpose.msra.mxu0 0.0
  %717 = vmatprep.subr.mxu0 0.0
  %718 = vmatpush1.xpose.msra.mxu0 0.0
  %719 = vmatprep.subr.mxu0 0.0
  %720 = vmatpush1.xpose.msra.mxu0 0.0
  %721 = vmatprep.subr.mxu0 0.0
  %722 = vmatpush1.xpose.msra.mxu0 0.0
  %723 = vmatprep.subr.mxu0 0.0
  %724 = vmatpush1.xpose.msra.mxu0 0.0
  %725 = vmatprep.subr.mxu0 0.0
  %726 = vmatpush1.xpose.msra.mxu0 0.0
  %727 = vmatprep.subr.mxu0 0.0
  %728 = vmatpush1.xpose.msra.mxu0 0.0
  %729 = vmatprep.mubr.f32.mxu0 0.0
  %730 = vmatmul.mubr.f32.gmra.mrb[0].mxu0 %v661
  %v731 = vpop.f32.mrb[0].mxu0
  %v732 = vadd.f32 %v162, %v731
  %v733 = vpop.f32.mrb[0].mxu0
  %734 = vdwg.mxu0
  %v735 = vsel %vm241, %v732, -inf
  %736 = vmax.xlane.f32.xlu0 %v735
  %v737 = vpop.xlane.xlu0 %736
  %v738 = vsub.f32 %v732, %v737
  %v739 = vmul.f32 %v738, 1.442695
  %v740 = vpow.pop %v739
  %v741 = vsel %vm241, %v740, 0.0
  %742 = vadd.xlane.f32.xlu0 %v741
  %v743 = vpop.xlane.xlu0 %742
  %v744 = vrcp.pop %v743
  %v745 = vmul.f32 %v740, %v744
  %746 = vrot.lane.b32.xlu0 %v152, 80
  %v747 = vpop.permute.xlu0 %746
  %v750 = vsel %vm241, %v745, 0
  %752 = vmatprep.subr.mxu0 0.0
  %753 = vmatpush1.msra.mxu0 %v747
  %754 = vmatprep.subr.mxu0 0.0
  %755 = vmatpush1.msra.mxu0 0.0
  %756 = vmatprep.subr.mxu0 0.0
  %757 = vmatpush1.msra.mxu0 0.0
  %758 = vmatprep.subr.mxu0 0.0
  %759 = vmatpush1.msra.mxu0 0.0
  %760 = vmatprep.subr.mxu0 0.0
  %761 = vmatpush1.msra.mxu0 0.0
  %762 = vmatprep.subr.mxu0 0.0
  %763 = vmatpush1.msra.mxu0 0.0
  %764 = vmatprep.subr.mxu0 0.0
  %765 = vmatpush1.msra.mxu0 0.0
  %766 = vmatprep.subr.mxu0 0.0
  %767 = vmatpush1.msra.mxu0 0.0
  %768 = vmatprep.subr.mxu0 0.0
  %769 = vmatpush1.msra.mxu0 0.0
  %770 = vmatprep.subr.mxu0 0.0
  %771 = vmatpush1.msra.mxu0 0.0
  %772 = vmatprep.subr.mxu0 0.0
  %773 = vmatpush1.msra.mxu0 0.0
  %774 = vmatprep.subr.mxu0 0.0
  %775 = vmatpush1.msra.mxu0 0.0
  %776 = vmatprep.subr.mxu0 0.0
  %777 = vmatpush1.msra.mxu0 0.0
  %778 = vmatprep.subr.mxu0 0.0
  %779 = vmatpush1.msra.mxu0 0.0
  %780 = vmatprep.subr.mxu0 0.0
  %781 = vmatpush1.msra.mxu0 0.0
  %782 = vmatprep.subr.mxu0 0.0
  %783 = vmatpush1.msra.mxu0 0.0
  %784 = vmatprep.subr.mxu0 0.0
  %785 = vmatpush1.msra.mxu0 0.0
  %786 = vmatprep.subr.mxu0 0.0
  %787 = vmatpush1.msra.mxu0 0.0
  %788 = vmatprep.subr.mxu0 0.0
  %789 = vmatpush1.msra.mxu0 0.0
  %790 = vmatprep.subr.mxu0 0.0
  %791 = vmatpush1.msra.mxu0 0.0
  %792 = vmatprep.subr.mxu0 0.0
  %793 = vmatpush1.msra.mxu0 0.0
  %794 = vmatprep.subr.mxu0 0.0
  %795 = vmatpush1.msra.mxu0 0.0
  %796 = vmatprep.subr.mxu0 0.0
  %797 = vmatpush1.msra.mxu0 0.0
  %798 = vmatprep.subr.mxu0 0.0
  %799 = vmatpush1.msra.mxu0 0.0
  %800 = vmatprep.subr.mxu0 0.0
  %801 = vmatpush1.msra.mxu0 0.0
  %802 = vmatprep.subr.mxu0 0.0
  %803 = vmatpush1.msra.mxu0 0.0
  %804 = vmatprep.subr.mxu0 0.0
  %805 = vmatpush1.msra.mxu0 0.0
  %806 = vmatprep.subr.mxu0 0.0
  %807 = vmatpush1.msra.mxu0 0.0
  %808 = vmatprep.subr.mxu0 0.0
  %809 = vmatpush1.msra.mxu0 0.0
  %810 = vmatprep.subr.mxu0 0.0
  %811 = vmatpush1.msra.mxu0 0.0
  %812 = vmatprep.subr.mxu0 0.0
  %813 = vmatpush1.msra.mxu0 0.0
  %814 = vmatprep.subr.mxu0 0.0
  %815 = vmatpush1.msra.mxu0 0.0
  %816 = vmatprep.mubr.f32.mxu0 0.0
  %817 = vmatmul.mubr.f32.gmra.mrb[0].mxu0 %v750
  %v818 = vpop.f32.mrb[0].mxu0
  %v819 = vadd.f32 0.0, %v818
  %v820 = vpop.f32.mrb[0].mxu0
  %821 = vdwg.mxu0
  %823 = vrot.lane.b32.xlu0 %v489, 16
  %v824 = vpop.permute.xlu0 %823
  %827 = vrot.lane.b32.xlu0 %v654, 32
  %v828 = vpop.permute.xlu0 %827
  %831 = vrot.lane.b32.xlu0 %v819, 48
  %v832 = vpop.permute.xlu0 %831
  %v834 = vsel %vm166, %v323, %v824
  %vm835 = vcmask 261120
  %v836 = vsel %vm835, %v834, %v828
  %vm837 = vcmask 392192
  %v838 = vsel %vm837, %v836, %v832
  %v839 = vld [vmem:[%s1 + $0x1] sm:$0x1]
  %v840 = vlaneseq
  %v841 = vshrl.u32 %v840, 7
  %v842 = vsub.s32 0, %v841
  %v843 = vrot.slane %v839, %v842
  %845 = vrot.lane.b32.xlu0 %v154, 64
  %v846 = vpop.permute.xlu0 %845
  %v847 = vsel %vm166, %v154, 0
  %v849 = vsel %vm166, %v846, 0
  %851 = vmatprep.subr.mxu0 0.0
  %852 = vmatpush1.xpose.msra.mxu0 %v849
  %853 = vmatprep.subr.mxu0 0.0
  %854 = vmatpush1.xpose.msra.mxu0 0.0
  %855 = vmatprep.subr.mxu0 0.0
  %856 = vmatpush1.xpose.msra.mxu0 0.0
  %857 = vmatprep.subr.mxu0 0.0
  %858 = vmatpush1.xpose.msra.mxu0 0.0
  %859 = vmatprep.subr.mxu0 0.0
  %860 = vmatpush1.xpose.msra.mxu0 0.0
  %861 = vmatprep.subr.mxu0 0.0
  %862 = vmatpush1.xpose.msra.mxu0 0.0
  %863 = vmatprep.subr.mxu0 0.0
  %864 = vmatpush1.xpose.msra.mxu0 0.0
  %865 = vmatprep.subr.mxu0 0.0
  %866 = vmatpush1.xpose.msra.mxu0 0.0
  %867 = vmatprep.subr.mxu0 0.0
  %868 = vmatpush1.xpose.msra.mxu0 0.0
  %869 = vmatprep.subr.mxu0 0.0
  %870 = vmatpush1.xpose.msra.mxu0 0.0
  %871 = vmatprep.subr.mxu0 0.0
  %872 = vmatpush1.xpose.msra.mxu0 0.0
  %873 = vmatprep.subr.mxu0 0.0
  %874 = vmatpush1.xpose.msra.mxu0 0.0
  %875 = vmatprep.subr.mxu0 0.0
  %876 = vmatpush1.xpose.msra.mxu0 0.0
  %877 = vmatprep.subr.mxu0 0.0
  %878 = vmatpush1.xpose.msra.mxu0 0.0
  %879 = vmatprep.subr.mxu0 0.0
  %880 = vmatpush1.xpose.msra.mxu0 0.0
  %881 = vmatprep.subr.mxu0 0.0
  %882 = vmatpush1.xpose.msra.mxu0 0.0
  %883 = vmatprep.subr.mxu0 0.0
  %884 = vmatpush1.xpose.msra.mxu0 0.0
  %885 = vmatprep.subr.mxu0 0.0
  %886 = vmatpush1.xpose.msra.mxu0 0.0
  %887 = vmatprep.subr.mxu0 0.0
  %888 = vmatpush1.xpose.msra.mxu0 0.0
  %889 = vmatprep.subr.mxu0 0.0
  %890 = vmatpush1.xpose.msra.mxu0 0.0
  %891 = vmatprep.subr.mxu0 0.0
  %892 = vmatpush1.xpose.msra.mxu0 0.0
  %893 = vmatprep.subr.mxu0 0.0
  %894 = vmatpush1.xpose.msra.mxu0 0.0
  %895 = vmatprep.subr.mxu0 0.0
  %896 = vmatpush1.xpose.msra.mxu0 0.0
  %897 = vmatprep.subr.mxu0 0.0
  %898 = vmatpush1.xpose.msra.mxu0 0.0
  %899 = vmatprep.subr.mxu0 0.0
  %900 = vmatpush1.xpose.msra.mxu0 0.0
  %901 = vmatprep.subr.mxu0 0.0
  %902 = vmatpush1.xpose.msra.mxu0 0.0
  %903 = vmatprep.subr.mxu0 0.0
  %904 = vmatpush1.xpose.msra.mxu0 0.0
  %905 = vmatprep.subr.mxu0 0.0
  %906 = vmatpush1.xpose.msra.mxu0 0.0
  %907 = vmatprep.subr.mxu0 0.0
  %908 = vmatpush1.xpose.msra.mxu0 0.0
  %909 = vmatprep.subr.mxu0 0.0
  %910 = vmatpush1.xpose.msra.mxu0 0.0
  %911 = vmatprep.subr.mxu0 0.0
  %912 = vmatpush1.xpose.msra.mxu0 0.0
  %913 = vmatprep.subr.mxu0 0.0
  %914 = vmatpush1.xpose.msra.mxu0 0.0
  %915 = vmatprep.mubr.f32.mxu0 0.0
  %916 = vmatmul.mubr.f32.gmra.mrb[0].mxu0 %v847
  %v917 = vpop.f32.mrb[0].mxu0
  %v918 = vadd.f32 %v843, %v917
  %v919 = vpop.f32.mrb[0].mxu0
  %920 = vdwg.mxu0
  %v921 = vsel %vm241, %v918, -inf
  %922 = vmax.xlane.f32.xlu0 %v921
  %v923 = vpop.xlane.xlu0 %922
  %v924 = vsub.f32 %v918, %v923
  %v925 = vmul.f32 %v924, 1.442695
  %v926 = vpow.pop %v925
  %v927 = vsel %vm241, %v926, 0.0
  %928 = vadd.xlane.f32.xlu0 %v927
  %v929 = vpop.xlane.xlu0 %928
  %v930 = vrcp.pop %v929
  %v931 = vmul.f32 %v926, %v930
  %v933 = vsel %vm241, %v931, 0
  %935 = vmatprep.subr.mxu0 0.0
  %936 = vmatpush1.msra.mxu0 %v156
  %937 = vmatprep.subr.mxu0 0.0
  %938 = vmatpush1.msra.mxu0 0.0
  %939 = vmatprep.subr.mxu0 0.0
  %940 = vmatpush1.msra.mxu0 0.0
  %941 = vmatprep.subr.mxu0 0.0
  %942 = vmatpush1.msra.mxu0 0.0
  %943 = vmatprep.subr.mxu0 0.0
  %944 = vmatpush1.msra.mxu0 0.0
  %945 = vmatprep.subr.mxu0 0.0
  %946 = vmatpush1.msra.mxu0 0.0
  %947 = vmatprep.subr.mxu0 0.0
  %948 = vmatpush1.msra.mxu0 0.0
  %949 = vmatprep.subr.mxu0 0.0
  %950 = vmatpush1.msra.mxu0 0.0
  %951 = vmatprep.subr.mxu0 0.0
  %952 = vmatpush1.msra.mxu0 0.0
  %953 = vmatprep.subr.mxu0 0.0
  %954 = vmatpush1.msra.mxu0 0.0
  %955 = vmatprep.subr.mxu0 0.0
  %956 = vmatpush1.msra.mxu0 0.0
  %957 = vmatprep.subr.mxu0 0.0
  %958 = vmatpush1.msra.mxu0 0.0
  %959 = vmatprep.subr.mxu0 0.0
  %960 = vmatpush1.msra.mxu0 0.0
  %961 = vmatprep.subr.mxu0 0.0
  %962 = vmatpush1.msra.mxu0 0.0
  %963 = vmatprep.subr.mxu0 0.0
  %964 = vmatpush1.msra.mxu0 0.0
  %965 = vmatprep.subr.mxu0 0.0
  %966 = vmatpush1.msra.mxu0 0.0
  %967 = vmatprep.subr.mxu0 0.0
  %968 = vmatpush1.msra.mxu0 0.0
  %969 = vmatprep.subr.mxu0 0.0
  %970 = vmatpush1.msra.mxu0 0.0
  %971 = vmatprep.subr.mxu0 0.0
  %972 = vmatpush1.msra.mxu0 0.0
  %973 = vmatprep.subr.mxu0 0.0
  %974 = vmatpush1.msra.mxu0 0.0
  %975 = vmatprep.subr.mxu0 0.0
  %976 = vmatpush1.msra.mxu0 0.0
  %977 = vmatprep.subr.mxu0 0.0
  %978 = vmatpush1.msra.mxu0 0.0
  %979 = vmatprep.subr.mxu0 0.0
  %980 = vmatpush1.msra.mxu0 0.0
  %981 = vmatprep.subr.mxu0 0.0
  %982 = vmatpush1.msra.mxu0 0.0
  %983 = vmatprep.subr.mxu0 0.0
  %984 = vmatpush1.msra.mxu0 0.0
  %985 = vmatprep.subr.mxu0 0.0
  %986 = vmatpush1.msra.mxu0 0.0
  %987 = vmatprep.subr.mxu0 0.0
  %988 = vmatpush1.msra.mxu0 0.0
  %989 = vmatprep.subr.mxu0 0.0
  %990 = vmatpush1.msra.mxu0 0.0
  %991 = vmatprep.subr.mxu0 0.0
  %992 = vmatpush1.msra.mxu0 0.0
  %993 = vmatprep.subr.mxu0 0.0
  %994 = vmatpush1.msra.mxu0 0.0
  %995 = vmatprep.subr.mxu0 0.0
  %996 = vmatpush1.msra.mxu0 0.0
  %997 = vmatprep.subr.mxu0 0.0
  %998 = vmatpush1.msra.mxu0 0.0
  %999 = vmatprep.mubr.f32.mxu0 0.0
  %1000 = vmatmul.mubr.f32.gmra.mrb[0].mxu0 %v933
  %v1001 = vpop.f32.mrb[0].mxu0
  %v1002 = vadd.f32 0.0, %v1001
  %v1003 = vpop.f32.mrb[0].mxu0
  %1004 = vdwg.mxu0
  %1005 = vrot.lane.b32.xlu0 %v154, 112
  %v1006 = vpop.permute.xlu0 %1005
  %1007 = vrot.lane.b32.xlu0 %v154, 48
  %v1008 = vpop.permute.xlu0 %1007
  %v1009 = vsel %vm166, %v1006, 0
  %v1011 = vsel %vm166, %v1008, 0
  %1013 = vmatprep.subr.mxu0 0.0
  %1014 = vmatpush1.xpose.msra.mxu0 %v1011
  %1015 = vmatprep.subr.mxu0 0.0
  %1016 = vmatpush1.xpose.msra.mxu0 0.0
  %1017 = vmatprep.subr.mxu0 0.0
  %1018 = vmatpush1.xpose.msra.mxu0 0.0
  %1019 = vmatprep.subr.mxu0 0.0
  %1020 = vmatpush1.xpose.msra.mxu0 0.0
  %1021 = vmatprep.subr.mxu0 0.0
  %1022 = vmatpush1.xpose.msra.mxu0 0.0
  %1023 = vmatprep.subr.mxu0 0.0
  %1024 = vmatpush1.xpose.msra.mxu0 0.0
  %1025 = vmatprep.subr.mxu0 0.0
  %1026 = vmatpush1.xpose.msra.mxu0 0.0
  %1027 = vmatprep.subr.mxu0 0.0
  %1028 = vmatpush1.xpose.msra.mxu0 0.0
  %1029 = vmatprep.subr.mxu0 0.0
  %1030 = vmatpush1.xpose.msra.mxu0 0.0
  %1031 = vmatprep.subr.mxu0 0.0
  %1032 = vmatpush1.xpose.msra.mxu0 0.0
  %1033 = vmatprep.subr.mxu0 0.0
  %1034 = vmatpush1.xpose.msra.mxu0 0.0
  %1035 = vmatprep.subr.mxu0 0.0
  %1036 = vmatpush1.xpose.msra.mxu0 0.0
  %1037 = vmatprep.subr.mxu0 0.0
  %1038 = vmatpush1.xpose.msra.mxu0 0.0
  %1039 = vmatprep.subr.mxu0 0.0
  %1040 = vmatpush1.xpose.msra.mxu0 0.0
  %1041 = vmatprep.subr.mxu0 0.0
  %1042 = vmatpush1.xpose.msra.mxu0 0.0
  %1043 = vmatprep.subr.mxu0 0.0
  %1044 = vmatpush1.xpose.msra.mxu0 0.0
  %1045 = vmatprep.subr.mxu0 0.0
  %1046 = vmatpush1.xpose.msra.mxu0 0.0
  %1047 = vmatprep.subr.mxu0 0.0
  %1048 = vmatpush1.xpose.msra.mxu0 0.0
  %1049 = vmatprep.subr.mxu0 0.0
  %1050 = vmatpush1.xpose.msra.mxu0 0.0
  %1051 = vmatprep.subr.mxu0 0.0
  %1052 = vmatpush1.xpose.msra.mxu0 0.0
  %1053 = vmatprep.subr.mxu0 0.0
  %1054 = vmatpush1.xpose.msra.mxu0 0.0
  %1055 = vmatprep.subr.mxu0 0.0
  %1056 = vmatpush1.xpose.msra.mxu0 0.0
  %1057 = vmatprep.subr.mxu0 0.0
  %1058 = vmatpush1.xpose.msra.mxu0 0.0
  %1059 = vmatprep.subr.mxu0 0.0
  %1060 = vmatpush1.xpose.msra.mxu0 0.0
  %1061 = vmatprep.subr.mxu0 0.0
  %1062 = vmatpush1.xpose.msra.mxu0 0.0
  %1063 = vmatprep.subr.mxu0 0.0
  %1064 = vmatpush1.xpose.msra.mxu0 0.0
  %1065 = vmatprep.subr.mxu0 0.0
  %1066 = vmatpush1.xpose.msra.mxu0 0.0
  %1067 = vmatprep.subr.mxu0 0.0
  %1068 = vmatpush1.xpose.msra.mxu0 0.0
  %1069 = vmatprep.subr.mxu0 0.0
  %1070 = vmatpush1.xpose.msra.mxu0 0.0
  %1071 = vmatprep.subr.mxu0 0.0
  %1072 = vmatpush1.xpose.msra.mxu0 0.0
  %1073 = vmatprep.subr.mxu0 0.0
  %1074 = vmatpush1.xpose.msra.mxu0 0.0
  %1075 = vmatprep.subr.mxu0 0.0
  %1076 = vmatpush1.xpose.msra.mxu0 0.0
  %1077 = vmatprep.mubr.f32.mxu0 0.0
  %1078 = vmatmul.mubr.f32.gmra.mrb[0].mxu0 %v1009
  %v1079 = vpop.f32.mrb[0].mxu0
  %v1080 = vadd.f32 %v843, %v1079
  %v1081 = vpop.f32.mrb[0].mxu0
  %1082 = vdwg.mxu0
  %v1083 = vsel %vm241, %v1080, -inf
  %1084 = vmax.xlane.f32.xlu0 %v1083
  %v1085 = vpop.xlane.xlu0 %1084
  %v1086 = vsub.f32 %v1080, %v1085
  %v1087 = vmul.f32 %v1086, 1.442695
  %v1088 = vpow.pop %v1087
  %v1089 = vsel %vm241, %v1088, 0.0
  %1090 = vadd.xlane.f32.xlu0 %v1089
  %v1091 = vpop.xlane.xlu0 %1090
  %v1092 = vrcp.pop %v1091
  %v1093 = vmul.f32 %v1088, %v1092
  %1095 = vrot.lane.b32.xlu0 %v156, 112
  %v1096 = vpop.permute.xlu0 %1095
  %v1099 = vsel %vm241, %v1093, 0
  %1101 = vmatprep.subr.mxu0 0.0
  %1102 = vmatpush1.msra.mxu0 %v1096
  %1103 = vmatprep.subr.mxu0 0.0
  %1104 = vmatpush1.msra.mxu0 0.0
  %1105 = vmatprep.subr.mxu0 0.0
  %1106 = vmatpush1.msra.mxu0 0.0
  %1107 = vmatprep.subr.mxu0 0.0
  %1108 = vmatpush1.msra.mxu0 0.0
  %1109 = vmatprep.subr.mxu0 0.0
  %1110 = vmatpush1.msra.mxu0 0.0
  %1111 = vmatprep.subr.mxu0 0.0
  %1112 = vmatpush1.msra.mxu0 0.0
  %1113 = vmatprep.subr.mxu0 0.0
  %1114 = vmatpush1.msra.mxu0 0.0
  %1115 = vmatprep.subr.mxu0 0.0
  %1116 = vmatpush1.msra.mxu0 0.0
  %1117 = vmatprep.subr.mxu0 0.0
  %1118 = vmatpush1.msra.mxu0 0.0
  %1119 = vmatprep.subr.mxu0 0.0
  %1120 = vmatpush1.msra.mxu0 0.0
  %1121 = vmatprep.subr.mxu0 0.0
  %1122 = vmatpush1.msra.mxu0 0.0
  %1123 = vmatprep.subr.mxu0 0.0
  %1124 = vmatpush1.msra.mxu0 0.0
  %1125 = vmatprep.subr.mxu0 0.0
  %1126 = vmatpush1.msra.mxu0 0.0
  %1127 = vmatprep.subr.mxu0 0.0
  %1128 = vmatpush1.msra.mxu0 0.0
  %1129 = vmatprep.subr.mxu0 0.0
  %1130 = vmatpush1.msra.mxu0 0.0
  %1131 = vmatprep.subr.mxu0 0.0
  %1132 = vmatpush1.msra.mxu0 0.0
  %1133 = vmatprep.subr.mxu0 0.0
  %1134 = vmatpush1.msra.mxu0 0.0
  %1135 = vmatprep.subr.mxu0 0.0
  %1136 = vmatpush1.msra.mxu0 0.0
  %1137 = vmatprep.subr.mxu0 0.0
  %1138 = vmatpush1.msra.mxu0 0.0
  %1139 = vmatprep.subr.mxu0 0.0
  %1140 = vmatpush1.msra.mxu0 0.0
  %1141 = vmatprep.subr.mxu0 0.0
  %1142 = vmatpush1.msra.mxu0 0.0
  %1143 = vmatprep.subr.mxu0 0.0
  %1144 = vmatpush1.msra.mxu0 0.0
  %1145 = vmatprep.subr.mxu0 0.0
  %1146 = vmatpush1.msra.mxu0 0.0
  %1147 = vmatprep.subr.mxu0 0.0
  %1148 = vmatpush1.msra.mxu0 0.0
  %1149 = vmatprep.subr.mxu0 0.0
  %1150 = vmatpush1.msra.mxu0 0.0
  %1151 = vmatprep.subr.mxu0 0.0
  %1152 = vmatpush1.msra.mxu0 0.0
  %1153 = vmatprep.subr.mxu0 0.0
  %1154 = vmatpush1.msra.mxu0 0.0
  %1155 = vmatprep.subr.mxu0 0.0
  %1156 = vmatpush1.msra.mxu0 0.0
  %1157 = vmatprep.subr.mxu0 0.0
  %1158 = vmatpush1.msra.mxu0 0.0
  %1159 = vmatprep.subr.mxu0 0.0
  %1160 = vmatpush1.msra.mxu0 0.0
  %1161 = vmatprep.subr.mxu0 0.0
  %1162 = vmatpush1.msra.mxu0 0.0
  %1163 = vmatprep.subr.mxu0 0.0
  %1164 = vmatpush1.msra.mxu0 0.0
  %1165 = vmatprep.mubr.f32.mxu0 0.0
  %1166 = vmatmul.mubr.f32.gmra.mrb[0].mxu0 %v1099
  %v1167 = vpop.f32.mrb[0].mxu0
  %v1168 = vadd.f32 0.0, %v1167
  %v1169 = vpop.f32.mrb[0].mxu0
  %1170 = vdwg.mxu0
  %1171 = vrot.lane.b32.xlu0 %v154, 96
  %v1172 = vpop.permute.xlu0 %1171
  %1173 = vrot.lane.b32.xlu0 %v154, 32
  %v1174 = vpop.permute.xlu0 %1173
  %v1175 = vsel %vm166, %v1172, 0
  %v1177 = vsel %vm166, %v1174, 0
  %1179 = vmatprep.subr.mxu0 0.0
  %1180 = vmatpush1.xpose.msra.mxu0 %v1177
  %1181 = vmatprep.subr.mxu0 0.0
  %1182 = vmatpush1.xpose.msra.mxu0 0.0
  %1183 = vmatprep.subr.mxu0 0.0
  %1184 = vmatpush1.xpose.msra.mxu0 0.0
  %1185 = vmatprep.subr.mxu0 0.0
  %1186 = vmatpush1.xpose.msra.mxu0 0.0
  %1187 = vmatprep.subr.mxu0 0.0
  %1188 = vmatpush1.xpose.msra.mxu0 0.0
  %1189 = vmatprep.subr.mxu0 0.0
  %1190 = vmatpush1.xpose.msra.mxu0 0.0
  %1191 = vmatprep.subr.mxu0 0.0
  %1192 = vmatpush1.xpose.msra.mxu0 0.0
  %1193 = vmatprep.subr.mxu0 0.0
  %1194 = vmatpush1.xpose.msra.mxu0 0.0
  %1195 = vmatprep.subr.mxu0 0.0
  %1196 = vmatpush1.xpose.msra.mxu0 0.0
  %1197 = vmatprep.subr.mxu0 0.0
  %1198 = vmatpush1.xpose.msra.mxu0 0.0
  %1199 = vmatprep.subr.mxu0 0.0
  %1200 = vmatpush1.xpose.msra.mxu0 0.0
  %1201 = vmatprep.subr.mxu0 0.0
  %1202 = vmatpush1.xpose.msra.mxu0 0.0
  %1203 = vmatprep.subr.mxu0 0.0
  %1204 = vmatpush1.xpose.msra.mxu0 0.0
  %1205 = vmatprep.subr.mxu0 0.0
  %1206 = vmatpush1.xpose.msra.mxu0 0.0
  %1207 = vmatprep.subr.mxu0 0.0
  %1208 = vmatpush1.xpose.msra.mxu0 0.0
  %1209 = vmatprep.subr.mxu0 0.0
  %1210 = vmatpush1.xpose.msra.mxu0 0.0
  %1211 = vmatprep.subr.mxu0 0.0
  %1212 = vmatpush1.xpose.msra.mxu0 0.0
  %1213 = vmatprep.subr.mxu0 0.0
  %1214 = vmatpush1.xpose.msra.mxu0 0.0
  %1215 = vmatprep.subr.mxu0 0.0
  %1216 = vmatpush1.xpose.msra.mxu0 0.0
  %1217 = vmatprep.subr.mxu0 0.0
  %1218 = vmatpush1.xpose.msra.mxu0 0.0
  %1219 = vmatprep.subr.mxu0 0.0
  %1220 = vmatpush1.xpose.msra.mxu0 0.0
  %1221 = vmatprep.subr.mxu0 0.0
  %1222 = vmatpush1.xpose.msra.mxu0 0.0
  %1223 = vmatprep.subr.mxu0 0.0
  %1224 = vmatpush1.xpose.msra.mxu0 0.0
  %1225 = vmatprep.subr.mxu0 0.0
  %1226 = vmatpush1.xpose.msra.mxu0 0.0
  %1227 = vmatprep.subr.mxu0 0.0
  %1228 = vmatpush1.xpose.msra.mxu0 0.0
  %1229 = vmatprep.subr.mxu0 0.0
  %1230 = vmatpush1.xpose.msra.mxu0 0.0
  %1231 = vmatprep.subr.mxu0 0.0
  %1232 = vmatpush1.xpose.msra.mxu0 0.0
  %1233 = vmatprep.subr.mxu0 0.0
  %1234 = vmatpush1.xpose.msra.mxu0 0.0
  %1235 = vmatprep.subr.mxu0 0.0
  %1236 = vmatpush1.xpose.msra.mxu0 0.0
  %1237 = vmatprep.subr.mxu0 0.0
  %1238 = vmatpush1.xpose.msra.mxu0 0.0
  %1239 = vmatprep.subr.mxu0 0.0
  %1240 = vmatpush1.xpose.msra.mxu0 0.0
  %1241 = vmatprep.subr.mxu0 0.0
  %1242 = vmatpush1.xpose.msra.mxu0 0.0
  %1243 = vmatprep.mubr.f32.mxu0 0.0
  %1244 = vmatmul.mubr.f32.gmra.mrb[0].mxu0 %v1175
  %v1245 = vpop.f32.mrb[0].mxu0
  %v1246 = vadd.f32 %v843, %v1245
  %v1247 = vpop.f32.mrb[0].mxu0
  %1248 = vdwg.mxu0
  %v1249 = vsel %vm241, %v1246, -inf
  %1250 = vmax.xlane.f32.xlu0 %v1249
  %v1251 = vpop.xlane.xlu0 %1250
  %v1252 = vsub.f32 %v1246, %v1251
  %v1253 = vmul.f32 %v1252, 1.442695
  %v1254 = vpow.pop %v1253
  %v1255 = vsel %vm241, %v1254, 0.0
  %1256 = vadd.xlane.f32.xlu0 %v1255
  %v1257 = vpop.xlane.xlu0 %1256
  %v1258 = vrcp.pop %v1257
  %v1259 = vmul.f32 %v1254, %v1258
  %1260 = vrot.lane.b32.xlu0 %v156, 96
  %v1261 = vpop.permute.xlu0 %1260
  %v1264 = vsel %vm241, %v1259, 0
  %1266 = vmatprep.subr.mxu0 0.0
  %1267 = vmatpush1.msra.mxu0 %v1261
  %1268 = vmatprep.subr.mxu0 0.0
  %1269 = vmatpush1.msra.mxu0 0.0
  %1270 = vmatprep.subr.mxu0 0.0
  %1271 = vmatpush1.msra.mxu0 0.0
  %1272 = vmatprep.subr.mxu0 0.0
  %1273 = vmatpush1.msra.mxu0 0.0
  %1274 = vmatprep.subr.mxu0 0.0
  %1275 = vmatpush1.msra.mxu0 0.0
  %1276 = vmatprep.subr.mxu0 0.0
  %1277 = vmatpush1.msra.mxu0 0.0
  %1278 = vmatprep.subr.mxu0 0.0
  %1279 = vmatpush1.msra.mxu0 0.0
  %1280 = vmatprep.subr.mxu0 0.0
  %1281 = vmatpush1.msra.mxu0 0.0
  %1282 = vmatprep.subr.mxu0 0.0
  %1283 = vmatpush1.msra.mxu0 0.0
  %1284 = vmatprep.subr.mxu0 0.0
  %1285 = vmatpush1.msra.mxu0 0.0
  %1286 = vmatprep.subr.mxu0 0.0
  %1287 = vmatpush1.msra.mxu0 0.0
  %1288 = vmatprep.subr.mxu0 0.0
  %1289 = vmatpush1.msra.mxu0 0.0
  %1290 = vmatprep.subr.mxu0 0.0
  %1291 = vmatpush1.msra.mxu0 0.0
  %1292 = vmatprep.subr.mxu0 0.0
  %1293 = vmatpush1.msra.mxu0 0.0
  %1294 = vmatprep.subr.mxu0 0.0
  %1295 = vmatpush1.msra.mxu0 0.0
  %1296 = vmatprep.subr.mxu0 0.0
  %1297 = vmatpush1.msra.mxu0 0.0
  %1298 = vmatprep.subr.mxu0 0.0
  %1299 = vmatpush1.msra.mxu0 0.0
  %1300 = vmatprep.subr.mxu0 0.0
  %1301 = vmatpush1.msra.mxu0 0.0
  %1302 = vmatprep.subr.mxu0 0.0
  %1303 = vmatpush1.msra.mxu0 0.0
  %1304 = vmatprep.subr.mxu0 0.0
  %1305 = vmatpush1.msra.mxu0 0.0
  %1306 = vmatprep.subr.mxu0 0.0
  %1307 = vmatpush1.msra.mxu0 0.0
  %1308 = vmatprep.subr.mxu0 0.0
  %1309 = vmatpush1.msra.mxu0 0.0
  %1310 = vmatprep.subr.mxu0 0.0
  %1311 = vmatpush1.msra.mxu0 0.0
  %1312 = vmatprep.subr.mxu0 0.0
  %1313 = vmatpush1.msra.mxu0 0.0
  %1314 = vmatprep.subr.mxu0 0.0
  %1315 = vmatpush1.msra.mxu0 0.0
  %1316 = vmatprep.subr.mxu0 0.0
  %1317 = vmatpush1.msra.mxu0 0.0
  %1318 = vmatprep.subr.mxu0 0.0
  %1319 = vmatpush1.msra.mxu0 0.0
  %1320 = vmatprep.subr.mxu0 0.0
  %1321 = vmatpush1.msra.mxu0 0.0
  %1322 = vmatprep.subr.mxu0 0.0
  %1323 = vmatpush1.msra.mxu0 0.0
  %1324 = vmatprep.subr.mxu0 0.0
  %1325 = vmatpush1.msra.mxu0 0.0
  %1326 = vmatprep.subr.mxu0 0.0
  %1327 = vmatpush1.msra.mxu0 0.0
  %1328 = vmatprep.subr.mxu0 0.0
  %1329 = vmatpush1.msra.mxu0 0.0
  %1330 = vmatprep.mubr.f32.mxu0 0.0
  %1331 = vmatmul.mubr.f32.gmra.mrb[0].mxu0 %v1264
  %v1332 = vpop.f32.mrb[0].mxu0
  %v1333 = vadd.f32 0.0, %v1332
  %v1334 = vpop.f32.mrb[0].mxu0
  %1335 = vdwg.mxu0
  %1336 = vrot.lane.b32.xlu0 %v154, 80
  %v1337 = vpop.permute.xlu0 %1336
  %1338 = vrot.lane.b32.xlu0 %v154, 16
  %v1339 = vpop.permute.xlu0 %1338
  %v1340 = vsel %vm166, %v1337, 0
  %v1342 = vsel %vm166, %v1339, 0
  %1344 = vmatprep.subr.mxu0 0.0
  %1345 = vmatpush1.xpose.msra.mxu0 %v1342
  %1346 = vmatprep.subr.mxu0 0.0
  %1347 = vmatpush1.xpose.msra.mxu0 0.0
  %1348 = vmatprep.subr.mxu0 0.0
  %1349 = vmatpush1.xpose.msra.mxu0 0.0
  %1350 = vmatprep.subr.mxu0 0.0
  %1351 = vmatpush1.xpose.msra.mxu0 0.0
  %1352 = vmatprep.subr.mxu0 0.0
  %1353 = vmatpush1.xpose.msra.mxu0 0.0
  %1354 = vmatprep.subr.mxu0 0.0
  %1355 = vmatpush1.xpose.msra.mxu0 0.0
  %1356 = vmatprep.subr.mxu0 0.0
  %1357 = vmatpush1.xpose.msra.mxu0 0.0
  %1358 = vmatprep.subr.mxu0 0.0
  %1359 = vmatpush1.xpose.msra.mxu0 0.0
  %1360 = vmatprep.subr.mxu0 0.0
  %1361 = vmatpush1.xpose.msra.mxu0 0.0
  %1362 = vmatprep.subr.mxu0 0.0
  %1363 = vmatpush1.xpose.msra.mxu0 0.0
  %1364 = vmatprep.subr.mxu0 0.0
  %1365 = vmatpush1.xpose.msra.mxu0 0.0
  %1366 = vmatprep.subr.mxu0 0.0
  %1367 = vmatpush1.xpose.msra.mxu0 0.0
  %1368 = vmatprep.subr.mxu0 0.0
  %1369 = vmatpush1.xpose.msra.mxu0 0.0
  %1370 = vmatprep.subr.mxu0 0.0
  %1371 = vmatpush1.xpose.msra.mxu0 0.0
  %1372 = vmatprep.subr.mxu0 0.0
  %1373 = vmatpush1.xpose.msra.mxu0 0.0
  %1374 = vmatprep.subr.mxu0 0.0
  %1375 = vmatpush1.xpose.msra.mxu0 0.0
  %1376 = vmatprep.subr.mxu0 0.0
  %1377 = vmatpush1.xpose.msra.mxu0 0.0
  %1378 = vmatprep.subr.mxu0 0.0
  %1379 = vmatpush1.xpose.msra.mxu0 0.0
  %1380 = vmatprep.subr.mxu0 0.0
  %1381 = vmatpush1.xpose.msra.mxu0 0.0
  %1382 = vmatprep.subr.mxu0 0.0
  %1383 = vmatpush1.xpose.msra.mxu0 0.0
  %1384 = vmatprep.subr.mxu0 0.0
  %1385 = vmatpush1.xpose.msra.mxu0 0.0
  %1386 = vmatprep.subr.mxu0 0.0
  %1387 = vmatpush1.xpose.msra.mxu0 0.0
  %1388 = vmatprep.subr.mxu0 0.0
  %1389 = vmatpush1.xpose.msra.mxu0 0.0
  %1390 = vmatprep.subr.mxu0 0.0
  %1391 = vmatpush1.xpose.msra.mxu0 0.0
  %1392 = vmatprep.subr.mxu0 0.0
  %1393 = vmatpush1.xpose.msra.mxu0 0.0
  %1394 = vmatprep.subr.mxu0 0.0
  %1395 = vmatpush1.xpose.msra.mxu0 0.0
  %1396 = vmatprep.subr.mxu0 0.0
  %1397 = vmatpush1.xpose.msra.mxu0 0.0
  %1398 = vmatprep.subr.mxu0 0.0
  %1399 = vmatpush1.xpose.msra.mxu0 0.0
  %1400 = vmatprep.subr.mxu0 0.0
  %1401 = vmatpush1.xpose.msra.mxu0 0.0
  %1402 = vmatprep.subr.mxu0 0.0
  %1403 = vmatpush1.xpose.msra.mxu0 0.0
  %1404 = vmatprep.subr.mxu0 0.0
  %1405 = vmatpush1.xpose.msra.mxu0 0.0
  %1406 = vmatprep.subr.mxu0 0.0
  %1407 = vmatpush1.xpose.msra.mxu0 0.0
  %1408 = vmatprep.mubr.f32.mxu0 0.0
  %1409 = vmatmul.mubr.f32.gmra.mrb[0].mxu0 %v1340
  %v1410 = vpop.f32.mrb[0].mxu0
  %v1411 = vadd.f32 %v843, %v1410
  %v1412 = vpop.f32.mrb[0].mxu0
  %1413 = vdwg.mxu0
  %v1414 = vsel %vm241, %v1411, -inf
  %1415 = vmax.xlane.f32.xlu0 %v1414
  %v1416 = vpop.xlane.xlu0 %1415
  %v1417 = vsub.f32 %v1411, %v1416
  %v1418 = vmul.f32 %v1417, 1.442695
  %v1419 = vpow.pop %v1418
  %v1420 = vsel %vm241, %v1419, 0.0
  %1421 = vadd.xlane.f32.xlu0 %v1420
  %v1422 = vpop.xlane.xlu0 %1421
  %v1423 = vrcp.pop %v1422
  %v1424 = vmul.f32 %v1419, %v1423
  %1425 = vrot.lane.b32.xlu0 %v156, 80
  %v1426 = vpop.permute.xlu0 %1425
  %v1429 = vsel %vm241, %v1424, 0
  %1431 = vmatprep.subr.mxu0 0.0
  %1432 = vmatpush1.msra.mxu0 %v1426
  %1433 = vmatprep.subr.mxu0 0.0
  %1434 = vmatpush1.msra.mxu0 0.0
  %1435 = vmatprep.subr.mxu0 0.0
  %1436 = vmatpush1.msra.mxu0 0.0
  %1437 = vmatprep.subr.mxu0 0.0
  %1438 = vmatpush1.msra.mxu0 0.0
  %1439 = vmatprep.subr.mxu0 0.0
  %1440 = vmatpush1.msra.mxu0 0.0
  %1441 = vmatprep.subr.mxu0 0.0
  %1442 = vmatpush1.msra.mxu0 0.0
  %1443 = vmatprep.subr.mxu0 0.0
  %1444 = vmatpush1.msra.mxu0 0.0
  %1445 = vmatprep.subr.mxu0 0.0
  %1446 = vmatpush1.msra.mxu0 0.0
  %1447 = vmatprep.subr.mxu0 0.0
  %1448 = vmatpush1.msra.mxu0 0.0
  %1449 = vmatprep.subr.mxu0 0.0
  %1450 = vmatpush1.msra.mxu0 0.0
  %1451 = vmatprep.subr.mxu0 0.0
  %1452 = vmatpush1.msra.mxu0 0.0
  %1453 = vmatprep.subr.mxu0 0.0
  %1454 = vmatpush1.msra.mxu0 0.0
  %1455 = vmatprep.subr.mxu0 0.0
  %1456 = vmatpush1.msra.mxu0 0.0
  %1457 = vmatprep.subr.mxu0 0.0
  %1458 = vmatpush1.msra.mxu0 0.0
  %1459 = vmatprep.subr.mxu0 0.0
  %1460 = vmatpush1.msra.mxu0 0.0
  %1461 = vmatprep.subr.mxu0 0.0
  %1462 = vmatpush1.msra.mxu0 0.0
  %1463 = vmatprep.subr.mxu0 0.0
  %1464 = vmatpush1.msra.mxu0 0.0
  %1465 = vmatprep.subr.mxu0 0.0
  %1466 = vmatpush1.msra.mxu0 0.0
  %1467 = vmatprep.subr.mxu0 0.0
  %1468 = vmatpush1.msra.mxu0 0.0
  %1469 = vmatprep.subr.mxu0 0.0
  %1470 = vmatpush1.msra.mxu0 0.0
  %1471 = vmatprep.subr.mxu0 0.0
  %1472 = vmatpush1.msra.mxu0 0.0
  %1473 = vmatprep.subr.mxu0 0.0
  %1474 = vmatpush1.msra.mxu0 0.0
  %1475 = vmatprep.subr.mxu0 0.0
  %1476 = vmatpush1.msra.mxu0 0.0
  %1477 = vmatprep.subr.mxu0 0.0
  %1478 = vmatpush1.msra.mxu0 0.0
  %1479 = vmatprep.subr.mxu0 0.0
  %1480 = vmatpush1.msra.mxu0 0.0
  %1481 = vmatprep.subr.mxu0 0.0
  %1482 = vmatpush1.msra.mxu0 0.0
  %1483 = vmatprep.subr.mxu0 0.0
  %1484 = vmatpush1.msra.mxu0 0.0
  %1485 = vmatprep.subr.mxu0 0.0
  %1486 = vmatpush1.msra.mxu0 0.0
  %1487 = vmatprep.subr.mxu0 0.0
  %1488 = vmatpush1.msra.mxu0 0.0
  %1489 = vmatprep.subr.mxu0 0.0
  %1490 = vmatpush1.msra.mxu0 0.0
  %1491 = vmatprep.subr.mxu0 0.0
  %1492 = vmatpush1.msra.mxu0 0.0
  %1493 = vmatprep.subr.mxu0 0.0
  %1494 = vmatpush1.msra.mxu0 0.0
  %1495 = vmatprep.mubr.f32.mxu0 0.0
  %1496 = vmatmul.mubr.f32.gmra.mrb[0].mxu0 %v1429
  %v1497 = vpop.f32.mrb[0].mxu0
  %v1498 = vadd.f32 0.0, %v1497
  %v1499 = vpop.f32.mrb[0].mxu0
  %1500 = vdwg.mxu0
  %1502 = vrot.lane.b32.xlu0 %v1168, 16
  %v1503 = vpop.permute.xlu0 %1502
  %1506 = vrot.lane.b32.xlu0 %v1333, 32
  %v1507 = vpop.permute.xlu0 %1506
  %1510 = vrot.lane.b32.xlu0 %v1498, 48
  %v1511 = vpop.permute.xlu0 %1510
  %v1513 = vsel %vm166, %v1002, %v1503
  %v1514 = vsel %vm835, %v1513, %v1507
  %v1515 = vsel %vm837, %v1514, %v1511
  %v1516 = vpack.c.bf16 %v1515, %v838
  %v1517 = vld [vmem:[%s4] sm:$0xf]
  %v1518 = vld [vmem:[%s4 + $0x4] sm:$0xf]
  %v1519 = vld [vmem:[%s4 + $0x8] sm:$0xf]
  %v1520 = vld [vmem:[%s4 + $0xc] sm:$0xf]
  %v1521 = vld [vmem:[%s4 + $0x10] sm:$0xf]
  %v1522 = vld [vmem:[%s4 + $0x14] sm:$0xf]
  %v1523 = vld [vmem:[%s4 + $0x18] sm:$0xf]
  %v1524 = vld [vmem:[%s4 + $0x1c] sm:$0xf]
  %v1525 = vld [vmem:[%s5] sm:$0x1]
  %v1527 = vlaneseq
  %v1528 = vshrl.u32 %v1527, 7
  %v1529 = vsub.s32 0, %v1528
  %v1530 = vrot.slane %v1525, %v1529
  %v1540 = vunpack.c.l.b16 %v1517
  %v1541 = vunpack.c.l.b16 %v1518
  %v1542 = vunpack.c.l.b16 %v1519
  %v1543 = vunpack.c.l.b16 %v1520
  %v1544 = vunpack.c.l.b16 %v1521
  %v1545 = vunpack.c.l.b16 %v1522
  %v1546 = vunpack.c.l.b16 %v1523
  %v1547 = vunpack.c.l.b16 %v1524
  %v1548 = vpack.c.b16 %v1541, %v1540
  %v1549 = vpack.c.b16 %v1543, %v1542
  %v1550 = vpack.c.b16 %v1545, %v1544
  %v1551 = vpack.c.b16 %v1547, %v1546
  %v1557 = vsel %vm111, %v1516, 0
  %1559 = vmatprep.subr.bf16.mxu0 0
  %1560 = vmatpush1.bf16.msra.mxu0 %v1548
  %1561 = vmatprep.subr.bf16.mxu0 0
  %1562 = vmatpush1.bf16.msra.mxu0 %v1549
  %1563 = vmatprep.subr.bf16.mxu0 0
  %1564 = vmatpush1.bf16.msra.mxu0 %v1550
  %1565 = vmatprep.subr.bf16.mxu0 0
  %1566 = vmatpush1.bf16.msra.mxu0 %v1551
  %1567 = vmatprep.subr.bf16.mxu0 0
  %1568 = vmatpush1.bf16.msra.mxu0 0
  %1569 = vmatprep.subr.bf16.mxu0 0
  %1570 = vmatpush1.bf16.msra.mxu0 0
  %1571 = vmatprep.subr.bf16.mxu0 0
  %1572 = vmatpush1.bf16.msra.mxu0 0
  %1573 = vmatprep.subr.bf16.mxu0 0
  %1574 = vmatpush1.bf16.msra.mxu0 0
  %1575 = vmatprep.subr.bf16.mxu0 0
  %1576 = vmatpush1.bf16.msra.mxu0 0
  %1577 = vmatprep.subr.bf16.mxu0 0
  %1578 = vmatpush1.bf16.msra.mxu0 0
  %1579 = vmatprep.subr.bf16.mxu0 0
  %1580 = vmatpush1.bf16.msra.mxu0 0
  %1581 = vmatprep.subr.bf16.mxu0 0
  %1582 = vmatpush1.bf16.msra.mxu0 0
  %1583 = vmatprep.subr.bf16.mxu0 0
  %1584 = vmatpush1.bf16.msra.mxu0 0
  %1585 = vmatprep.subr.bf16.mxu0 0
  %1586 = vmatpush1.bf16.msra.mxu0 0
  %1587 = vmatprep.subr.bf16.mxu0 0
  %1588 = vmatpush1.bf16.msra.mxu0 0
  %1589 = vmatprep.subr.bf16.mxu0 0
  %1590 = vmatpush1.bf16.msra.mxu0 0
  %1591 = vmatprep.mubr.bf16.mxu0 0
  %1592 = vmatmul.mubr.bf16.gmra.mrb[0].mxu0 %v1557
  %v1593 = vpop.f32.mrb[0].mxu0
  %v1594 = vadd.f32 %v1530, %v1593
  %v1595 = vpop.f32.mrb[0].mxu0
  %v1596 = vpop.f32.mrb[0].mxu0
  %v1597 = vadd.f32 %v1530, %v1596
  %v1598 = vpop.f32.mrb[0].mxu0
  %1599 = vdwg.mxu0
  %v1600 = vadd.f32 %v48, %v1594
  %v1601 = vadd.f32 %v49, %v1597
  %v1602 = vld [vmem:[%s6] sm:$0x1]
  %v1603 = vld [vmem:[%s7] sm:$0x1]
  %v1604 = vsel %vm111, %v1600, 0.0
  %1605 = vadd.xlane.f32.xlu0 %v1604
  %v1606 = vpop.xlane.xlu0 %1605
  %v1607 = vsel %vm111, %v1601, 0.0
  %1608 = vadd.xlane.f32.xlu0 %v1607
  %v1609 = vpop.xlane.xlu0 %1608
  %v1610 = vrcp.pop 64.0
  %v1611 = vmul.f32 %v1606, %v1610
  %v1612 = vmul.f32 %v1609, %v1610
  %v1613 = vsub.f32 %v1600, %v1611
  %v1614 = vsub.f32 %v1601, %v1612
  %v1615 = vmul.f32 %v1613, %v1613
  %v1616 = vmul.f32 %v1614, %v1614
  %v1617 = vsel %vm111, %v1615, 0.0
  %1618 = vadd.xlane.f32.xlu0 %v1617
  %v1619 = vpop.xlane.xlu0 %1618
  %v1620 = vsel %vm111, %v1616, 0.0
  %1621 = vadd.xlane.f32.xlu0 %v1620
  %v1622 = vpop.xlane.xlu0 %1621
  %v1623 = vmul.f32 %v1619, %v1610
  %v1624 = vmul.f32 %v1622, %v1610
  %v1625 = vadd.f32 %v1623, 1e-05
  %v1626 = vadd.f32 %v1624, 1e-05
  %v1627 = vrsqrt.pop %v1625
  %v1628 = vrsqrt.pop %v1626
  %v1629 = vmul.f32 %v1613, %v1627
  %v1630 = vmul.f32 %v1614, %v1628
  %v1632 = vlaneseq
  %v1633 = vshrl.u32 %v1632, 7
  %v1634 = vsub.s32 0, %v1633
  %v1635 = vrot.slane %v1602, %v1634
  %v1637 = vmul.f32 %v1629, %v1635
  %v1638 = vmul.f32 %v1630, %v1635
  %v1640 = vlaneseq
  %v1641 = vshrl.u32 %v1640, 7
  %v1642 = vsub.s32 0, %v1641
  %v1643 = vrot.slane %v1603, %v1642
  %v1645 = vadd.f32 %v1637, %v1643
  %v1646 = vadd.f32 %v1638, %v1643
  %v1647 = vpack.c.bf16 %v1646, %v1645
  %v1648 = vld [vmem:[%s8] sm:$0xf]
  %v1649 = vld [vmem:[%s8 + $0x4] sm:$0xf]
  %v1650 = vld [vmem:[%s8 + $0x8] sm:$0xf]
  %v1651 = vld [vmem:[%s8 + $0xc] sm:$0xf]
  %v1652 = vld [vmem:[%s8 + $0x10] sm:$0xf]
  %v1653 = vld [vmem:[%s8 + $0x14] sm:$0xf]
  %v1654 = vld [vmem:[%s8 + $0x18] sm:$0xf]
  %v1655 = vld [vmem:[%s8 + $0x1c] sm:$0xf]
  %v1656 = vld [vmem:[%s9] sm:$0x1]
  %v1658 = vlaneseq
  %v1659 = vshrl.u32 %v1658, 7
  %v1660 = vsub.s32 0, %v1659
  %v1661 = vrot.slane %v1656, %v1660
  %v1671 = vunpack.c.l.b16 %v1648
  %v1672 = vunpack.c.l.b16 %v1649
  %v1673 = vunpack.c.l.b16 %v1650
  %v1674 = vunpack.c.l.b16 %v1651
  %v1675 = vunpack.c.l.b16 %v1652
  %v1676 = vunpack.c.l.b16 %v1653
  %v1677 = vunpack.c.l.b16 %v1654
  %v1678 = vunpack.c.l.b16 %v1655
  %v1679 = vpack.c.b16 %v1672, %v1671
  %v1680 = vpack.c.b16 %v1674, %v1673
  %v1681 = vpack.c.b16 %v1676, %v1675
  %v1682 = vpack.c.b16 %v1678, %v1677
  %v1688 = vsel %vm111, %v1647, 0
  %1690 = vmatprep.subr.bf16.mxu0 0
  %1691 = vmatpush1.bf16.msra.mxu0 %v1679
  %1692 = vmatprep.subr.bf16.mxu0 0
  %1693 = vmatpush1.bf16.msra.mxu0 %v1680
  %1694 = vmatprep.subr.bf16.mxu0 0
  %1695 = vmatpush1.bf16.msra.mxu0 %v1681
  %1696 = vmatprep.subr.bf16.mxu0 0
  %1697 = vmatpush1.bf16.msra.mxu0 %v1682
  %1698 = vmatprep.subr.bf16.mxu0 0
  %1699 = vmatpush1.bf16.msra.mxu0 0
  %1700 = vmatprep.subr.bf16.mxu0 0
  %1701 = vmatpush1.bf16.msra.mxu0 0
  %1702 = vmatprep.subr.bf16.mxu0 0
  %1703 = vmatpush1.bf16.msra.mxu0 0
  %1704 = vmatprep.subr.bf16.mxu0 0
  %1705 = vmatpush1.bf16.msra.mxu0 0
  %1706 = vmatprep.subr.bf16.mxu0 0
  %1707 = vmatpush1.bf16.msra.mxu0 0
  %1708 = vmatprep.subr.bf16.mxu0 0
  %1709 = vmatpush1.bf16.msra.mxu0 0
  %1710 = vmatprep.subr.bf16.mxu0 0
  %1711 = vmatpush1.bf16.msra.mxu0 0
  %1712 = vmatprep.subr.bf16.mxu0 0
  %1713 = vmatpush1.bf16.msra.mxu0 0
  %1714 = vmatprep.subr.bf16.mxu0 0
  %1715 = vmatpush1.bf16.msra.mxu0 0
  %1716 = vmatprep.subr.bf16.mxu0 0
  %1717 = vmatpush1.bf16.msra.mxu0 0
  %1718 = vmatprep.subr.bf16.mxu0 0
  %1719 = vmatpush1.bf16.msra.mxu0 0
  %1720 = vmatprep.subr.bf16.mxu0 0
  %1721 = vmatpush1.bf16.msra.mxu0 0
  %1722 = vmatprep.mubr.bf16.mxu0 0
  %1723 = vmatmul.mubr.bf16.gmra.mrb[0].mxu0 %v1688
  %v1724 = vpop.f32.mrb[0].mxu0
  %v1725 = vadd.f32 %v1661, %v1724
  %v1726 = vpop.f32.mrb[0].mxu0
  %v1727 = vpop.f32.mrb[0].mxu0
  %v1728 = vadd.f32 %v1661, %v1727
  %v1729 = vpop.f32.mrb[0].mxu0
  %1730 = vdwg.mxu0
  %v1731 = vmul.f32 %v1725, 0.5
  %v1732 = vmul.f32 %v1728, 0.5
  %v1733 = vmul.f32 %v1725, 0.044715
  %v1734 = vmul.f32 %v1728, 0.044715
  %v1735 = vmul.f32 %v1733, %v1725
  %v1736 = vmul.f32 %v1734, %v1728
  %v1737 = vmul.f32 %v1735, %v1725
  %v1738 = vmul.f32 %v1736, %v1728
  %v1739 = vadd.f32 %v1725, %v1737
  %v1740 = vadd.f32 %v1728, %v1738
  %v1741 = vmul.f32 %v1739, 0.7978846
  %v1742 = vmul.f32 %v1740, 0.7978846
  %v1743 = vtanh.pop %v1741
  %v1744 = vtanh.pop %v1742
  %v1745 = vadd.f32 %v1743, 1.0
  %v1746 = vadd.f32 %v1744, 1.0
  %v1747 = vmul.f32 %v1731, %v1745
  %v1748 = vmul.f32 %v1732, %v1746
  %v1749 = vpack.c.bf16 %v1748, %v1747
  %v1750 = vld [vmem:[%s10] sm:$0xf]
  %v1751 = vld [vmem:[%s10 + $0x4] sm:$0xf]
  %v1752 = vld [vmem:[%s10 + $0x8] sm:$0xf]
  %v1753 = vld [vmem:[%s10 + $0xc] sm:$0xf]
  %v1754 = vld [vmem:[%s10 + $0x10] sm:$0xf]
  %v1755 = vld [vmem:[%s10 + $0x14] sm:$0xf]
  %v1756 = vld [vmem:[%s10 + $0x18] sm:$0xf]
  %v1757 = vld [vmem:[%s10 + $0x1c] sm:$0xf]
  %v1758 = vld [vmem:[%s10 + $0x20] sm:$0xf]
  %v1759 = vld [vmem:[%s10 + $0x24] sm:$0xf]
  %v1760 = vld [vmem:[%s10 + $0x28] sm:$0xf]
  %v1761 = vld [vmem:[%s10 + $0x2c] sm:$0xf]
  %v1762 = vld [vmem:[%s10 + $0x30] sm:$0xf]
  %v1763 = vld [vmem:[%s10 + $0x34] sm:$0xf]
  %v1764 = vld [vmem:[%s10 + $0x38] sm:$0xf]
  %v1765 = vld [vmem:[%s10 + $0x3c] sm:$0xf]
  %v1766 = vld [vmem:[%s11] sm:$0x1]
  %v1768 = vlaneseq
  %v1769 = vshrl.u32 %v1768, 7
  %v1770 = vsub.s32 0, %v1769
  %v1771 = vrot.slane %v1766, %v1770
  %v1789 = vunpack.c.l.b16 %v1750
  %v1790 = vunpack.c.l.b16 %v1751
  %v1791 = vunpack.c.l.b16 %v1752
  %v1792 = vunpack.c.l.b16 %v1753
  %v1793 = vunpack.c.l.b16 %v1754
  %v1794 = vunpack.c.l.b16 %v1755
  %v1795 = vunpack.c.l.b16 %v1756
  %v1796 = vunpack.c.l.b16 %v1757
  %v1797 = vunpack.c.l.b16 %v1758
  %v1798 = vunpack.c.l.b16 %v1759
  %v1799 = vunpack.c.l.b16 %v1760
  %v1800 = vunpack.c.l.b16 %v1761
  %v1801 = vunpack.c.l.b16 %v1762
  %v1802 = vunpack.c.l.b16 %v1763
  %v1803 = vunpack.c.l.b16 %v1764
  %v1804 = vunpack.c.l.b16 %v1765
  %v1805 = vpack.c.b16 %v1790, %v1789
  %v1806 = vpack.c.b16 %v1792, %v1791
  %v1807 = vpack.c.b16 %v1794, %v1793
  %v1808 = vpack.c.b16 %v1796, %v1795
  %v1809 = vpack.c.b16 %v1798, %v1797
  %v1810 = vpack.c.b16 %v1800, %v1799
  %v1811 = vpack.c.b16 %v1802, %v1801
  %v1812 = vpack.c.b16 %v1804, %v1803
  %1821 = vmatprep.subr.bf16.mxu0 0
  %1822 = vmatpush1.bf16.msra.mxu0 %v1805
  %1823 = vmatprep.subr.bf16.mxu0 0
  %1824 = vmatpush1.bf16.msra.mxu0 %v1806
  %1825 = vmatprep.subr.bf16.mxu0 0
  %1826 = vmatpush1.bf16.msra.mxu0 %v1807
  %1827 = vmatprep.subr.bf16.mxu0 0
  %1828 = vmatpush1.bf16.msra.mxu0 %v1808
  %1829 = vmatprep.subr.bf16.mxu0 0
  %1830 = vmatpush1.bf16.msra.mxu0 %v1809
  %1831 = vmatprep.subr.bf16.mxu0 0
  %1832 = vmatpush1.bf16.msra.mxu0 %v1810
  %1833 = vmatprep.subr.bf16.mxu0 0
  %1834 = vmatpush1.bf16.msra.mxu0 %v1811
  %1835 = vmatprep.subr.bf16.mxu0 0
  %1836 = vmatpush1.bf16.msra.mxu0 %v1812
  %1837 = vmatprep.subr.bf16.mxu0 0
  %1838 = vmatpush1.bf16.msra.mxu0 0
  %1839 = vmatprep.subr.bf16.mxu0 0
  %1840 = vmatpush1.bf16.msra.mxu0 0
  %1841 = vmatprep.subr.bf16.mxu0 0
  %1842 = vmatpush1.bf16.msra.mxu0 0
  %1843 = vmatprep.subr.bf16.mxu0 0
  %1844 = vmatpush1.bf16.msra.mxu0 0
  %1845 = vmatprep.subr.bf16.mxu0 0
  %1846 = vmatpush1.bf16.msra.mxu0 0
  %1847 = vmatprep.subr.bf16.mxu0 0
  %1848 = vmatpush1.bf16.msra.mxu0 0
  %1849 = vmatprep.subr.bf16.mxu0 0
  %1850 = vmatpush1.bf16.msra.mxu0 0
  %1851 = vmatprep.subr.bf16.mxu0 0
  %1852 = vmatpush1.bf16.msra.mxu0 0
  %1853 = vmatprep.mubr.bf16.mxu0 0
  %1854 = vmatmul.mubr.bf16.gmra.mrb[0].mxu0 %v1749
  %v1855 = vpop.f32.mrb[0].mxu0
  %v1856 = vadd.f32 %v1771, %v1855
  %v1857 = vpop.f32.mrb[0].mxu0
  %v1858 = vpop.f32.mrb[0].mxu0
  %v1859 = vadd.f32 %v1771, %v1858
  %v1860 = vpop.f32.mrb[0].mxu0
  %1861 = vdwg.mxu0
  %v1862 = vadd.f32 %v1645, %v1856
  %v1863 = vadd.f32 %v1646, %v1859
  %v1864 = vld [vmem:[%s12] sm:$0x1]
  %v1865 = vld [vmem:[%s13] sm:$0x1]
  %v1866 = vsel %vm111, %v1862, 0.0
  %1867 = vadd.xlane.f32.xlu0 %v1866
  %v1868 = vpop.xlane.xlu0 %1867
  %v1869 = vsel %vm111, %v1863, 0.0
  %1870 = vadd.xlane.f32.xlu0 %v1869
  %v1871 = vpop.xlane.xlu0 %1870
  %v1872 = vmul.f32 %v1868, %v1610
  %v1873 = vmul.f32 %v1871, %v1610
  %v1874 = vsub.f32 %v1862, %v1872
  %v1875 = vsub.f32 %v1863, %v1873
  %v1876 = vmul.f32 %v1874, %v1874
  %v1877 = vmul.f32 %v1875, %v1875
  %v1878 = vsel %vm111, %v1876, 0.0
  %1879 = vadd.xlane.f32.xlu0 %v1878
  %v1880 = vpop.xlane.xlu0 %1879
  %v1881 = vsel %vm111, %v1877, 0.0
  %1882 = vadd.xlane.f32.xlu0 %v1881
  %v1883 = vpop.xlane.xlu0 %1882
  %v1884 = vmul.f32 %v1880, %v1610
  %v1885 = vmul.f32 %v1883, %v1610
  %v1886 = vadd.f32 %v1884, 1e-05
  %v1887 = vadd.f32 %v1885, 1e-05
  %v1888 = vrsqrt.pop %v1886
  %v1889 = vrsqrt.pop %v1887
  %v1890 = vmul.f32 %v1874, %v1888
  %v1891 = vmul.f32 %v1875, %v1889
  %v1893 = vlaneseq
  %v1894 = vshrl.u32 %v1893, 7
  %v1895 = vsub.s32 0, %v1894
  %v1896 = vrot.slane %v1864, %v1895
  %v1898 = vmul.f32 %v1890, %v1896
  %v1899 = vmul.f32 %v1891, %v1896
  %v1901 = vlaneseq
  %v1902 = vshrl.u32 %v1901, 7
  %v1903 = vsub.s32 0, %v1902
  %v1904 = vrot.slane %v1865, %v1903
  %v1906 = vadd.f32 %v1898, %v1904
  %v1907 = vadd.f32 %v1899, %v1904
  %v1908 = vpack.c.bf16 %v1907, %v1906
  %s1909 = scalar_lea.vmem %s2, 64
  %v1910 = vld [vmem:[%s1909] sm:$0xff]
  %v1911 = vld [vmem:[%s1909 + $0x8] sm:$0xff]
  %v1912 = vld [vmem:[%s1909 + $0x10] sm:$0xff]
  %v1913 = vld [vmem:[%s1909 + $0x18] sm:$0xff]
  %v1914 = vld [vmem:[%s1909 + $0x20] sm:$0xff]
  %v1915 = vld [vmem:[%s1909 + $0x28] sm:$0xff]
  %v1916 = vld [vmem:[%s1909 + $0x30] sm:$0xff]
  %v1917 = vld [vmem:[%s1909 + $0x38] sm:$0xff]
  %s1918 = scalar_lea.vmem %s3, 2
  %v1919 = vld [vmem:[%s1918] sm:$0x3]
  %v1921 = vlaneseq
  %v1922 = vshrl.u32 %v1921, 7
  %v1923 = vsub.s32 0, %v1922
  %v1924 = vrot.slane %v1919, %v1923
  %v1925 = vlaneseq
  %v1926 = vshrl.u32 %v1925, 7
  %v1927 = vsub.s32 1, %v1926
  %v1928 = vrot.slane %v1919, %v1927
  %v1939 = vunpack.c.l.b16 %v1910
  %v1940 = vunpack.c.h.b16 %v1910
  %v1941 = vunpack.c.l.b16 %v1911
  %v1942 = vunpack.c.h.b16 %v1911
  %v1943 = vunpack.c.l.b16 %v1912
  %v1944 = vunpack.c.h.b16 %v1912
  %v1945 = vunpack.c.l.b16 %v1913
  %v1946 = vunpack.c.h.b16 %v1913
  %v1947 = vunpack.c.l.b16 %v1914
  %v1948 = vunpack.c.h.b16 %v1914
  %v1949 = vunpack.c.l.b16 %v1915
  %v1950 = vunpack.c.h.b16 %v1915
  %v1951 = vunpack.c.l.b16 %v1916
  %v1952 = vunpack.c.h.b16 %v1916
  %v1953 = vunpack.c.l.b16 %v1917
  %v1954 = vunpack.c.h.b16 %v1917
  %v1955 = vpack.c.b16 %v1941, %v1939
  %v1956 = vpack.c.b16 %v1942, %v1940
  %v1957 = vpack.c.b16 %v1945, %v1943
  %v1958 = vpack.c.b16 %v1946, %v1944
  %v1959 = vpack.c.b16 %v1949, %v1947
  %v1960 = vpack.c.b16 %v1950, %v1948
  %v1961 = vpack.c.b16 %v1953, %v1951
  %v1962 = vpack.c.b16 %v1954, %v1952
  %v1972 = vsel %vm111, %v1908, 0
  %1974 = vmatprep.subr.bf16.mxu0 %v1956
  %1975 = vmatpush1.bf16.msra.mxu0 %v1955
  %1976 = vmatprep.subr.bf16.mxu0 %v1958
  %1977 = vmatpush1.bf16.msra.mxu0 %v1957
  %1978 = vmatprep.subr.bf16.mxu0 %v1960
  %1979 = vmatpush1.bf16.msra.mxu0 %v1959
  %1980 = vmatprep.subr.bf16.mxu0 %v1962
  %1981 = vmatpush1.bf16.msra.mxu0 %v1961
  %1982 = vmatprep.subr.bf16.mxu0 0
  %1983 = vmatpush1.bf16.msra.mxu0 0
  %1984 = vmatprep.subr.bf16.mxu0 0
  %1985 = vmatpush1.bf16.msra.mxu0 0
  %1986 = vmatprep.subr.bf16.mxu0 0
  %1987 = vmatpush1.bf16.msra.mxu0 0
  %1988 = vmatprep.subr.bf16.mxu0 0
  %1989 = vmatpush1.bf16.msra.mxu0 0
  %1990 = vmatprep.subr.bf16.mxu0 0
  %1991 = vmatpush1.bf16.msra.mxu0 0
  %1992 = vmatprep.subr.bf16.mxu0 0
  %1993 = vmatpush1.bf16.msra.mxu0 0
  %1994 = vmatprep.subr.bf16.mxu0 0
  %1995 = vmatpush1.bf16.msra.mxu0 0
  %1996 = vmatprep.subr.bf16.mxu0 0
  %1997 = vmatpush1.bf16.msra.mxu0 0
  %1998 = vmatprep.subr.bf16.mxu0 0
  %1999 = vmatpush1.bf16.msra.mxu0 0
  %2000 = vmatprep.subr.bf16.mxu0 0
  %2001 = vmatpush1.bf16.msra.mxu0 0
  %2002 = vmatprep.subr.bf16.mxu0 0
  %2003 = vmatpush1.bf16.msra.mxu0 0
  %2004 = vmatprep.subr.bf16.mxu0 0
  %2005 = vmatpush1.bf16.msra.mxu0 0
  %2006 = vmatprep.mubr.bf16.mxu0 0
  %2007 = vmatmul.mubr.bf16.gmra.mrb[0].mxu0 %v1972
  %v2008 = vpop.f32.mrb[0].mxu0
  %v2009 = vadd.f32 %v1924, %v2008
  %v2010 = vpop.f32.mrb[0].mxu0
  %v2011 = vadd.f32 %v1928, %v2010
  %v2012 = vpop.f32.mrb[0].mxu0
  %v2013 = vadd.f32 %v1924, %v2012
  %v2014 = vpop.f32.mrb[0].mxu0
  %v2015 = vadd.f32 %v1928, %v2014
  %2016 = vdwg.mxu0
  %2018 = vrot.lane.b32.xlu0 %v2009, 64
  %v2019 = vpop.permute.xlu0 %2018
  %v2020 = vsel %vm166, %v2009, 0
  %v2022 = vsel %vm166, %v2019, 0
  %2024 = vmatprep.subr.mxu0 0.0
  %2025 = vmatpush1.xpose.msra.mxu0 %v2022
  %2026 = vmatprep.subr.mxu0 0.0
  %2027 = vmatpush1.xpose.msra.mxu0 0.0
  %2028 = vmatprep.subr.mxu0 0.0
  %2029 = vmatpush1.xpose.msra.mxu0 0.0
  %2030 = vmatprep.subr.mxu0 0.0
  %2031 = vmatpush1.xpose.msra.mxu0 0.0
  %2032 = vmatprep.subr.mxu0 0.0
  %2033 = vmatpush1.xpose.msra.mxu0 0.0
  %2034 = vmatprep.subr.mxu0 0.0
  %2035 = vmatpush1.xpose.msra.mxu0 0.0
  %2036 = vmatprep.subr.mxu0 0.0
  %2037 = vmatpush1.xpose.msra.mxu0 0.0
  %2038 = vmatprep.subr.mxu0 0.0
  %2039 = vmatpush1.xpose.msra.mxu0 0.0
  %2040 = vmatprep.subr.mxu0 0.0
  %2041 = vmatpush1.xpose.msra.mxu0 0.0
  %2042 = vmatprep.subr.mxu0 0.0
  %2043 = vmatpush1.xpose.msra.mxu0 0.0
  %2044 = vmatprep.subr.mxu0 0.0
  %2045 = vmatpush1.xpose.msra.mxu0 0.0
  %2046 = vmatprep.subr.mxu0 0.0
  %2047 = vmatpush1.xpose.msra.mxu0 0.0
  %2048 = vmatprep.subr.mxu0 0.0
  %2049 = vmatpush1.xpose.msra.mxu0 0.0
  %2050 = vmatprep.subr.mxu0 0.0
  %2051 = vmatpush1.xpose.msra.mxu0 0.0
  %2052 = vmatprep.subr.mxu0 0.0
  %2053 = vmatpush1.xpose.msra.mxu0 0.0
  %2054 = vmatprep.subr.mxu0 0.0
  %2055 = vmatpush1.xpose.msra.mxu0 0.0
  %2056 = vmatprep.subr.mxu0 0.0
  %2057 = vmatpush1.xpose.msra.mxu0 0.0
  %2058 = vmatprep.subr.mxu0 0.0
  %2059 = vmatpush1.xpose.msra.mxu0 0.0
  %2060 = vmatprep.subr.mxu0 0.0
  %2061 = vmatpush1.xpose.msra.mxu0 0.0
  %2062 = vmatprep.subr.mxu0 0.0
  %2063 = vmatpush1.xpose.msra.mxu0 0.0
  %2064 = vmatprep.subr.mxu0 0.0
  %2065 = vmatpush1.xpose.msra.mxu0 0.0
  %2066 = vmatprep.subr.mxu0 0.0
  %2067 = vmatpush1.xpose.msra.mxu0 0.0
  %2068 = vmatprep.subr.mxu0 0.0
  %2069 = vmatpush1.xpose.msra.mxu0 0.0
  %2070 = vmatprep.subr.mxu0 0.0
  %2071 = vmatpush1.xpose.msra.mxu0 0.0
  %2072 = vmatprep.subr.mxu0 0.0
  %2073 = vmatpush1.xpose.msra.mxu0 0.0
  %2074 = vmatprep.subr.mxu0 0.0
  %2075 = vmatpush1.xpose.msra.mxu0 0.0
  %2076 = vmatprep.subr.mxu0 0.0
  %2077 = vmatpush1.xpose.msra.mxu0 0.0
  %2078 = vmatprep.subr.mxu0 0.0
  %2079 = vmatpush1.xpose.msra.mxu0 0.0
  %2080 = vmatprep.subr.mxu0 0.0
  %2081 = vmatpush1.xpose.msra.mxu0 0.0
  %2082 = vmatprep.subr.mxu0 0.0
  %2083 = vmatpush1.xpose.msra.mxu0 0.0
  %2084 = vmatprep.subr.mxu0 0.0
  %2085 = vmatpush1.xpose.msra.mxu0 0.0
  %2086 = vmatprep.subr.mxu0 0.0
  %2087 = vmatpush1.xpose.msra.mxu0 0.0
  %2088 = vmatprep.mubr.f32.mxu0 0.0
  %2089 = vmatmul.mubr.f32.gmra.mrb[0].mxu0 %v2020
  %v2090 = vpop.f32.mrb[0].mxu0
  %v2091 = vadd.f32 %v162, %v2090
  %v2092 = vpop.f32.mrb[0].mxu0
  %2093 = vdwg.mxu0
  %v2094 = vsel %vm241, %v2091, -inf
  %2095 = vmax.xlane.f32.xlu0 %v2094
  %v2096 = vpop.xlane.xlu0 %2095
  %v2097 = vsub.f32 %v2091, %v2096
  %v2098 = vmul.f32 %v2097, 1.442695
  %v2099 = vpow.pop %v2098
  %v2100 = vsel %vm241, %v2099, 0.0
  %2101 = vadd.xlane.f32.xlu0 %v2100
  %v2102 = vpop.xlane.xlu0 %2101
  %v2103 = vrcp.pop %v2102
  %v2104 = vmul.f32 %v2099, %v2103
  %v2106 = vsel %vm241, %v2104, 0
  %2108 = vmatprep.subr.mxu0 0.0
  %2109 = vmatpush1.msra.mxu0 %v2011
  %2110 = vmatprep.subr.mxu0 0.0
  %2111 = vmatpush1.msra.mxu0 0.0
  %2112 = vmatprep.subr.mxu0 0.0
  %2113 = vmatpush1.msra.mxu0 0.0
  %2114 = vmatprep.subr.mxu0 0.0
  %2115 = vmatpush1.msra.mxu0 0.0
  %2116 = vmatprep.subr.mxu0 0.0
  %2117 = vmatpush1.msra.mxu0 0.0
  %2118 = vmatprep.subr.mxu0 0.0
  %2119 = vmatpush1.msra.mxu0 0.0
  %2120 = vmatprep.subr.mxu0 0.0
  %2121 = vmatpush1.msra.mxu0 0.0
  %2122 = vmatprep.subr.mxu0 0.0
  %2123 = vmatpush1.msra.mxu0 0.0
  %2124 = vmatprep.subr.mxu0 0.0
  %2125 = vmatpush1.msra.mxu0 0.0
  %2126 = vmatprep.subr.mxu0 0.0
  %2127 = vmatpush1.msra.mxu0 0.0
  %2128 = vmatprep.subr.mxu0 0.0
  %2129 = vmatpush1.msra.mxu0 0.0
  %2130 = vmatprep.subr.mxu0 0.0
  %2131 = vmatpush1.msra.mxu0 0.0
  %2132 = vmatprep.subr.mxu0 0.0
  %2133 = vmatpush1.msra.mxu0 0.0
  %2134 = vmatprep.subr.mxu0 0.0
  %2135 = vmatpush1.msra.mxu0 0.0
  %2136 = vmatprep.subr.mxu0 0.0
  %2137 = vmatpush1.msra.mxu0 0.0
  %2138 = vmatprep.subr.mxu0 0.0
  %2139 = vmatpush1.msra.mxu0 0.0
  %2140 = vmatprep.subr.mxu0 0.0
  %2141 = vmatpush1.msra.mxu0 0.0
  %2142 = vmatprep.subr.mxu0 0.0
  %2143 = vmatpush1.msra.mxu0 0.0
  %2144 = vmatprep.subr.mxu0 0.0
  %2145 = vmatpush1.msra.mxu0 0.0
  %2146 = vmatprep.subr.mxu0 0.0
  %2147 = vmatpush1.msra.mxu0 0.0
  %2148 = vmatprep.subr.mxu0 0.0
  %2149 = vmatpush1.msra.mxu0 0.0
  %2150 = vmatprep.subr.mxu0 0.0
  %2151 = vmatpush1.msra.mxu0 0.0
  %2152 = vmatprep.subr.mxu0 0.0
  %2153 = vmatpush1.msra.mxu0 0.0
  %2154 = vmatprep.subr.mxu0 0.0
  %2155 = vmatpush1.msra.mxu0 0.0
  %2156 = vmatprep.subr.mxu0 0.0
  %2157 = vmatpush1.msra.mxu0 0.0
  %2158 = vmatprep.subr.mxu0 0.0
  %2159 = vmatpush1.msra.mxu0 0.0
  %2160 = vmatprep.subr.mxu0 0.0
  %2161 = vmatpush1.msra.mxu0 0.0
  %2162 = vmatprep.subr.mxu0 0.0
  %2163 = vmatpush1.msra.mxu0 0.0
  %2164 = vmatprep.subr.mxu0 0.0
  %2165 = vmatpush1.msra.mxu0 0.0
  %2166 = vmatprep.subr.mxu0 0.0
  %2167 = vmatpush1.msra.mxu0 0.0
  %2168 = vmatprep.subr.mxu0 0.0
  %2169 = vmatpush1.msra.mxu0 0.0
  %2170 = vmatprep.subr.mxu0 0.0
  %2171 = vmatpush1.msra.mxu0 0.0
  %2172 = vmatprep.mubr.f32.mxu0 0.0
  %2173 = vmatmul.mubr.f32.gmra.mrb[0].mxu0 %v2106
  %v2174 = vpop.f32.mrb[0].mxu0
  %v2175 = vadd.f32 0.0, %v2174
  %v2176 = vpop.f32.mrb[0].mxu0
  %2177 = vdwg.mxu0
  %2178 = vrot.lane.b32.xlu0 %v2009, 112
  %v2179 = vpop.permute.xlu0 %2178
  %2180 = vrot.lane.b32.xlu0 %v2009, 48
  %v2181 = vpop.permute.xlu0 %2180
  %v2182 = vsel %vm166, %v2179, 0
  %v2184 = vsel %vm166, %v2181, 0
  %2186 = vmatprep.subr.mxu0 0.0
  %2187 = vmatpush1.xpose.msra.mxu0 %v2184
  %2188 = vmatprep.subr.mxu0 0.0
  %2189 = vmatpush1.xpose.msra.mxu0 0.0
  %2190 = vmatprep.subr.mxu0 0.0
  %2191 = vmatpush1.xpose.msra.mxu0 0.0
  %2192 = vmatprep.subr.mxu0 0.0
  %2193 = vmatpush1.xpose.msra.mxu0 0.0
  %2194 = vmatprep.subr.mxu0 0.0
  %2195 = vmatpush1.xpose.msra.mxu0 0.0
  %2196 = vmatprep.subr.mxu0 0.0
  %2197 = vmatpush1.xpose.msra.mxu0 0.0
  %2198 = vmatprep.subr.mxu0 0.0
  %2199 = vmatpush1.xpose.msra.mxu0 0.0
  %2200 = vmatprep.subr.mxu0 0.0
  %2201 = vmatpush1.xpose.msra.mxu0 0.0
  %2202 = vmatprep.subr.mxu0 0.0
  %2203 = vmatpush1.xpose.msra.mxu0 0.0
  %2204 = vmatprep.subr.mxu0 0.0
  %2205 = vmatpush1.xpose.msra.mxu0 0.0
  %2206 = vmatprep.subr.mxu0 0.0
  %2207 = vmatpush1.xpose.msra.mxu0 0.0
  %2208 = vmatprep.subr.mxu0 0.0
  %2209 = vmatpush1.xpose.msra.mxu0 0.0
  %2210 = vmatprep.subr.mxu0 0.0
  %2211 = vmatpush1.xpose.msra.mxu0 0.0
  %2212 = vmatprep.subr.mxu0 0.0
  %2213 = vmatpush1.xpose.msra.mxu0 0.0
  %2214 = vmatprep.subr.mxu0 0.0
  %2215 = vmatpush1.xpose.msra.mxu0 0.0
  %2216 = vmatprep.subr.mxu0 0.0
  %2217 = vmatpush1.xpose.msra.mxu0 0.0
  %2218 = vmatprep.subr.mxu0 0.0
  %2219 = vmatpush1.xpose.msra.mxu0 0.0
  %2220 = vmatprep.subr.mxu0 0.0
  %2221 = vmatpush1.xpose.msra.mxu0 0.0
  %2222 = vmatprep.subr.mxu0 0.0
  %2223 = vmatpush1.xpose.msra.mxu0 0.0
  %2224 = vmatprep.subr.mxu0 0.0
  %2225 = vmatpush1.xpose.msra.mxu0 0.0
  %2226 = vmatprep.subr.mxu0 0.0
  %2227 = vmatpush1.xpose.msra.mxu0 0.0
  %2228 = vmatprep.subr.mxu0 0.0
  %2229 = vmatpush1.xpose.msra.mxu0 0.0
  %2230 = vmatprep.subr.mxu0 0.0
  %2231 = vmatpush1.xpose.msra.mxu0 0.0
  %2232 = vmatprep.subr.mxu0 0.0
  %2233 = vmatpush1.xpose.msra.mxu0 0.0
  %2234 = vmatprep.subr.mxu0 0.0
  %2235 = vmatpush1.xpose.msra.mxu0 0.0
  %2236 = vmatprep.subr.mxu0 0.0
  %2237 = vmatpush1.xpose.msra.mxu0 0.0
  %2238 = vmatprep.subr.mxu0 0.0
  %2239 = vmatpush1.xpose.msra.mxu0 0.0
  %2240 = vmatprep.subr.mxu0 0.0
  %2241 = vmatpush1.xpose.msra.mxu0 0.0
  %2242 = vmatprep.subr.mxu0 0.0
  %2243 = vmatpush1.xpose.msra.mxu0 0.0
  %2244 = vmatprep.subr.mxu0 0.0
  %2245 = vmatpush1.xpose.msra.mxu0 0.0
  %2246 = vmatprep.subr.mxu0 0.0
  %2247 = vmatpush1.xpose.msra.mxu0 0.0
  %2248 = vmatprep.subr.mxu0 0.0
  %2249 = vmatpush1.xpose.msra.mxu0 0.0
  %2250 = vmatprep.mubr.f32.mxu0 0.0
  %2251 = vmatmul.mubr.f32.gmra.mrb[0].mxu0 %v2182
  %v2252 = vpop.f32.mrb[0].mxu0
  %v2253 = vadd.f32 %v162, %v2252
  %v2254 = vpop.f32.mrb[0].mxu0
  %2255 = vdwg.mxu0
  %v2256 = vsel %vm241, %v2253, -inf
  %2257 = vmax.xlane.f32.xlu0 %v2256
  %v2258 = vpop.xlane.xlu0 %2257
  %v2259 = vsub.f32 %v2253, %v2258
  %v2260 = vmul.f32 %v2259, 1.442695
  %v2261 = vpow.pop %v2260
  %v2262 = vsel %vm241, %v2261, 0.0
  %2263 = vadd.xlane.f32.xlu0 %v2262
  %v2264 = vpop.xlane.xlu0 %2263
  %v2265 = vrcp.pop %v2264
  %v2266 = vmul.f32 %v2261, %v2265
  %2268 = vrot.lane.b32.xlu0 %v2011, 112
  %v2269 = vpop.permute.xlu0 %2268
  %v2272 = vsel %vm241, %v2266, 0
  %2274 = vmatprep.subr.mxu0 0.0
  %2275 = vmatpush1.msra.mxu0 %v2269
  %2276 = vmatprep.subr.mxu0 0.0
  %2277 = vmatpush1.msra.mxu0 0.0
  %2278 = vmatprep.subr.mxu0 0.0
  %2279 = vmatpush1.msra.mxu0 0.0
  %2280 = vmatprep.subr.mxu0 0.0
  %2281 = vmatpush1.msra.mxu0 0.0
  %2282 = vmatprep.subr.mxu0 0.0
  %2283 = vmatpush1.msra.mxu0 0.0
  %2284 = vmatprep.subr.mxu0 0.0
  %2285 = vmatpush1.msra.mxu0 0.0
  %2286 = vmatprep.subr.mxu0 0.0
  %2287 = vmatpush1.msra.mxu0 0.0
  %2288 = vmatprep.subr.mxu0 0.0
  %2289 = vmatpush1.msra.mxu0 0.0
  %2290 = vmatprep.subr.mxu0 0.0
  %2291 = vmatpush1.msra.mxu0 0.0
  %2292 = vmatprep.subr.mxu0 0.0
  %2293 = vmatpush1.msra.mxu0 0.0
  %2294 = vmatprep.subr.mxu0 0.0
  %2295 = vmatpush1.msra.mxu0 0.0
  %2296 = vmatprep.subr.mxu0 0.0
  %2297 = vmatpush1.msra.mxu0 0.0
  %2298 = vmatprep.subr.mxu0 0.0
  %2299 = vmatpush1.msra.mxu0 0.0
  %2300 = vmatprep.subr.mxu0 0.0
  %2301 = vmatpush1.msra.mxu0 0.0
  %2302 = vmatprep.subr.mxu0 0.0
  %2303 = vmatpush1.msra.mxu0 0.0
  %2304 = vmatprep.subr.mxu0 0.0
  %2305 = vmatpush1.msra.mxu0 0.0
  %2306 = vmatprep.subr.mxu0 0.0
  %2307 = vmatpush1.msra.mxu0 0.0
  %2308 = vmatprep.subr.mxu0 0.0
  %2309 = vmatpush1.msra.mxu0 0.0
  %2310 = vmatprep.subr.mxu0 0.0
  %2311 = vmatpush1.msra.mxu0 0.0
  %2312 = vmatprep.subr.mxu0 0.0
  %2313 = vmatpush1.msra.mxu0 0.0
  %2314 = vmatprep.subr.mxu0 0.0
  %2315 = vmatpush1.msra.mxu0 0.0
  %2316 = vmatprep.subr.mxu0 0.0
  %2317 = vmatpush1.msra.mxu0 0.0
  %2318 = vmatprep.subr.mxu0 0.0
  %2319 = vmatpush1.msra.mxu0 0.0
  %2320 = vmatprep.subr.mxu0 0.0
  %2321 = vmatpush1.msra.mxu0 0.0
  %2322 = vmatprep.subr.mxu0 0.0
  %2323 = vmatpush1.msra.mxu0 0.0
  %2324 = vmatprep.subr.mxu0 0.0
  %2325 = vmatpush1.msra.mxu0 0.0
  %2326 = vmatprep.subr.mxu0 0.0
  %2327 = vmatpush1.msra.mxu0 0.0
  %2328 = vmatprep.subr.mxu0 0.0
  %2329 = vmatpush1.msra.mxu0 0.0
  %2330 = vmatprep.subr.mxu0 0.0
  %2331 = vmatpush1.msra.mxu0 0.0
  %2332 = vmatprep.subr.mxu0 0.0
  %2333 = vmatpush1.msra.mxu0 0.0
  %2334 = vmatprep.subr.mxu0 0.0
  %2335 = vmatpush1.msra.mxu0 0.0
  %2336 = vmatprep.subr.mxu0 0.0
  %2337 = vmatpush1.msra.mxu0 0.0
  %2338 = vmatprep.mubr.f32.mxu0 0.0
  %2339 = vmatmul.mubr.f32.gmra.mrb[0].mxu0 %v2272
  %v2340 = vpop.f32.mrb[0].mxu0
  %v2341 = vadd.f32 0.0, %v2340
  %v2342 = vpop.f32.mrb[0].mxu0
  %2343 = vdwg.mxu0
  %2344 = vrot.lane.b32.xlu0 %v2009, 96
  %v2345 = vpop.permute.xlu0 %2344
  %2346 = vrot.lane.b32.xlu0 %v2009, 32
  %v2347 = vpop.permute.xlu0 %2346
  %v2348 = vsel %vm166, %v2345, 0
  %v2350 = vsel %vm166, %v2347, 0
  %2352 = vmatprep.subr.mxu0 0.0
  %2353 = vmatpush1.xpose.msra.mxu0 %v2350
  %2354 = vmatprep.subr.mxu0 0.0
  %2355 = vmatpush1.xpose.msra.mxu0 0.0
  %2356 = vmatprep.subr.mxu0 0.0
  %2357 = vmatpush1.xpose.msra.mxu0 0.0
  %2358 = vmatprep.subr.mxu0 0.0
  %2359 = vmatpush1.xpose.msra.mxu0 0.0
  %2360 = vmatprep.subr.mxu0 0.0
  %2361 = vmatpush1.xpose.msra.mxu0 0.0
  %2362 = vmatprep.subr.mxu0 0.0
  %2363 = vmatpush1.xpose.msra.mxu0 0.0
  %2364 = vmatprep.subr.mxu0 0.0
  %2365 = vmatpush1.xpose.msra.mxu0 0.0
  %2366 = vmatprep.subr.mxu0 0.0
  %2367 = vmatpush1.xpose.msra.mxu0 0.0
  %2368 = vmatprep.subr.mxu0 0.0
  %2369 = vmatpush1.xpose.msra.mxu0 0.0
  %2370 = vmatprep.subr.mxu0 0.0
  %2371 = vmatpush1.xpose.msra.mxu0 0.0
  %2372 = vmatprep.subr.mxu0 0.0
  %2373 = vmatpush1.xpose.msra.mxu0 0.0
  %2374 = vmatprep.subr.mxu0 0.0
  %2375 = vmatpush1.xpose.msra.mxu0 0.0
  %2376 = vmatprep.subr.mxu0 0.0
  %2377 = vmatpush1.xpose.msra.mxu0 0.0
  %2378 = vmatprep.subr.mxu0 0.0
  %2379 = vmatpush1.xpose.msra.mxu0 0.0
  %2380 = vmatprep.subr.mxu0 0.0
  %2381 = vmatpush1.xpose.msra.mxu0 0.0
  %2382 = vmatprep.subr.mxu0 0.0
  %2383 = vmatpush1.xpose.msra.mxu0 0.0
  %2384 = vmatprep.subr.mxu0 0.0
  %2385 = vmatpush1.xpose.msra.mxu0 0.0
  %2386 = vmatprep.subr.mxu0 0.0
  %2387 = vmatpush1.xpose.msra.mxu0 0.0
  %2388 = vmatprep.subr.mxu0 0.0
  %2389 = vmatpush1.xpose.msra.mxu0 0.0
  %2390 = vmatprep.subr.mxu0 0.0
  %2391 = vmatpush1.xpose.msra.mxu0 0.0
  %2392 = vmatprep.subr.mxu0 0.0
  %2393 = vmatpush1.xpose.msra.mxu0 0.0
  %2394 = vmatprep.subr.mxu0 0.0
  %2395 = vmatpush1.xpose.msra.mxu0 0.0
  %2396 = vmatprep.subr.mxu0 0.0
  %2397 = vmatpush1.xpose.msra.mxu0 0.0
  %2398 = vmatprep.subr.mxu0 0.0
  %2399 = vmatpush1.xpose.msra.mxu0 0.0
  %2400 = vmatprep.subr.mxu0 0.0
  %2401 = vmatpush1.xpose.msra.mxu0 0.0
  %2402 = vmatprep.subr.mxu0 0.0
  %2403 = vmatpush1.xpose.msra.mxu0 0.0
  %2404 = vmatprep.subr.mxu0 0.0
  %2405 = vmatpush1.xpose.msra.mxu0 0.0
  %2406 = vmatprep.subr.mxu0 0.0
  %2407 = vmatpush1.xpose.msra.mxu0 0.0
  %2408 = vmatprep.subr.mxu0 0.0
  %2409 = vmatpush1.xpose.msra.mxu0 0.0
  %2410 = vmatprep.subr.mxu0 0.0
  %2411 = vmatpush1.xpose.msra.mxu0 0.0
  %2412 = vmatprep.subr.mxu0 0.0
  %2413 = vmatpush1.xpose.msra.mxu0 0.0
  %2414 = vmatprep.subr.mxu0 0.0
  %2415 = vmatpush1.xpose.msra.mxu0 0.0
  %2416 = vmatprep.mubr.f32.mxu0 0.0
  %2417 = vmatmul.mubr.f32.gmra.mrb[0].mxu0 %v2348
  %v2418 = vpop.f32.mrb[0].mxu0
  %v2419 = vadd.f32 %v162, %v2418
  %v2420 = vpop.f32.mrb[0].mxu0
  %2421 = vdwg.mxu0
  %v2422 = vsel %vm241, %v2419, -inf
  %2423 = vmax.xlane.f32.xlu0 %v2422
  %v2424 = vpop.xlane.xlu0 %2423
  %v2425 = vsub.f32 %v2419, %v2424
  %v2426 = vmul.f32 %v2425, 1.442695
  %v2427 = vpow.pop %v2426
  %v2428 = vsel %vm241, %v2427, 0.0
  %2429 = vadd.xlane.f32.xlu0 %v2428
  %v2430 = vpop.xlane.xlu0 %2429
  %v2431 = vrcp.pop %v2430
  %v2432 = vmul.f32 %v2427, %v2431
  %2433 = vrot.lane.b32.xlu0 %v2011, 96
  %v2434 = vpop.permute.xlu0 %2433
  %v2437 = vsel %vm241, %v2432, 0
  %2439 = vmatprep.subr.mxu0 0.0
  %2440 = vmatpush1.msra.mxu0 %v2434
  %2441 = vmatprep.subr.mxu0 0.0
  %2442 = vmatpush1.msra.mxu0 0.0
  %2443 = vmatprep.subr.mxu0 0.0
  %2444 = vmatpush1.msra.mxu0 0.0
  %2445 = vmatprep.subr.mxu0 0.0
  %2446 = vmatpush1.msra.mxu0 0.0
  %2447 = vmatprep.subr.mxu0 0.0
  %2448 = vmatpush1.msra.mxu0 0.0
  %2449 = vmatprep.subr.mxu0 0.0
  %2450 = vmatpush1.msra.mxu0 0.0
  %2451 = vmatprep.subr.mxu0 0.0
  %2452 = vmatpush1.msra.mxu0 0.0
  %2453 = vmatprep.subr.mxu0 0.0
  %2454 = vmatpush1.msra.mxu0 0.0
  %2455 = vmatprep.subr.mxu0 0.0
  %2456 = vmatpush1.msra.mxu0 0.0
  %2457 = vmatprep.subr.mxu0 0.0
  %2458 = vmatpush1.msra.mxu0 0.0
  %2459 = vmatprep.subr.mxu0 0.0
  %2460 = vmatpush1.msra.mxu0 0.0
  %2461 = vmatprep.subr.mxu0 0.0
  %2462 = vmatpush1.msra.mxu0 0.0
  %2463 = vmatprep.subr.mxu0 0.0
  %2464 = vmatpush1.msra.mxu0 0.0
  %2465 = vmatprep.subr.mxu0 0.0
  %2466 = vmatpush1.msra.mxu0 0.0
  %2467 = vmatprep.subr.mxu0 0.0
  %2468 = vmatpush1.msra.mxu0 0.0
  %2469 = vmatprep.subr.mxu0 0.0
  %2470 = vmatpush1.msra.mxu0 0.0
  %2471 = vmatprep.subr.mxu0 0.0
  %2472 = vmatpush1.msra.mxu0 0.0
  %2473 = vmatprep.subr.mxu0 0.0
  %2474 = vmatpush1.msra.mxu0 0.0
  %2475 = vmatprep.subr.mxu0 0.0
  %2476 = vmatpush1.msra.mxu0 0.0
  %2477 = vmatprep.subr.mxu0 0.0
  %2478 = vmatpush1.msra.mxu0 0.0
  %2479 = vmatprep.subr.mxu0 0.0
  %2480 = vmatpush1.msra.mxu0 0.0
  %2481 = vmatprep.subr.mxu0 0.0
  %2482 = vmatpush1.msra.mxu0 0.0
  %2483 = vmatprep.subr.mxu0 0.0
  %2484 = vmatpush1.msra.mxu0 0.0
  %2485 = vmatprep.subr.mxu0 0.0
  %2486 = vmatpush1.msra.mxu0 0.0
  %2487 = vmatprep.subr.mxu0 0.0
  %2488 = vmatpush1.msra.mxu0 0.0
  %2489 = vmatprep.subr.mxu0 0.0
  %2490 = vmatpush1.msra.mxu0 0.0
  %2491 = vmatprep.subr.mxu0 0.0
  %2492 = vmatpush1.msra.mxu0 0.0
  %2493 = vmatprep.subr.mxu0 0.0
  %2494 = vmatpush1.msra.mxu0 0.0
  %2495 = vmatprep.subr.mxu0 0.0
  %2496 = vmatpush1.msra.mxu0 0.0
  %2497 = vmatprep.subr.mxu0 0.0
  %2498 = vmatpush1.msra.mxu0 0.0
  %2499 = vmatprep.subr.mxu0 0.0
  %2500 = vmatpush1.msra.mxu0 0.0
  %2501 = vmatprep.subr.mxu0 0.0
  %2502 = vmatpush1.msra.mxu0 0.0
  %2503 = vmatprep.mubr.f32.mxu0 0.0
  %2504 = vmatmul.mubr.f32.gmra.mrb[0].mxu0 %v2437
  %v2505 = vpop.f32.mrb[0].mxu0
  %v2506 = vadd.f32 0.0, %v2505
  %v2507 = vpop.f32.mrb[0].mxu0
  %2508 = vdwg.mxu0
  %2509 = vrot.lane.b32.xlu0 %v2009, 80
  %v2510 = vpop.permute.xlu0 %2509
  %2511 = vrot.lane.b32.xlu0 %v2009, 16
  %v2512 = vpop.permute.xlu0 %2511
  %v2513 = vsel %vm166, %v2510, 0
  %v2515 = vsel %vm166, %v2512, 0
  %2517 = vmatprep.subr.mxu0 0.0
  %2518 = vmatpush1.xpose.msra.mxu0 %v2515
  %2519 = vmatprep.subr.mxu0 0.0
  %2520 = vmatpush1.xpose.msra.mxu0 0.0
  %2521 = vmatprep.subr.mxu0 0.0
  %2522 = vmatpush1.xpose.msra.mxu0 0.0
  %2523 = vmatprep.subr.mxu0 0.0
  %2524 = vmatpush1.xpose.msra.mxu0 0.0
  %2525 = vmatprep.subr.mxu0 0.0
  %2526 = vmatpush1.xpose.msra.mxu0 0.0
  %2527 = vmatprep.subr.mxu0 0.0
  %2528 = vmatpush1.xpose.msra.mxu0 0.0
  %2529 = vmatprep.subr.mxu0 0.0
  %2530 = vmatpush1.xpose.msra.mxu0 0.0
  %2531 = vmatprep.subr.mxu0 0.0
  %2532 = vmatpush1.xpose.msra.mxu0 0.0
  %2533 = vmatprep.subr.mxu0 0.0
  %2534 = vmatpush1.xpose.msra.mxu0 0.0
  %2535 = vmatprep.subr.mxu0 0.0
  %2536 = vmatpush1.xpose.msra.mxu0 0.0
  %2537 = vmatprep.subr.mxu0 0.0
  %2538 = vmatpush1.xpose.msra.mxu0 0.0
  %2539 = vmatprep.subr.mxu0 0.0
  %2540 = vmatpush1.xpose.msra.mxu0 0.0
  %2541 = vmatprep.subr.mxu0 0.0
  %2542 = vmatpush1.xpose.msra.mxu0 0.0
  %2543 = vmatprep.subr.mxu0 0.0
  %2544 = vmatpush1.xpose.msra.mxu0 0.0
  %2545 = vmatprep.subr.mxu0 0.0
  %2546 = vmatpush1.xpose.msra.mxu0 0.0
  %2547 = vmatprep.subr.mxu0 0.0
  %2548 = vmatpush1.xpose.msra.mxu0 0.0
  %2549 = vmatprep.subr.mxu0 0.0
  %2550 = vmatpush1.xpose.msra.mxu0 0.0
  %2551 = vmatprep.subr.mxu0 0.0
  %2552 = vmatpush1.xpose.msra.mxu0 0.0
  %2553 = vmatprep.subr.mxu0 0.0
  %2554 = vmatpush1.xpose.msra.mxu0 0.0
  %2555 = vmatprep.subr.mxu0 0.0
  %2556 = vmatpush1.xpose.msra.mxu0 0.0
  %2557 = vmatprep.subr.mxu0 0.0
  %2558 = vmatpush1.xpose.msra.mxu0 0.0
  %2559 = vmatprep.subr.mxu0 0.0
  %2560 = vmatpush1.xpose.msra.mxu0 0.0
  %2561 = vmatprep.subr.mxu0 0.0
  %2562 = vmatpush1.xpose.msra.mxu0 0.0
  %2563 = vmatprep.subr.mxu0 0.0
  %2564 = vmatpush1.xpose.msra.mxu0 0.0
  %2565 = vmatprep.subr.mxu0 0.0
  %2566 = vmatpush1.xpose.msra.mxu0 0.0
  %2567 = vmatprep.subr.mxu0 0.0
  %2568 = vmatpush1.xpose.msra.mxu0 0.0
  %2569 = vmatprep.subr.mxu0 0.0
  %2570 = vmatpush1.xpose.msra.mxu0 0.0
  %2571 = vmatprep.subr.mxu0 0.0
  %2572 = vmatpush1.xpose.msra.mxu0 0.0
  %2573 = vmatprep.subr.mxu0 0.0
  %2574 = vmatpush1.xpose.msra.mxu0 0.0
  %2575 = vmatprep.subr.mxu0 0.0
  %2576 = vmatpush1.xpose.msra.mxu0 0.0
  %2577 = vmatprep.subr.mxu0 0.0
  %2578 = vmatpush1.xpose.msra.mxu0 0.0
  %2579 = vmatprep.subr.mxu0 0.0
  %2580 = vmatpush1.xpose.msra.mxu0 0.0
  %2581 = vmatprep.mubr.f32.mxu0 0.0
  %2582 = vmatmul.mubr.f32.gmra.mrb[0].mxu0 %v2513
  %v2583 = vpop.f32.mrb[0].mxu0
  %v2584 = vadd.f32 %v162, %v2583
  %v2585 = vpop.f32.mrb[0].mxu0
  %2586 = vdwg.mxu0
  %v2587 = vsel %vm241, %v2584, -inf
  %2588 = vmax.xlane.f32.xlu0 %v2587
  %v2589 = vpop.xlane.xlu0 %2588
  %v2590 = vsub.f32 %v2584, %v2589
  %v2591 = vmul.f32 %v2590, 1.442695
  %v2592 = vpow.pop %v2591
  %v2593 = vsel %vm241, %v2592, 0.0
  %2594 = vadd.xlane.f32.xlu0 %v2593
  %v2595 = vpop.xlane.xlu0 %2594
  %v2596 = vrcp.pop %v2595
  %v2597 = vmul.f32 %v2592, %v2596
  %2598 = vrot.lane.b32.xlu0 %v2011, 80
  %v2599 = vpop.permute.xlu0 %2598
  %v2602 = vsel %vm241, %v2597, 0
  %2604 = vmatprep.subr.mxu0 0.0
  %2605 = vmatpush1.msra.mxu0 %v2599
  %2606 = vmatprep.subr.mxu0 0.0
  %2607 = vmatpush1.msra.mxu0 0.0
  %2608 = vmatprep.subr.mxu0 0.0
  %2609 = vmatpush1.msra.mxu0 0.0
  %2610 = vmatprep.subr.mxu0 0.0
  %2611 = vmatpush1.msra.mxu0 0.0
  %2612 = vmatprep.subr.mxu0 0.0
  %2613 = vmatpush1.msra.mxu0 0.0
  %2614 = vmatprep.subr.mxu0 0.0
  %2615 = vmatpush1.msra.mxu0 0.0
  %2616 = vmatprep.subr.mxu0 0.0
  %2617 = vmatpush1.msra.mxu0 0.0
  %2618 = vmatprep.subr.mxu0 0.0
  %2619 = vmatpush1.msra.mxu0 0.0
  %2620 = vmatprep.subr.mxu0 0.0
  %2621 = vmatpush1.msra.mxu0 0.0
  %2622 = vmatprep.subr.mxu0 0.0
  %2623 = vmatpush1.msra.mxu0 0.0
  %2624 = vmatprep.subr.mxu0 0.0
  %2625 = vmatpush1.msra.mxu0 0.0
  %2626 = vmatprep.subr.mxu0 0.0
  %2627 = vmatpush1.msra.mxu0 0.0
  %2628 = vmatprep.subr.mxu0 0.0
  %2629 = vmatpush1.msra.mxu0 0.0
  %2630 = vmatprep.subr.mxu0 0.0
  %2631 = vmatpush1.msra.mxu0 0.0
  %2632 = vmatprep.subr.mxu0 0.0
  %2633 = vmatpush1.msra.mxu0 0.0
  %2634 = vmatprep.subr.mxu0 0.0
  %2635 = vmatpush1.msra.mxu0 0.0
  %2636 = vmatprep.subr.mxu0 0.0
  %2637 = vmatpush1.msra.mxu0 0.0
  %2638 = vmatprep.subr.mxu0 0.0
  %2639 = vmatpush1.msra.mxu0 0.0
  %2640 = vmatprep.subr.mxu0 0.0
  %2641 = vmatpush1.msra.mxu0 0.0
  %2642 = vmatprep.subr.mxu0 0.0
  %2643 = vmatpush1.msra.mxu0 0.0
  %2644 = vmatprep.subr.mxu0 0.0
  %2645 = vmatpush1.msra.mxu0 0.0
  %2646 = vmatprep.subr.mxu0 0.0
  %2647 = vmatpush1.msra.mxu0 0.0
  %2648 = vmatprep.subr.mxu0 0.0
  %2649 = vmatpush1.msra.mxu0 0.0
  %2650 = vmatprep.subr.mxu0 0.0
  %2651 = vmatpush1.msra.mxu0 0.0
  %2652 = vmatprep.subr.mxu0 0.0
  %2653 = vmatpush1.msra.mxu0 0.0
  %2654 = vmatprep.subr.mxu0 0.0
  %2655 = vmatpush1.msra.mxu0 0.0
  %2656 = vmatprep.subr.mxu0 0.0
  %2657 = vmatpush1.msra.mxu0 0.0
  %2658 = vmatprep.subr.mxu0 0.0
  %2659 = vmatpush1.msra.mxu0 0.0
  %2660 = vmatprep.subr.mxu0 0.0
  %2661 = vmatpush1.msra.mxu0 0.0
  %2662 = vmatprep.subr.mxu0 0.0
  %2663 = vmatpush1.msra.mxu0 0.0
  %2664 = vmatprep.subr.mxu0 0.0
  %2665 = vmatpush1.msra.mxu0 0.0
  %2666 = vmatprep.subr.mxu0 0.0
  %2667 = vmatpush1.msra.mxu0 0.0
  %2668 = vmatprep.mubr.f32.mxu0 0.0
  %2669 = vmatmul.mubr.f32.gmra.mrb[0].mxu0 %v2602
  %v2670 = vpop.f32.mrb[0].mxu0
  %v2671 = vadd.f32 0.0, %v2670
  %v2672 = vpop.f32.mrb[0].mxu0
  %2673 = vdwg.mxu0
  %2675 = vrot.lane.b32.xlu0 %v2341, 16
  %v2676 = vpop.permute.xlu0 %2675
  %2679 = vrot.lane.b32.xlu0 %v2506, 32
  %v2680 = vpop.permute.xlu0 %2679
  %2683 = vrot.lane.b32.xlu0 %v2671, 48
  %v2684 = vpop.permute.xlu0 %2683
  %v2686 = vsel %vm166, %v2175, %v2676
  %v2687 = vsel %vm835, %v2686, %v2680
  %v2688 = vsel %vm837, %v2687, %v2684
  %2690 = vrot.lane.b32.xlu0 %v2013, 64
  %v2691 = vpop.permute.xlu0 %2690
  %v2692 = vsel %vm166, %v2013, 0
  %v2694 = vsel %vm166, %v2691, 0
  %2696 = vmatprep.subr.mxu0 0.0
  %2697 = vmatpush1.xpose.msra.mxu0 %v2694
  %2698 = vmatprep.subr.mxu0 0.0
  %2699 = vmatpush1.xpose.msra.mxu0 0.0
  %2700 = vmatprep.subr.mxu0 0.0
  %2701 = vmatpush1.xpose.msra.mxu0 0.0
  %2702 = vmatprep.subr.mxu0 0.0
  %2703 = vmatpush1.xpose.msra.mxu0 0.0
  %2704 = vmatprep.subr.mxu0 0.0
  %2705 = vmatpush1.xpose.msra.mxu0 0.0
  %2706 = vmatprep.subr.mxu0 0.0
  %2707 = vmatpush1.xpose.msra.mxu0 0.0
  %2708 = vmatprep.subr.mxu0 0.0
  %2709 = vmatpush1.xpose.msra.mxu0 0.0
  %2710 = vmatprep.subr.mxu0 0.0
  %2711 = vmatpush1.xpose.msra.mxu0 0.0
  %2712 = vmatprep.subr.mxu0 0.0
  %2713 = vmatpush1.xpose.msra.mxu0 0.0
  %2714 = vmatprep.subr.mxu0 0.0
  %2715 = vmatpush1.xpose.msra.mxu0 0.0
  %2716 = vmatprep.subr.mxu0 0.0
  %2717 = vmatpush1.xpose.msra.mxu0 0.0
  %2718 = vmatprep.subr.mxu0 0.0
  %2719 = vmatpush1.xpose.msra.mxu0 0.0
  %2720 = vmatprep.subr.mxu0 0.0
  %2721 = vmatpush1.xpose.msra.mxu0 0.0
  %2722 = vmatprep.subr.mxu0 0.0
  %2723 = vmatpush1.xpose.msra.mxu0 0.0
  %2724 = vmatprep.subr.mxu0 0.0
  %2725 = vmatpush1.xpose.msra.mxu0 0.0
  %2726 = vmatprep.subr.mxu0 0.0
  %2727 = vmatpush1.xpose.msra.mxu0 0.0
  %2728 = vmatprep.subr.mxu0 0.0
  %2729 = vmatpush1.xpose.msra.mxu0 0.0
  %2730 = vmatprep.subr.mxu0 0.0
  %2731 = vmatpush1.xpose.msra.mxu0 0.0
  %2732 = vmatprep.subr.mxu0 0.0
  %2733 = vmatpush1.xpose.msra.mxu0 0.0
  %2734 = vmatprep.subr.mxu0 0.0
  %2735 = vmatpush1.xpose.msra.mxu0 0.0
  %2736 = vmatprep.subr.mxu0 0.0
  %2737 = vmatpush1.xpose.msra.mxu0 0.0
  %2738 = vmatprep.subr.mxu0 0.0
  %2739 = vmatpush1.xpose.msra.mxu0 0.0
  %2740 = vmatprep.subr.mxu0 0.0
  %2741 = vmatpush1.xpose.msra.mxu0 0.0
  %2742 = vmatprep.subr.mxu0 0.0
  %2743 = vmatpush1.xpose.msra.mxu0 0.0
  %2744 = vmatprep.subr.mxu0 0.0
  %2745 = vmatpush1.xpose.msra.mxu0 0.0
  %2746 = vmatprep.subr.mxu0 0.0
  %2747 = vmatpush1.xpose.msra.mxu0 0.0
  %2748 = vmatprep.subr.mxu0 0.0
  %2749 = vmatpush1.xpose.msra.mxu0 0.0
  %2750 = vmatprep.subr.mxu0 0.0
  %2751 = vmatpush1.xpose.msra.mxu0 0.0
  %2752 = vmatprep.subr.mxu0 0.0
  %2753 = vmatpush1.xpose.msra.mxu0 0.0
  %2754 = vmatprep.subr.mxu0 0.0
  %2755 = vmatpush1.xpose.msra.mxu0 0.0
  %2756 = vmatprep.subr.mxu0 0.0
  %2757 = vmatpush1.xpose.msra.mxu0 0.0
  %2758 = vmatprep.subr.mxu0 0.0
  %2759 = vmatpush1.xpose.msra.mxu0 0.0
  %2760 = vmatprep.mubr.f32.mxu0 0.0
  %2761 = vmatmul.mubr.f32.gmra.mrb[0].mxu0 %v2692
  %v2762 = vpop.f32.mrb[0].mxu0
  %v2763 = vadd.f32 %v843, %v2762
  %v2764 = vpop.f32.mrb[0].mxu0
  %2765 = vdwg.mxu0
  %v2766 = vsel %vm241, %v2763, -inf
  %2767 = vmax.xlane.f32.xlu0 %v2766
  %v2768 = vpop.xlane.xlu0 %2767
  %v2769 = vsub.f32 %v2763, %v2768
  %v2770 = vmul.f32 %v2769, 1.442695
  %v2771 = vpow.pop %v2770
  %v2772 = vsel %vm241, %v2771, 0.0
  %2773 = vadd.xlane.f32.xlu0 %v2772
  %v2774 = vpop.xlane.xlu0 %2773
  %v2775 = vrcp.pop %v2774
  %v2776 = vmul.f32 %v2771, %v2775
  %v2778 = vsel %vm241, %v2776, 0
  %2780 = vmatprep.subr.mxu0 0.0
  %2781 = vmatpush1.msra.mxu0 %v2015
  %2782 = vmatprep.subr.mxu0 0.0
  %2783 = vmatpush1.msra.mxu0 0.0
  %2784 = vmatprep.subr.mxu0 0.0
  %2785 = vmatpush1.msra.mxu0 0.0
  %2786 = vmatprep.subr.mxu0 0.0
  %2787 = vmatpush1.msra.mxu0 0.0
  %2788 = vmatprep.subr.mxu0 0.0
  %2789 = vmatpush1.msra.mxu0 0.0
  %2790 = vmatprep.subr.mxu0 0.0
  %2791 = vmatpush1.msra.mxu0 0.0
  %2792 = vmatprep.subr.mxu0 0.0
  %2793 = vmatpush1.msra.mxu0 0.0
  %2794 = vmatprep.subr.mxu0 0.0
  %2795 = vmatpush1.msra.mxu0 0.0
  %2796 = vmatprep.subr.mxu0 0.0
  %2797 = vmatpush1.msra.mxu0 0.0
  %2798 = vmatprep.subr.mxu0 0.0
  %2799 = vmatpush1.msra.mxu0 0.0
  %2800 = vmatprep.subr.mxu0 0.0
  %2801 = vmatpush1.msra.mxu0 0.0
  %2802 = vmatprep.subr.mxu0 0.0
  %2803 = vmatpush1.msra.mxu0 0.0
  %2804 = vmatprep.subr.mxu0 0.0
  %2805 = vmatpush1.msra.mxu0 0.0
  %2806 = vmatprep.subr.mxu0 0.0
  %2807 = vmatpush1.msra.mxu0 0.0
  %2808 = vmatprep.subr.mxu0 0.0
  %2809 = vmatpush1.msra.mxu0 0.0
  %2810 = vmatprep.subr.mxu0 0.0
  %2811 = vmatpush1.msra.mxu0 0.0
  %2812 = vmatprep.subr.mxu0 0.0
  %2813 = vmatpush1.msra.mxu0 0.0
  %2814 = vmatprep.subr.mxu0 0.0
  %2815 = vmatpush1.msra.mxu0 0.0
  %2816 = vmatprep.subr.mxu0 0.0
  %2817 = vmatpush1.msra.mxu0 0.0
  %2818 = vmatprep.subr.mxu0 0.0
  %2819 = vmatpush1.msra.mxu0 0.0
  %2820 = vmatprep.subr.mxu0 0.0
  %2821 = vmatpush1.msra.mxu0 0.0
  %2822 = vmatprep.subr.mxu0 0.0
  %2823 = vmatpush1.msra.mxu0 0.0
  %2824 = vmatprep.subr.mxu0 0.0
  %2825 = vmatpush1.msra.mxu0 0.0
  %2826 = vmatprep.subr.mxu0 0.0
  %2827 = vmatpush1.msra.mxu0 0.0
  %2828 = vmatprep.subr.mxu0 0.0
  %2829 = vmatpush1.msra.mxu0 0.0
  %2830 = vmatprep.subr.mxu0 0.0
  %2831 = vmatpush1.msra.mxu0 0.0
  %2832 = vmatprep.subr.mxu0 0.0
  %2833 = vmatpush1.msra.mxu0 0.0
  %2834 = vmatprep.subr.mxu0 0.0
  %2835 = vmatpush1.msra.mxu0 0.0
  %2836 = vmatprep.subr.mxu0 0.0
  %2837 = vmatpush1.msra.mxu0 0.0
  %2838 = vmatprep.subr.mxu0 0.0
  %2839 = vmatpush1.msra.mxu0 0.0
  %2840 = vmatprep.subr.mxu0 0.0
  %2841 = vmatpush1.msra.mxu0 0.0
  %2842 = vmatprep.subr.mxu0 0.0
  %2843 = vmatpush1.msra.mxu0 0.0
  %2844 = vmatprep.mubr.f32.mxu0 0.0
  %2845 = vmatmul.mubr.f32.gmra.mrb[0].mxu0 %v2778
  %v2846 = vpop.f32.mrb[0].mxu0
  %v2847 = vadd.f32 0.0, %v2846
  %v2848 = vpop.f32.mrb[0].mxu0
  %2849 = vdwg.mxu0
  %2850 = vrot.lane.b32.xlu0 %v2013, 112
  %v2851 = vpop.permute.xlu0 %2850
  %2852 = vrot.lane.b32.xlu0 %v2013, 48
  %v2853 = vpop.permute.xlu0 %2852
  %v2854 = vsel %vm166, %v2851, 0
  %v2856 = vsel %vm166, %v2853, 0
  %2858 = vmatprep.subr.mxu0 0.0
  %2859 = vmatpush1.xpose.msra.mxu0 %v2856
  %2860 = vmatprep.subr.mxu0 0.0
  %2861 = vmatpush1.xpose.msra.mxu0 0.0
  %2862 = vmatprep.subr.mxu0 0.0
  %2863 = vmatpush1.xpose.msra.mxu0 0.0
  %2864 = vmatprep.subr.mxu0 0.0
  %2865 = vmatpush1.xpose.msra.mxu0 0.0
  %2866 = vmatprep.subr.mxu0 0.0
  %2867 = vmatpush1.xpose.msra.mxu0 0.0
  %2868 = vmatprep.subr.mxu0 0.0
  %2869 = vmatpush1.xpose.msra.mxu0 0.0
  %2870 = vmatprep.subr.mxu0 0.0
  %2871 = vmatpush1.xpose.msra.mxu0 0.0
  %2872 = vmatprep.subr.mxu0 0.0
  %2873 = vmatpush1.xpose.msra.mxu0 0.0
  %2874 = vmatprep.subr.mxu0 0.0
  %2875 = vmatpush1.xpose.msra.mxu0 0.0
  %2876 = vmatprep.subr.mxu0 0.0
  %2877 = vmatpush1.xpose.msra.mxu0 0.0
  %2878 = vmatprep.subr.mxu0 0.0
  %2879 = vmatpush1.xpose.msra.mxu0 0.0
  %2880 = vmatprep.subr.mxu0 0.0
  %2881 = vmatpush1.xpose.msra.mxu0 0.0
  %2882 = vmatprep.subr.mxu0 0.0
  %2883 = vmatpush1.xpose.msra.mxu0 0.0
  %2884 = vmatprep.subr.mxu0 0.0
  %2885 = vmatpush1.xpose.msra.mxu0 0.0
  %2886 = vmatprep.subr.mxu0 0.0
  %2887 = vmatpush1.xpose.msra.mxu0 0.0
  %2888 = vmatprep.subr.mxu0 0.0
  %2889 = vmatpush1.xpose.msra.mxu0 0.0
  %2890 = vmatprep.subr.mxu0 0.0
  %2891 = vmatpush1.xpose.msra.mxu0 0.0
  %2892 = vmatprep.subr.mxu0 0.0
  %2893 = vmatpush1.xpose.msra.mxu0 0.0
  %2894 = vmatprep.subr.mxu0 0.0
  %2895 = vmatpush1.xpose.msra.mxu0 0.0
  %2896 = vmatprep.subr.mxu0 0.0
  %2897 = vmatpush1.xpose.msra.mxu0 0.0
  %2898 = vmatprep.subr.mxu0 0.0
  %2899 = vmatpush1.xpose.msra.mxu0 0.0
  %2900 = vmatprep.subr.mxu0 0.0
  %2901 = vmatpush1.xpose.msra.mxu0 0.0
  %2902 = vmatprep.subr.mxu0 0.0
  %2903 = vmatpush1.xpose.msra.mxu0 0.0
  %2904 = vmatprep.subr.mxu0 0.0
  %2905 = vmatpush1.xpose.msra.mxu0 0.0
  %2906 = vmatprep.subr.mxu0 0.0
  %2907 = vmatpush1.xpose.msra.mxu0 0.0
  %2908 = vmatprep.subr.mxu0 0.0
  %2909 = vmatpush1.xpose.msra.mxu0 0.0
  %2910 = vmatprep.subr.mxu0 0.0
  %2911 = vmatpush1.xpose.msra.mxu0 0.0
  %2912 = vmatprep.subr.mxu0 0.0
  %2913 = vmatpush1.xpose.msra.mxu0 0.0
  %2914 = vmatprep.subr.mxu0 0.0
  %2915 = vmatpush1.xpose.msra.mxu0 0.0
  %2916 = vmatprep.subr.mxu0 0.0
  %2917 = vmatpush1.xpose.msra.mxu0 0.0
  %2918 = vmatprep.subr.mxu0 0.0
  %2919 = vmatpush1.xpose.msra.mxu0 0.0
  %2920 = vmatprep.subr.mxu0 0.0
  %2921 = vmatpush1.xpose.msra.mxu0 0.0
  %2922 = vmatprep.mubr.f32.mxu0 0.0
  %2923 = vmatmul.mubr.f32.gmra.mrb[0].mxu0 %v2854
  %v2924 = vpop.f32.mrb[0].mxu0
  %v2925 = vadd.f32 %v843, %v2924
  %v2926 = vpop.f32.mrb[0].mxu0
  %2927 = vdwg.mxu0
  %v2928 = vsel %vm241, %v2925, -inf
  %2929 = vmax.xlane.f32.xlu0 %v2928
  %v2930 = vpop.xlane.xlu0 %2929
  %v2931 = vsub.f32 %v2925, %v2930
  %v2932 = vmul.f32 %v2931, 1.442695
  %v2933 = vpow.pop %v2932
  %v2934 = vsel %vm241, %v2933, 0.0
  %2935 = vadd.xlane.f32.xlu0 %v2934
  %v2936 = vpop.xlane.xlu0 %2935
  %v2937 = vrcp.pop %v2936
  %v2938 = vmul.f32 %v2933, %v2937
  %2940 = vrot.lane.b32.xlu0 %v2015, 112
  %v2941 = vpop.permute.xlu0 %2940
  %v2944 = vsel %vm241, %v2938, 0
  %2946 = vmatprep.subr.mxu0 0.0
  %2947 = vmatpush1.msra.mxu0 %v2941
  %2948 = vmatprep.subr.mxu0 0.0
  %2949 = vmatpush1.msra.mxu0 0.0
  %2950 = vmatprep.subr.mxu0 0.0
  %2951 = vmatpush1.msra.mxu0 0.0
  %2952 = vmatprep.subr.mxu0 0.0
  %2953 = vmatpush1.msra.mxu0 0.0
  %2954 = vmatprep.subr.mxu0 0.0
  %2955 = vmatpush1.msra.mxu0 0.0
  %2956 = vmatprep.subr.mxu0 0.0
  %2957 = vmatpush1.msra.mxu0 0.0
  %2958 = vmatprep.subr.mxu0 0.0
  %2959 = vmatpush1.msra.mxu0 0.0
  %2960 = vmatprep.subr.mxu0 0.0
  %2961 = vmatpush1.msra.mxu0 0.0
  %2962 = vmatprep.subr.mxu0 0.0
  %2963 = vmatpush1.msra.mxu0 0.0
  %2964 = vmatprep.subr.mxu0 0.0
  %2965 = vmatpush1.msra.mxu0 0.0
  %2966 = vmatprep.subr.mxu0 0.0
  %2967 = vmatpush1.msra.mxu0 0.0
  %2968 = vmatprep.subr.mxu0 0.0
  %2969 = vmatpush1.msra.mxu0 0.0
  %2970 = vmatprep.subr.mxu0 0.0
  %2971 = vmatpush1.msra.mxu0 0.0
  %2972 = vmatprep.subr.mxu0 0.0
  %2973 = vmatpush1.msra.mxu0 0.0
  %2974 = vmatprep.subr.mxu0 0.0
  %2975 = vmatpush1.msra.mxu0 0.0
  %2976 = vmatprep.subr.mxu0 0.0
  %2977 = vmatpush1.msra.mxu0 0.0
  %2978 = vmatprep.subr.mxu0 0.0
  %2979 = vmatpush1.msra.mxu0 0.0
  %2980 = vmatprep.subr.mxu0 0.0
  %2981 = vmatpush1.msra.mxu0 0.0
  %2982 = vmatprep.subr.mxu0 0.0
  %2983 = vmatpush1.msra.mxu0 0.0
  %2984 = vmatprep.subr.mxu0 0.0
  %2985 = vmatpush1.msra.mxu0 0.0
  %2986 = vmatprep.subr.mxu0 0.0
  %2987 = vmatpush1.msra.mxu0 0.0
  %2988 = vmatprep.subr.mxu0 0.0
  %2989 = vmatpush1.msra.mxu0 0.0
  %2990 = vmatprep.subr.mxu0 0.0
  %2991 = vmatpush1.msra.mxu0 0.0
  %2992 = vmatprep.subr.mxu0 0.0
  %2993 = vmatpush1.msra.mxu0 0.0
  %2994 = vmatprep.subr.mxu0 0.0
  %2995 = vmatpush1.msra.mxu0 0.0
  %2996 = vmatprep.subr.mxu0 0.0
  %2997 = vmatpush1.msra.mxu0 0.0
  %2998 = vmatprep.subr.mxu0 0.0
  %2999 = vmatpush1.msra.mxu0 0.0
  %3000 = vmatprep.subr.mxu0 0.0
  %3001 = vmatpush1.msra.mxu0 0.0
  %3002 = vmatprep.subr.mxu0 0.0
  %3003 = vmatpush1.msra.mxu0 0.0
  %3004 = vmatprep.subr.mxu0 0.0
  %3005 = vmatpush1.msra.mxu0 0.0
  %3006 = vmatprep.subr.mxu0 0.0
  %3007 = vmatpush1.msra.mxu0 0.0
  %3008 = vmatprep.subr.mxu0 0.0
  %3009 = vmatpush1.msra.mxu0 0.0
  %3010 = vmatprep.mubr.f32.mxu0 0.0
  %3011 = vmatmul.mubr.f32.gmra.mrb[0].mxu0 %v2944
  %v3012 = vpop.f32.mrb[0].mxu0
  %v3013 = vadd.f32 0.0, %v3012
  %v3014 = vpop.f32.mrb[0].mxu0
  %3015 = vdwg.mxu0
  %3016 = vrot.lane.b32.xlu0 %v2013, 96
  %v3017 = vpop.permute.xlu0 %3016
  %3018 = vrot.lane.b32.xlu0 %v2013, 32
  %v3019 = vpop.permute.xlu0 %3018
  %v3020 = vsel %vm166, %v3017, 0
  %v3022 = vsel %vm166, %v3019, 0
  %3024 = vmatprep.subr.mxu0 0.0
  %3025 = vmatpush1.xpose.msra.mxu0 %v3022
  %3026 = vmatprep.subr.mxu0 0.0
  %3027 = vmatpush1.xpose.msra.mxu0 0.0
  %3028 = vmatprep.subr.mxu0 0.0
  %3029 = vmatpush1.xpose.msra.mxu0 0.0
  %3030 = vmatprep.subr.mxu0 0.0
  %3031 = vmatpush1.xpose.msra.mxu0 0.0
  %3032 = vmatprep.subr.mxu0 0.0
  %3033 = vmatpush1.xpose.msra.mxu0 0.0
  %3034 = vmatprep.subr.mxu0 0.0
  %3035 = vmatpush1.xpose.msra.mxu0 0.0
  %3036 = vmatprep.subr.mxu0 0.0
  %3037 = vmatpush1.xpose.msra.mxu0 0.0
  %3038 = vmatprep.subr.mxu0 0.0
  %3039 = vmatpush1.xpose.msra.mxu0 0.0
  %3040 = vmatprep.subr.mxu0 0.0
  %3041 = vmatpush1.xpose.msra.mxu0 0.0
  %3042 = vmatprep.subr.mxu0 0.0
  %3043 = vmatpush1.xpose.msra.mxu0 0.0
  %3044 = vmatprep.subr.mxu0 0.0
  %3045 = vmatpush1.xpose.msra.mxu0 0.0
  %3046 = vmatprep.subr.mxu0 0.0
  %3047 = vmatpush1.xpose.msra.mxu0 0.0
  %3048 = vmatprep.subr.mxu0 0.0
  %3049 = vmatpush1.xpose.msra.mxu0 0.0
  %3050 = vmatprep.subr.mxu0 0.0
  %3051 = vmatpush1.xpose.msra.mxu0 0.0
  %3052 = vmatprep.subr.mxu0 0.0
  %3053 = vmatpush1.xpose.msra.mxu0 0.0
  %3054 = vmatprep.subr.mxu0 0.0
  %3055 = vmatpush1.xpose.msra.mxu0 0.0
  %3056 = vmatprep.subr.mxu0 0.0
  %3057 = vmatpush1.xpose.msra.mxu0 0.0
  %3058 = vmatprep.subr.mxu0 0.0
  %3059 = vmatpush1.xpose.msra.mxu0 0.0
  %3060 = vmatprep.subr.mxu0 0.0
  %3061 = vmatpush1.xpose.msra.mxu0 0.0
  %3062 = vmatprep.subr.mxu0 0.0
  %3063 = vmatpush1.xpose.msra.mxu0 0.0
  %3064 = vmatprep.subr.mxu0 0.0
  %3065 = vmatpush1.xpose.msra.mxu0 0.0
  %3066 = vmatprep.subr.mxu0 0.0
  %3067 = vmatpush1.xpose.msra.mxu0 0.0
  %3068 = vmatprep.subr.mxu0 0.0
  %3069 = vmatpush1.xpose.msra.mxu0 0.0
  %3070 = vmatprep.subr.mxu0 0.0
  %3071 = vmatpush1.xpose.msra.mxu0 0.0
  %3072 = vmatprep.subr.mxu0 0.0
  %3073 = vmatpush1.xpose.msra.mxu0 0.0
  %3074 = vmatprep.subr.mxu0 0.0
  %3075 = vmatpush1.xpose.msra.mxu0 0.0
  %3076 = vmatprep.subr.mxu0 0.0
  %3077 = vmatpush1.xpose.msra.mxu0 0.0
  %3078 = vmatprep.subr.mxu0 0.0
  %3079 = vmatpush1.xpose.msra.mxu0 0.0
  %3080 = vmatprep.subr.mxu0 0.0
  %3081 = vmatpush1.xpose.msra.mxu0 0.0
  %3082 = vmatprep.subr.mxu0 0.0
  %3083 = vmatpush1.xpose.msra.mxu0 0.0
  %3084 = vmatprep.subr.mxu0 0.0
  %3085 = vmatpush1.xpose.msra.mxu0 0.0
  %3086 = vmatprep.subr.mxu0 0.0
  %3087 = vmatpush1.xpose.msra.mxu0 0.0
  %3088 = vmatprep.mubr.f32.mxu0 0.0
  %3089 = vmatmul.mubr.f32.gmra.mrb[0].mxu0 %v3020
  %v3090 = vpop.f32.mrb[0].mxu0
  %v3091 = vadd.f32 %v843, %v3090
  %v3092 = vpop.f32.mrb[0].mxu0
  %3093 = vdwg.mxu0
  %v3094 = vsel %vm241, %v3091, -inf
  %3095 = vmax.xlane.f32.xlu0 %v3094
  %v3096 = vpop.xlane.xlu0 %3095
  %v3097 = vsub.f32 %v3091, %v3096
  %v3098 = vmul.f32 %v3097, 1.442695
  %v3099 = vpow.pop %v3098
  %v3100 = vsel %vm241, %v3099, 0.0
  %3101 = vadd.xlane.f32.xlu0 %v3100
  %v3102 = vpop.xlane.xlu0 %3101
  %v3103 = vrcp.pop %v3102
  %v3104 = vmul.f32 %v3099, %v3103
  %3105 = vrot.lane.b32.xlu0 %v2015, 96
  %v3106 = vpop.permute.xlu0 %3105
  %v3109 = vsel %vm241, %v3104, 0
  %3111 = vmatprep.subr.mxu0 0.0
  %3112 = vmatpush1.msra.mxu0 %v3106
  %3113 = vmatprep.subr.mxu0 0.0
  %3114 = vmatpush1.msra.mxu0 0.0
  %3115 = vmatprep.subr.mxu0 0.0
  %3116 = vmatpush1.msra.mxu0 0.0
  %3117 = vmatprep.subr.mxu0 0.0
  %3118 = vmatpush1.msra.mxu0 0.0
  %3119 = vmatprep.subr.mxu0 0.0
  %3120 = vmatpush1.msra.mxu0 0.0
  %3121 = vmatprep.subr.mxu0 0.0
  %3122 = vmatpush1.msra.mxu0 0.0
  %3123 = vmatprep.subr.mxu0 0.0
  %3124 = vmatpush1.msra.mxu0 0.0
  %3125 = vmatprep.subr.mxu0 0.0
  %3126 = vmatpush1.msra.mxu0 0.0
  %3127 = vmatprep.subr.mxu0 0.0
  %3128 = vmatpush1.msra.mxu0 0.0
  %3129 = vmatprep.subr.mxu0 0.0
  %3130 = vmatpush1.msra.mxu0 0.0
  %3131 = vmatprep.subr.mxu0 0.0
  %3132 = vmatpush1.msra.mxu0 0.0
  %3133 = vmatprep.subr.mxu0 0.0
  %3134 = vmatpush1.msra.mxu0 0.0
  %3135 = vmatprep.subr.mxu0 0.0
  %3136 = vmatpush1.msra.mxu0 0.0
  %3137 = vmatprep.subr.mxu0 0.0
  %3138 = vmatpush1.msra.mxu0 0.0
  %3139 = vmatprep.subr.mxu0 0.0
  %3140 = vmatpush1.msra.mxu0 0.0
  %3141 = vmatprep.subr.mxu0 0.0
  %3142 = vmatpush1.msra.mxu0 0.0
  %3143 = vmatprep.subr.mxu0 0.0
  %3144 = vmatpush1.msra.mxu0 0.0
  %3145 = vmatprep.subr.mxu0 0.0
  %3146 = vmatpush1.msra.mxu0 0.0
  %3147 = vmatprep.subr.mxu0 0.0
  %3148 = vmatpush1.msra.mxu0 0.0
  %3149 = vmatprep.subr.mxu0 0.0
  %3150 = vmatpush1.msra.mxu0 0.0
  %3151 = vmatprep.subr.mxu0 0.0
  %3152 = vmatpush1.msra.mxu0 0.0
  %3153 = vmatprep.subr.mxu0 0.0
  %3154 = vmatpush1.msra.mxu0 0.0
  %3155 = vmatprep.subr.mxu0 0.0
  %3156 = vmatpush1.msra.mxu0 0.0
  %3157 = vmatprep.subr.mxu0 0.0
  %3158 = vmatpush1.msra.mxu0 0.0
  %3159 = vmatprep.subr.mxu0 0.0
  %3160 = vmatpush1.msra.mxu0 0.0
  %3161 = vmatprep.subr.mxu0 0.0
  %3162 = vmatpush1.msra.mxu0 0.0
  %3163 = vmatprep.subr.mxu0 0.0
  %3164 = vmatpush1.msra.mxu0 0.0
  %3165 = vmatprep.subr.mxu0 0.0
  %3166 = vmatpush1.msra.mxu0 0.0
  %3167 = vmatprep.subr.mxu0 0.0
  %3168 = vmatpush1.msra.mxu0 0.0
  %3169 = vmatprep.subr.mxu0 0.0
  %3170 = vmatpush1.msra.mxu0 0.0
  %3171 = vmatprep.subr.mxu0 0.0
  %3172 = vmatpush1.msra.mxu0 0.0
  %3173 = vmatprep.subr.mxu0 0.0
  %3174 = vmatpush1.msra.mxu0 0.0
  %3175 = vmatprep.mubr.f32.mxu0 0.0
  %3176 = vmatmul.mubr.f32.gmra.mrb[0].mxu0 %v3109
  %v3177 = vpop.f32.mrb[0].mxu0
  %v3178 = vadd.f32 0.0, %v3177
  %v3179 = vpop.f32.mrb[0].mxu0
  %3180 = vdwg.mxu0
  %3181 = vrot.lane.b32.xlu0 %v2013, 80
  %v3182 = vpop.permute.xlu0 %3181
  %3183 = vrot.lane.b32.xlu0 %v2013, 16
  %v3184 = vpop.permute.xlu0 %3183
  %v3185 = vsel %vm166, %v3182, 0
  %v3187 = vsel %vm166, %v3184, 0
  %3189 = vmatprep.subr.mxu0 0.0
  %3190 = vmatpush1.xpose.msra.mxu0 %v3187
  %3191 = vmatprep.subr.mxu0 0.0
  %3192 = vmatpush1.xpose.msra.mxu0 0.0
  %3193 = vmatprep.subr.mxu0 0.0
  %3194 = vmatpush1.xpose.msra.mxu0 0.0
  %3195 = vmatprep.subr.mxu0 0.0
  %3196 = vmatpush1.xpose.msra.mxu0 0.0
  %3197 = vmatprep.subr.mxu0 0.0
  %3198 = vmatpush1.xpose.msra.mxu0 0.0
  %3199 = vmatprep.subr.mxu0 0.0
  %3200 = vmatpush1.xpose.msra.mxu0 0.0
  %3201 = vmatprep.subr.mxu0 0.0
  %3202 = vmatpush1.xpose.msra.mxu0 0.0
  %3203 = vmatprep.subr.mxu0 0.0
  %3204 = vmatpush1.xpose.msra.mxu0 0.0
  %3205 = vmatprep.subr.mxu0 0.0
  %3206 = vmatpush1.xpose.msra.mxu0 0.0
  %3207 = vmatprep.subr.mxu0 0.0
  %3208 = vmatpush1.xpose.msra.mxu0 0.0
  %3209 = vmatprep.subr.mxu0 0.0
  %3210 = vmatpush1.xpose.msra.mxu0 0.0
  %3211 = vmatprep.subr.mxu0 0.0
  %3212 = vmatpush1.xpose.msra.mxu0 0.0
  %3213 = vmatprep.subr.mxu0 0.0
  %3214 = vmatpush1.xpose.msra.mxu0 0.0
  %3215 = vmatprep.subr.mxu0 0.0
  %3216 = vmatpush1.xpose.msra.mxu0 0.0
  %3217 = vmatprep.subr.mxu0 0.0
  %3218 = vmatpush1.xpose.msra.mxu0 0.0
  %3219 = vmatprep.subr.mxu0 0.0
  %3220 = vmatpush1.xpose.msra.mxu0 0.0
  %3221 = vmatprep.subr.mxu0 0.0
  %3222 = vmatpush1.xpose.msra.mxu0 0.0
  %3223 = vmatprep.subr.mxu0 0.0
  %3224 = vmatpush1.xpose.msra.mxu0 0.0
  %3225 = vmatprep.subr.mxu0 0.0
  %3226 = vmatpush1.xpose.msra.mxu0 0.0
  %3227 = vmatprep.subr.mxu0 0.0
  %3228 = vmatpush1.xpose.msra.mxu0 0.0
  %3229 = vmatprep.subr.mxu0 0.0
  %3230 = vmatpush1.xpose.msra.mxu0 0.0
  %3231 = vmatprep.subr.mxu0 0.0
  %3232 = vmatpush1.xpose.msra.mxu0 0.0
  %3233 = vmatprep.subr.mxu0 0.0
  %3234 = vmatpush1.xpose.msra.mxu0 0.0
  %3235 = vmatprep.subr.mxu0 0.0
  %3236 = vmatpush1.xpose.msra.mxu0 0.0
  %3237 = vmatprep.subr.mxu0 0.0
  %3238 = vmatpush1.xpose.msra.mxu0 0.0
  %3239 = vmatprep.subr.mxu0 0.0
  %3240 = vmatpush1.xpose.msra.mxu0 0.0
  %3241 = vmatprep.subr.mxu0 0.0
  %3242 = vmatpush1.xpose.msra.mxu0 0.0
  %3243 = vmatprep.subr.mxu0 0.0
  %3244 = vmatpush1.xpose.msra.mxu0 0.0
  %3245 = vmatprep.subr.mxu0 0.0
  %3246 = vmatpush1.xpose.msra.mxu0 0.0
  %3247 = vmatprep.subr.mxu0 0.0
  %3248 = vmatpush1.xpose.msra.mxu0 0.0
  %3249 = vmatprep.subr.mxu0 0.0
  %3250 = vmatpush1.xpose.msra.mxu0 0.0
  %3251 = vmatprep.subr.mxu0 0.0
  %3252 = vmatpush1.xpose.msra.mxu0 0.0
  %3253 = vmatprep.mubr.f32.mxu0 0.0
  %3254 = vmatmul.mubr.f32.gmra.mrb[0].mxu0 %v3185
  %v3255 = vpop.f32.mrb[0].mxu0
  %v3256 = vadd.f32 %v843, %v3255
  %v3257 = vpop.f32.mrb[0].mxu0
  %3258 = vdwg.mxu0
  %v3259 = vsel %vm241, %v3256, -inf
  %3260 = vmax.xlane.f32.xlu0 %v3259
  %v3261 = vpop.xlane.xlu0 %3260
  %v3262 = vsub.f32 %v3256, %v3261
  %v3263 = vmul.f32 %v3262, 1.442695
  %v3264 = vpow.pop %v3263
  %v3265 = vsel %vm241, %v3264, 0.0
  %3266 = vadd.xlane.f32.xlu0 %v3265
  %v3267 = vpop.xlane.xlu0 %3266
  %v3268 = vrcp.pop %v3267
  %v3269 = vmul.f32 %v3264, %v3268
  %3270 = vrot.lane.b32.xlu0 %v2015, 80
  %v3271 = vpop.permute.xlu0 %3270
  %v3274 = vsel %vm241, %v3269, 0
  %3276 = vmatprep.subr.mxu0 0.0
  %3277 = vmatpush1.msra.mxu0 %v3271
  %3278 = vmatprep.subr.mxu0 0.0
  %3279 = vmatpush1.msra.mxu0 0.0
  %3280 = vmatprep.subr.mxu0 0.0
  %3281 = vmatpush1.msra.mxu0 0.0
  %3282 = vmatprep.subr.mxu0 0.0
  %3283 = vmatpush1.msra.mxu0 0.0
  %3284 = vmatprep.subr.mxu0 0.0
  %3285 = vmatpush1.msra.mxu0 0.0
  %3286 = vmatprep.subr.mxu0 0.0
  %3287 = vmatpush1.msra.mxu0 0.0
  %3288 = vmatprep.subr.mxu0 0.0
  %3289 = vmatpush1.msra.mxu0 0.0
  %3290 = vmatprep.subr.mxu0 0.0
  %3291 = vmatpush1.msra.mxu0 0.0
  %3292 = vmatprep.subr.mxu0 0.0
  %3293 = vmatpush1.msra.mxu0 0.0
  %3294 = vmatprep.subr.mxu0 0.0
  %3295 = vmatpush1.msra.mxu0 0.0
  %3296 = vmatprep.subr.mxu0 0.0
  %3297 = vmatpush1.msra.mxu0 0.0
  %3298 = vmatprep.subr.mxu0 0.0
  %3299 = vmatpush1.msra.mxu0 0.0
  %3300 = vmatprep.subr.mxu0 0.0
  %3301 = vmatpush1.msra.mxu0 0.0
  %3302 = vmatprep.subr.mxu0 0.0
  %3303 = vmatpush1.msra.mxu0 0.0
  %3304 = vmatprep.subr.mxu0 0.0
  %3305 = vmatpush1.msra.mxu0 0.0
  %3306 = vmatprep.subr.mxu0 0.0
  %3307 = vmatpush1.msra.mxu0 0.0
  %3308 = vmatprep.subr.mxu0 0.0
  %3309 = vmatpush1.msra.mxu0 0.0
  %3310 = vmatprep.subr.mxu0 0.0
  %3311 = vmatpush1.msra.mxu0 0.0
  %3312 = vmatprep.subr.mxu0 0.0
  %3313 = vmatpush1.msra.mxu0 0.0
  %3314 = vmatprep.subr.mxu0 0.0
  %3315 = vmatpush1.msra.mxu0 0.0
  %3316 = vmatprep.subr.mxu0 0.0
  %3317 = vmatpush1.msra.mxu0 0.0
  %3318 = vmatprep.subr.mxu0 0.0
  %3319 = vmatpush1.msra.mxu0 0.0
  %3320 = vmatprep.subr.mxu0 0.0
  %3321 = vmatpush1.msra.mxu0 0.0
  %3322 = vmatprep.subr.mxu0 0.0
  %3323 = vmatpush1.msra.mxu0 0.0
  %3324 = vmatprep.subr.mxu0 0.0
  %3325 = vmatpush1.msra.mxu0 0.0
  %3326 = vmatprep.subr.mxu0 0.0
  %3327 = vmatpush1.msra.mxu0 0.0
  %3328 = vmatprep.subr.mxu0 0.0
  %3329 = vmatpush1.msra.mxu0 0.0
  %3330 = vmatprep.subr.mxu0 0.0
  %3331 = vmatpush1.msra.mxu0 0.0
  %3332 = vmatprep.subr.mxu0 0.0
  %3333 = vmatpush1.msra.mxu0 0.0
  %3334 = vmatprep.subr.mxu0 0.0
  %3335 = vmatpush1.msra.mxu0 0.0
  %3336 = vmatprep.subr.mxu0 0.0
  %3337 = vmatpush1.msra.mxu0 0.0
  %3338 = vmatprep.subr.mxu0 0.0
  %3339 = vmatpush1.msra.mxu0 0.0
  %3340 = vmatprep.mubr.f32.mxu0 0.0
  %3341 = vmatmul.mubr.f32.gmra.mrb[0].mxu0 %v3274
  %v3342 = vpop.f32.mrb[0].mxu0
  %v3343 = vadd.f32 0.0, %v3342
  %v3344 = vpop.f32.mrb[0].mxu0
  %3345 = vdwg.mxu0
  %3347 = vrot.lane.b32.xlu0 %v3013, 16
  %v3348 = vpop.permute.xlu0 %3347
  %3351 = vrot.lane.b32.xlu0 %v3178, 32
  %v3352 = vpop.permute.xlu0 %3351
  %3355 = vrot.lane.b32.xlu0 %v3343, 48
  %v3356 = vpop.permute.xlu0 %3355
  %v3358 = vsel %vm166, %v2847, %v3348
  %v3359 = vsel %vm835, %v3358, %v3352
  %v3360 = vsel %vm837, %v3359, %v3356
  %v3361 = vpack.c.bf16 %v3360, %v2688
  %s3362 = scalar_lea.vmem %s4, 32
  %v3363 = vld [vmem:[%s3362] sm:$0xf]
  %v3364 = vld [vmem:[%s3362 + $0x4] sm:$0xf]
  %v3365 = vld [vmem:[%s3362 + $0x8] sm:$0xf]
  %v3366 = vld [vmem:[%s3362 + $0xc] sm:$0xf]
  %v3367 = vld [vmem:[%s3362 + $0x10] sm:$0xf]
  %v3368 = vld [vmem:[%s3362 + $0x14] sm:$0xf]
  %v3369 = vld [vmem:[%s3362 + $0x18] sm:$0xf]
  %v3370 = vld [vmem:[%s3362 + $0x1c] sm:$0xf]
  %s3371 = scalar_lea.vmem %s5, 1
  %v3372 = vld [vmem:[%s3371] sm:$0x1]
  %v3374 = vlaneseq
  %v3375 = vshrl.u32 %v3374, 7
  %v3376 = vsub.s32 0, %v3375
  %v3377 = vrot.slane %v3372, %v3376
  %v3387 = vunpack.c.l.b16 %v3363
  %v3388 = vunpack.c.l.b16 %v3364
  %v3389 = vunpack.c.l.b16 %v3365
  %v3390 = vunpack.c.l.b16 %v3366
  %v3391 = vunpack.c.l.b16 %v3367
  %v3392 = vunpack.c.l.b16 %v3368
  %v3393 = vunpack.c.l.b16 %v3369
  %v3394 = vunpack.c.l.b16 %v3370
  %v3395 = vpack.c.b16 %v3388, %v3387
  %v3396 = vpack.c.b16 %v3390, %v3389
  %v3397 = vpack.c.b16 %v3392, %v3391
  %v3398 = vpack.c.b16 %v3394, %v3393
  %v3404 = vsel %vm111, %v3361, 0
  %3406 = vmatprep.subr.bf16.mxu0 0
  %3407 = vmatpush1.bf16.msra.mxu0 %v3395
  %3408 = vmatprep.subr.bf16.mxu0 0
  %3409 = vmatpush1.bf16.msra.mxu0 %v3396
  %3410 = vmatprep.subr.bf16.mxu0 0
  %3411 = vmatpush1.bf16.msra.mxu0 %v3397
  %3412 = vmatprep.subr.bf16.mxu0 0
  %3413 = vmatpush1.bf16.msra.mxu0 %v3398
  %3414 = vmatprep.subr.bf16.mxu0 0
  %3415 = vmatpush1.bf16.msra.mxu0 0
  %3416 = vmatprep.subr.bf16.mxu0 0
  %3417 = vmatpush1.bf16.msra.mxu0 0
  %3418 = vmatprep.subr.bf16.mxu0 0
  %3419 = vmatpush1.bf16.msra.mxu0 0
  %3420 = vmatprep.subr.bf16.mxu0 0
  %3421 = vmatpush1.bf16.msra.mxu0 0
  %3422 = vmatprep.subr.bf16.mxu0 0
  %3423 = vmatpush1.bf16.msra.mxu0 0
  %3424 = vmatprep.subr.bf16.mxu0 0
  %3425 = vmatpush1.bf16.msra.mxu0 0
  %3426 = vmatprep.subr.bf16.mxu0 0
  %3427 = vmatpush1.bf16.msra.mxu0 0
  %3428 = vmatprep.subr.bf16.mxu0 0
  %3429 = vmatpush1.bf16.msra.mxu0 0
  %3430 = vmatprep.subr.bf16.mxu0 0
  %3431 = vmatpush1.bf16.msra.mxu0 0
  %3432 = vmatprep.subr.bf16.mxu0 0
  %3433 = vmatpush1.bf16.msra.mxu0 0
  %3434 = vmatprep.subr.bf16.mxu0 0
  %3435 = vmatpush1.bf16.msra.mxu0 0
  %3436 = vmatprep.subr.bf16.mxu0 0
  %3437 = vmatpush1.bf16.msra.mxu0 0
  %3438 = vmatprep.mubr.bf16.mxu0 0
  %3439 = vmatmul.mubr.bf16.gmra.mrb[0].mxu0 %v3404
  %v3440 = vpop.f32.mrb[0].mxu0
  %v3441 = vadd.f32 %v3377, %v3440
  %v3442 = vpop.f32.mrb[0].mxu0
  %v3443 = vpop.f32.mrb[0].mxu0
  %v3444 = vadd.f32 %v3377, %v3443
  %v3445 = vpop.f32.mrb[0].mxu0
  %3446 = vdwg.mxu0
  %v3447 = vadd.f32 %v1906, %v3441
  %v3448 = vadd.f32 %v1907, %v3444
  %s3449 = scalar_lea.vmem %s6, 1
  %v3450 = vld [vmem:[%s3449] sm:$0x1]
  %s3451 = scalar_lea.vmem %s7, 1
  %v3452 = vld [vmem:[%s3451] sm:$0x1]
  %v3453 = vsel %vm111, %v3447, 0.0
  %3454 = vadd.xlane.f32.xlu0 %v3453
  %v3455 = vpop.xlane.xlu0 %3454
  %v3456 = vsel %vm111, %v3448, 0.0
  %3457 = vadd.xlane.f32.xlu0 %v3456
  %v3458 = vpop.xlane.xlu0 %3457
  %v3459 = vmul.f32 %v3455, %v1610
  %v3460 = vmul.f32 %v3458, %v1610
  %v3461 = vsub.f32 %v3447, %v3459
  %v3462 = vsub.f32 %v3448, %v3460
  %v3463 = vmul.f32 %v3461, %v3461
  %v3464 = vmul.f32 %v3462, %v3462
  %v3465 = vsel %vm111, %v3463, 0.0
  %3466 = vadd.xlane.f32.xlu0 %v3465
  %v3467 = vpop.xlane.xlu0 %3466
  %v3468 = vsel %vm111, %v3464, 0.0
  %3469 = vadd.xlane.f32.xlu0 %v3468
  %v3470 = vpop.xlane.xlu0 %3469
  %v3471 = vmul.f32 %v3467, %v1610
  %v3472 = vmul.f32 %v3470, %v1610
  %v3473 = vadd.f32 %v3471, 1e-05
  %v3474 = vadd.f32 %v3472, 1e-05
  %v3475 = vrsqrt.pop %v3473
  %v3476 = vrsqrt.pop %v3474
  %v3477 = vmul.f32 %v3461, %v3475
  %v3478 = vmul.f32 %v3462, %v3476
  %v3480 = vlaneseq
  %v3481 = vshrl.u32 %v3480, 7
  %v3482 = vsub.s32 0, %v3481
  %v3483 = vrot.slane %v3450, %v3482
  %v3485 = vmul.f32 %v3477, %v3483
  %v3486 = vmul.f32 %v3478, %v3483
  %v3488 = vlaneseq
  %v3489 = vshrl.u32 %v3488, 7
  %v3490 = vsub.s32 0, %v3489
  %v3491 = vrot.slane %v3452, %v3490
  %v3493 = vadd.f32 %v3485, %v3491
  %v3494 = vadd.f32 %v3486, %v3491
  %v3495 = vpack.c.bf16 %v3494, %v3493
  %s3496 = scalar_lea.vmem %s8, 32
  %v3497 = vld [vmem:[%s3496] sm:$0xf]
  %v3498 = vld [vmem:[%s3496 + $0x4] sm:$0xf]
  %v3499 = vld [vmem:[%s3496 + $0x8] sm:$0xf]
  %v3500 = vld [vmem:[%s3496 + $0xc] sm:$0xf]
  %v3501 = vld [vmem:[%s3496 + $0x10] sm:$0xf]
  %v3502 = vld [vmem:[%s3496 + $0x14] sm:$0xf]
  %v3503 = vld [vmem:[%s3496 + $0x18] sm:$0xf]
  %v3504 = vld [vmem:[%s3496 + $0x1c] sm:$0xf]
  %s3505 = scalar_lea.vmem %s9, 1
  %v3506 = vld [vmem:[%s3505] sm:$0x1]
  %v3508 = vlaneseq
  %v3509 = vshrl.u32 %v3508, 7
  %v3510 = vsub.s32 0, %v3509
  %v3511 = vrot.slane %v3506, %v3510
  %v3521 = vunpack.c.l.b16 %v3497
  %v3522 = vunpack.c.l.b16 %v3498
  %v3523 = vunpack.c.l.b16 %v3499
  %v3524 = vunpack.c.l.b16 %v3500
  %v3525 = vunpack.c.l.b16 %v3501
  %v3526 = vunpack.c.l.b16 %v3502
  %v3527 = vunpack.c.l.b16 %v3503
  %v3528 = vunpack.c.l.b16 %v3504
  %v3529 = vpack.c.b16 %v3522, %v3521
  %v3530 = vpack.c.b16 %v3524, %v3523
  %v3531 = vpack.c.b16 %v3526, %v3525
  %v3532 = vpack.c.b16 %v3528, %v3527
  %v3538 = vsel %vm111, %v3495, 0
  %3540 = vmatprep.subr.bf16.mxu0 0
  %3541 = vmatpush1.bf16.msra.mxu0 %v3529
  %3542 = vmatprep.subr.bf16.mxu0 0
  %3543 = vmatpush1.bf16.msra.mxu0 %v3530
  %3544 = vmatprep.subr.bf16.mxu0 0
  %3545 = vmatpush1.bf16.msra.mxu0 %v3531
  %3546 = vmatprep.subr.bf16.mxu0 0
  %3547 = vmatpush1.bf16.msra.mxu0 %v3532
  %3548 = vmatprep.subr.bf16.mxu0 0
  %3549 = vmatpush1.bf16.msra.mxu0 0
  %3550 = vmatprep.subr.bf16.mxu0 0
  %3551 = vmatpush1.bf16.msra.mxu0 0
  %3552 = vmatprep.subr.bf16.mxu0 0
  %3553 = vmatpush1.bf16.msra.mxu0 0
  %3554 = vmatprep.subr.bf16.mxu0 0
  %3555 = vmatpush1.bf16.msra.mxu0 0
  %3556 = vmatprep.subr.bf16.mxu0 0
  %3557 = vmatpush1.bf16.msra.mxu0 0
  %3558 = vmatprep.subr.bf16.mxu0 0
  %3559 = vmatpush1.bf16.msra.mxu0 0
  %3560 = vmatprep.subr.bf16.mxu0 0
  %3561 = vmatpush1.bf16.msra.mxu0 0
  %3562 = vmatprep.subr.bf16.mxu0 0
  %3563 = vmatpush1.bf16.msra.mxu0 0
  %3564 = vmatprep.subr.bf16.mxu0 0
  %3565 = vmatpush1.bf16.msra.mxu0 0
  %3566 = vmatprep.subr.bf16.mxu0 0
  %3567 = vmatpush1.bf16.msra.mxu0 0
  %3568 = vmatprep.subr.bf16.mxu0 0
  %3569 = vmatpush1.bf16.msra.mxu0 0
  %3570 = vmatprep.subr.bf16.mxu0 0
  %3571 = vmatpush1.bf16.msra.mxu0 0
  %3572 = vmatprep.mubr.bf16.mxu0 0
  %3573 = vmatmul.mubr.bf16.gmra.mrb[0].mxu0 %v3538
  %v3574 = vpop.f32.mrb[0].mxu0
  %v3575 = vadd.f32 %v3511, %v3574
  %v3576 = vpop.f32.mrb[0].mxu0
  %v3577 = vpop.f32.mrb[0].mxu0
  %v3578 = vadd.f32 %v3511, %v3577
  %v3579 = vpop.f32.mrb[0].mxu0
  %3580 = vdwg.mxu0
  %v3581 = vmul.f32 %v3575, 0.5
  %v3582 = vmul.f32 %v3578, 0.5
  %v3583 = vmul.f32 %v3575, 0.044715
  %v3584 = vmul.f32 %v3578, 0.044715
  %v3585 = vmul.f32 %v3583, %v3575
  %v3586 = vmul.f32 %v3584, %v3578
  %v3587 = vmul.f32 %v3585, %v3575
  %v3588 = vmul.f32 %v3586, %v3578
  %v3589 = vadd.f32 %v3575, %v3587
  %v3590 = vadd.f32 %v3578, %v3588
  %v3591 = vmul.f32 %v3589, 0.7978846
  %v3592 = vmul.f32 %v3590, 0.7978846
  %v3593 = vtanh.pop %v3591
  %v3594 = vtanh.pop %v3592
  %v3595 = vadd.f32 %v3593, 1.0
  %v3596 = vadd.f32 %v3594, 1.0
  %v3597 = vmul.f32 %v3581, %v3595
  %v3598 = vmul.f32 %v3582, %v3596
  %v3599 = vpack.c.bf16 %v3598, %v3597
  %s3600 = scalar_lea.vmem %s10, 64
  %v3601 = vld [vmem:[%s3600] sm:$0xf]
  %v3602 = vld [vmem:[%s3600 + $0x4] sm:$0xf]
  %v3603 = vld [vmem:[%s3600 + $0x8] sm:$0xf]
  %v3604 = vld [vmem:[%s3600 + $0xc] sm:$0xf]
  %v3605 = vld [vmem:[%s3600 + $0x10] sm:$0xf]
  %v3606 = vld [vmem:[%s3600 + $0x14] sm:$0xf]
  %v3607 = vld [vmem:[%s3600 + $0x18] sm:$0xf]
  %v3608 = vld [vmem:[%s3600 + $0x1c] sm:$0xf]
  %v3609 = vld [vmem:[%s3600 + $0x20] sm:$0xf]
  %v3610 = vld [vmem:[%s3600 + $0x24] sm:$0xf]
  %v3611 = vld [vmem:[%s3600 + $0x28] sm:$0xf]
  %v3612 = vld [vmem:[%s3600 + $0x2c] sm:$0xf]
  %v3613 = vld [vmem:[%s3600 + $0x30] sm:$0xf]
  %v3614 = vld [vmem:[%s3600 + $0x34] sm:$0xf]
  %v3615 = vld [vmem:[%s3600 + $0x38] sm:$0xf]
  %v3616 = vld [vmem:[%s3600 + $0x3c] sm:$0xf]
  %s3617 = scalar_lea.vmem %s11, 1
  %v3618 = vld [vmem:[%s3617] sm:$0x1]
  %v3620 = vlaneseq
  %v3621 = vshrl.u32 %v3620, 7
  %v3622 = vsub.s32 0, %v3621
  %v3623 = vrot.slane %v3618, %v3622
  %v3641 = vunpack.c.l.b16 %v3601
  %v3642 = vunpack.c.l.b16 %v3602
  %v3643 = vunpack.c.l.b16 %v3603
  %v3644 = vunpack.c.l.b16 %v3604
  %v3645 = vunpack.c.l.b16 %v3605
  %v3646 = vunpack.c.l.b16 %v3606
  %v3647 = vunpack.c.l.b16 %v3607
  %v3648 = vunpack.c.l.b16 %v3608
  %v3649 = vunpack.c.l.b16 %v3609
  %v3650 = vunpack.c.l.b16 %v3610
  %v3651 = vunpack.c.l.b16 %v3611
  %v3652 = vunpack.c.l.b16 %v3612
  %v3653 = vunpack.c.l.b16 %v3613
  %v3654 = vunpack.c.l.b16 %v3614
  %v3655 = vunpack.c.l.b16 %v3615
  %v3656 = vunpack.c.l.b16 %v3616
  %v3657 = vpack.c.b16 %v3642, %v3641
  %v3658 = vpack.c.b16 %v3644, %v3643
  %v3659 = vpack.c.b16 %v3646, %v3645
  %v3660 = vpack.c.b16 %v3648, %v3647
  %v3661 = vpack.c.b16 %v3650, %v3649
  %v3662 = vpack.c.b16 %v3652, %v3651
  %v3663 = vpack.c.b16 %v3654, %v3653
  %v3664 = vpack.c.b16 %v3656, %v3655
  %3673 = vmatprep.subr.bf16.mxu0 0
  %3674 = vmatpush1.bf16.msra.mxu0 %v3657
  %3675 = vmatprep.subr.bf16.mxu0 0
  %3676 = vmatpush1.bf16.msra.mxu0 %v3658
  %3677 = vmatprep.subr.bf16.mxu0 0
  %3678 = vmatpush1.bf16.msra.mxu0 %v3659
  %3679 = vmatprep.subr.bf16.mxu0 0
  %3680 = vmatpush1.bf16.msra.mxu0 %v3660
  %3681 = vmatprep.subr.bf16.mxu0 0
  %3682 = vmatpush1.bf16.msra.mxu0 %v3661
  %3683 = vmatprep.subr.bf16.mxu0 0
  %3684 = vmatpush1.bf16.msra.mxu0 %v3662
  %3685 = vmatprep.subr.bf16.mxu0 0
  %3686 = vmatpush1.bf16.msra.mxu0 %v3663
  %3687 = vmatprep.subr.bf16.mxu0 0
  %3688 = vmatpush1.bf16.msra.mxu0 %v3664
  %3689 = vmatprep.subr.bf16.mxu0 0
  %3690 = vmatpush1.bf16.msra.mxu0 0
  %3691 = vmatprep.subr.bf16.mxu0 0
  %3692 = vmatpush1.bf16.msra.mxu0 0
  %3693 = vmatprep.subr.bf16.mxu0 0
  %3694 = vmatpush1.bf16.msra.mxu0 0
  %3695 = vmatprep.subr.bf16.mxu0 0
  %3696 = vmatpush1.bf16.msra.mxu0 0
  %3697 = vmatprep.subr.bf16.mxu0 0
  %3698 = vmatpush1.bf16.msra.mxu0 0
  %3699 = vmatprep.subr.bf16.mxu0 0
  %3700 = vmatpush1.bf16.msra.mxu0 0
  %3701 = vmatprep.subr.bf16.mxu0 0
  %3702 = vmatpush1.bf16.msra.mxu0 0
  %3703 = vmatprep.subr.bf16.mxu0 0
  %3704 = vmatpush1.bf16.msra.mxu0 0
  %3705 = vmatprep.mubr.bf16.mxu0 0
  %3706 = vmatmul.mubr.bf16.gmra.mrb[0].mxu0 %v3599
  %v3707 = vpop.f32.mrb[0].mxu0
  %v3708 = vadd.f32 %v3623, %v3707
  %v3709 = vpop.f32.mrb[0].mxu0
  %v3710 = vpop.f32.mrb[0].mxu0
  %v3711 = vadd.f32 %v3623, %v3710
  %v3712 = vpop.f32.mrb[0].mxu0
  %3713 = vdwg.mxu0
  %v3714 = vadd.f32 %v3493, %v3708
  %v3715 = vadd.f32 %v3494, %v3711
  %s3716 = scalar_lea.vmem %s12, 1
  %v3717 = vld [vmem:[%s3716] sm:$0x1]
  %s3718 = scalar_lea.vmem %s13, 1
  %v3719 = vld [vmem:[%s3718] sm:$0x1]
  %v3720 = vsel %vm111, %v3714, 0.0
  %3721 = vadd.xlane.f32.xlu0 %v3720
  %v3722 = vpop.xlane.xlu0 %3721
  %v3723 = vsel %vm111, %v3715, 0.0
  %3724 = vadd.xlane.f32.xlu0 %v3723
  %v3725 = vpop.xlane.xlu0 %3724
  %v3726 = vmul.f32 %v3722, %v1610
  %v3727 = vmul.f32 %v3725, %v1610
  %v3728 = vsub.f32 %v3714, %v3726
  %v3729 = vsub.f32 %v3715, %v3727
  %v3730 = vmul.f32 %v3728, %v3728
  %v3731 = vmul.f32 %v3729, %v3729
  %v3732 = vsel %vm111, %v3730, 0.0
  %3733 = vadd.xlane.f32.xlu0 %v3732
  %v3734 = vpop.xlane.xlu0 %3733
  %v3735 = vsel %vm111, %v3731, 0.0
  %3736 = vadd.xlane.f32.xlu0 %v3735
  %v3737 = vpop.xlane.xlu0 %3736
  %v3738 = vmul.f32 %v3734, %v1610
  %v3739 = vmul.f32 %v3737, %v1610
  %v3740 = vadd.f32 %v3738, 1e-05
  %v3741 = vadd.f32 %v3739, 1e-05
  %v3742 = vrsqrt.pop %v3740
  %v3743 = vrsqrt.pop %v3741
  %v3744 = vmul.f32 %v3728, %v3742
  %v3745 = vmul.f32 %v3729, %v3743
  %v3747 = vlaneseq
  %v3748 = vshrl.u32 %v3747, 7
  %v3749 = vsub.s32 0, %v3748
  %v3750 = vrot.slane %v3717, %v3749
  %v3752 = vmul.f32 %v3744, %v3750
  %v3753 = vmul.f32 %v3745, %v3750
  %v3755 = vlaneseq
  %v3756 = vshrl.u32 %v3755, 7
  %v3757 = vsub.s32 0, %v3756
  %v3758 = vrot.slane %v3719, %v3757
  %v3760 = vadd.f32 %v3752, %v3758
  %v3761 = vadd.f32 %v3753, %v3758
  %3762 = vst.msk [vmem:[%s14] sm:$0xff] %vm111, %v3760
  %3763 = vst.msk [vmem:[%s14 + $0x8] sm:$0xff] %vm111, %v3761
  // Predicated region
  $region58: #{forward.1} parent=0 // pred_check
    _
  $region59: #{forward.1} parent=0 // pred_check_branch
    %3765 = sbr.rel (0) target = $region61
  $region60: #{forward.1} parent=0 // pred_region
    _
  $region61: #{forward.1} parent=0 // pred_fallthru
    _
  // Predicated region
  $region62: #{forward.1} parent=0 // pred_check
    _
  $region63: #{forward.1} parent=0 // pred_check_branch
    %3767 = sbr.rel (0) target = $region65
  $region64: #{forward.1} parent=0 // pred_region
    _
  $region65: #{forward.1} parent=0 // pred_fallthru
    _

</llo_original>
